<compile_context>
chip_gen: v6e
topology: v6e:2x2x1
jax: 0.10.0
libtpu: 0.0.40
codegen_flags: <defaults>
</compile_context>

<pallas_src>
import functools

import jax
import jax.numpy as jnp
import numpy as np
from jax.experimental import pallas as pl
from jax.experimental.pallas import tpu as pltpu


def _sru_kernel(x_ref, w_ref, b_ref, wg_ref, o_ref, *,
                eps, t_logit, g, cg, lc, permute):
    m = cg * lc
    bn = x_ref.shape[0]

    x = x_ref[...].astype(jnp.float32)                     # (bn, G, M) natural
    if permute:
        # (cg, l) -> (l, cg): the reference's scrambling view(), folded into
        # the kernel on the VMEM tile (XLU) instead of an extra XLA HBM pass.
        x = x.reshape(bn, g, cg, lc)
        x = jnp.transpose(x, (0, 1, 3, 2))
        x = x.reshape(bn, g, m)                            # scrambled layout

    # --- group statistics (torch.std default: unbiased, ddof=1), two-pass ---
    mean = jnp.mean(x, axis=2, keepdims=True)              # (bn, G, 1)
    d = x - mean
    var = jnp.sum(d * d, axis=2, keepdims=True) * (1.0 / (m - 1))
    inv_std = 1.0 / (jnp.sqrt(var) + eps)                  # exact; tiny vector
    gn = d * inv_std * w_ref[...] + b_ref[...]             # (G,M) maps bcast over bn

    # --- gate: sigmoid(gn * w/S) >= thresh  <=>  gn * (w/S) >= logit(thresh) ---
    x1 = jnp.where(gn * wg_ref[...] >= t_logit, gn, 0.0)   # info part
    x2 = gn - x1                                           # non-info part

    # --- reconstruct: cat([x11+x22, x12+x21], C) == half-swap on group axis,
    #     written as two sublane-aligned half-group stores (no concat temp).
    half = g // 2
    o_ref[:, :half, :] = (x1[:, :half, :] + x2[:, half:, :]).astype(o_ref.dtype)
    o_ref[:, half:, :] = (x1[:, half:, :] + x2[:, :half, :]).astype(o_ref.dtype)


def sru_pallas(x, weight, bias, group_num=16, gate_treshold=0.5, eps=1e-10,
               permute_in_kernel=True):
    N, C, L, W = x.shape
    assert W == 1, "GroupBatchnorm2d's view() requires W == 1"
    G = group_num
    assert C % G == 0 and C >= G
    assert G % 2 == 0, "reconstruct's chunk/cat half-swap needs an even group count"
    Cg = C // G
    M = L * Cg
    assert M >= 2, "unbiased std needs >= 2 elements per group"
    assert 0.0 < gate_treshold < 1.0

    # ---- group-flat input: FREE reshape (natural layout, channel-major in group) ----
    permute = (Cg > 1) and permute_in_kernel
    if Cg > 1 and not permute_in_kernel:
        # fallback path: one XLA transpose (extra HBM pass) to scrambled layout
        xg = (x.reshape(N, G, Cg, L).transpose(0, 1, 3, 2).reshape(N, G, M))
    else:
        xg = x.reshape(N, G, M)

    # ---- (G, M) scrambled-layout parameter maps (tiny; constant index_map) ----
    wf = weight.reshape(C).astype(jnp.float32)
    bf = bias.reshape(C).astype(jnp.float32)
    w_map = jnp.repeat(wf.reshape(G, Cg), L, axis=1)        # affine weight
    b_map = jnp.repeat(bf.reshape(G, Cg), L, axis=1)        # affine bias
    # NOTE: matches the reference exactly; blows up if sum(weight) ~ 0.
    wg_map = w_map / jnp.sum(wf)                             # gate map = w / sum(w)
    t_logit = float(np.log(gate_treshold / (1.0 - gate_treshold)))

    # ---- generation-aware block/grid selection ----
    try:
        vmem_cap = int(pltpu.get_tpu_info().vmem_capacity_bytes)
    except Exception:
        vmem_cap = 64 * 1024 * 1024                          # conservative (v7x)
    itemsize = x.dtype.itemsize
    # double-buffered in + out streams plus ~5 f32 full-tile temps per sample
    per_sample = G * M * (2 * 2 * itemsize + 5 * 4)
    map_bytes = 3 * G * M * 4 * 2
    budget = max(4 * 1024 * 1024, int(0.35 * vmem_cap) - map_bytes)
    bn = max(1, min(N, budget // max(per_sample, 1)))
    if N >= 2:
        bn = max(1, min(bn, N // 2))     # >= 2 grid steps -> both v7x TCs get work
    grid = (pl.cdiv(N, bn),)             # ragged last block handled by Pallas masking

    need = bn * per_sample + map_bytes + (2 << 20)
    vmem_limit = int(min(int(0.85 * vmem_cap), max(32 * 1024 * 1024, 2 * need)))

    kernel = functools.partial(_sru_kernel, eps=float(eps), t_logit=t_logit,
                               g=G, cg=Cg, lc=L, permute=permute)
    out_g = pl.pallas_call(
        kernel,
        out_shape=jax.ShapeDtypeStruct((N, G, M), x.dtype),
        grid_spec=pl.GridSpec(
            grid=grid,
            in_specs=[
                pl.BlockSpec((bn, G, M), lambda n: (n, 0, 0)),
                pl.BlockSpec((G, M), lambda n: (0, 0)),
                pl.BlockSpec((G, M), lambda n: (0, 0)),
                pl.BlockSpec((G, M), lambda n: (0, 0)),
            ],
            out_specs=pl.BlockSpec((bn, G, M), lambda n: (n, 0, 0)),
        ),
        compiler_params=pltpu.CompilerParams(
            dimension_semantics=("parallel",),
            vmem_limit_bytes=vmem_limit,
        ),
    )(xg, w_map, b_map, wg_map)

    # scrambled group-flat layout == flat layout of the reference output: free reshape
    return out_g.reshape(N, C, L, 1)


def sru_reference(x, weight, bias, group_num, gate_treshold, eps):
    """Pure-JAX transcription of the PyTorch forward (for verification)."""
    N, C, L, _ = x.shape
    xr = jnp.transpose(x, (0, 2, 3, 1)).reshape(N, L, group_num, C // group_num)
    xr = jnp.transpose(xr, (0, 2, 1, 3)).reshape(N, group_num, -1)
    mean = xr.mean(axis=2, keepdims=True)
    std = jnp.std(xr, axis=2, keepdims=True, ddof=1)
    xn = (xr - mean) / (std + eps)
    xn = xn.reshape(N, C, L, 1)
    gn_x = xn * weight + bias
    w_gamma = (weight / jnp.sum(weight)).reshape(1, C, 1, 1)
    rw = jax.nn.sigmoid(gn_x * w_gamma)
    x1 = jnp.where(rw >= gate_treshold, gn_x, 0.0)
    x2 = jnp.where(rw < gate_treshold, gn_x, 0.0)
    x11, x12 = jnp.split(x1, 2, axis=1)
    x21, x22 = jnp.split(x2, 2, axis=1)
    return jnp.concatenate([x11 + x22, x12 + x21], axis=1)


if __name__ == "__main__":
    key = jax.random.PRNGKey(0)
    kx, kw = jax.random.split(key)

    N, C, L = 2, 32, 128          # Cg = 2, M = 256: lane-dense (multiple of 128)
    group_num = 16
    gate_treshold = 0.5
    eps = 1e-10

    # NCHW input with W == 1 (required by the module's view())
    x = jax.random.normal(kx, (N, C, L, 1), dtype=jnp.float32)
    weight = jax.random.normal(kw, (C, 1, 1), dtype=jnp.float32)   # module: randn
    bias = jnp.zeros((C, 1, 1), dtype=jnp.float32)                 # module: zeros

    # --- f32 run (Cg > 1 path, in-kernel permute) ---
    out = jax.block_until_ready(
        sru_pallas(x, weight, bias, group_num=group_num,
                   gate_treshold=gate_treshold, eps=eps))
    ref = sru_reference(x, weight, bias, group_num, gate_treshold, eps)
    np.testing.assert_allclose(np.asarray(out), np.asarray(ref), rtol=1e-3, atol=1e-3)

    # --- bf16 streaming run (half the HBM bytes, same kernel) ---
    x_bf = x.astype(jnp.bfloat16)
    out_bf = jax.block_until_ready(
        sru_pallas(x_bf, weight, bias, group_num=group_num,
                   gate_treshold=gate_treshold, eps=eps))
    ref_bf = sru_reference(x_bf.astype(jnp.float32), weight, bias,
                           group_num, gate_treshold, eps)
    np.testing.assert_allclose(np.asarray(out_bf.astype(jnp.float32)),
                               np.asarray(ref_bf), rtol=2e-2, atol=5e-2)

    # --- Cg == 1 path (C == group_num): no permute needed at all ---
    C1 = group_num
    x1 = jax.random.normal(kx, (N, C1, L, 1), dtype=jnp.float32)
    w1 = jax.random.normal(kw, (C1, 1, 1), dtype=jnp.float32)
    b1 = jnp.zeros((C1, 1, 1), dtype=jnp.float32)
    out1 = jax.block_until_ready(
        sru_pallas(x1, w1, b1, group_num=group_num,
                   gate_treshold=gate_treshold, eps=eps))
    ref1 = sru_reference(x1, w1, b1, group_num, gate_treshold, eps)
    np.testing.assert_allclose(np.asarray(out1), np.asarray(ref1), rtol=1e-3, atol=1e-3)

    print("KERNEL_OK")
</pallas_src>

<mosaic_0001>
module attributes {stable_mosaic.version = 11 : i64} {
  func.func @_sru_kernel(%arg0: i32, %arg1: memref<1x16x256xf32, #tpu.memory_space<vmem>>, %arg2: memref<16x256xf32, #tpu.memory_space<vmem>>, %arg3: memref<16x256xf32, #tpu.memory_space<vmem>>, %arg4: memref<16x256xf32, #tpu.memory_space<vmem>>, %arg5: memref<1x16x256xf32, #tpu.memory_space<vmem>>) attributes {dimension_semantics = [#tpu.dimension_semantics<parallel>], iteration_bounds = array<i64: 2>, scalar_prefetch = 0 : i64, scratch_operands = 0 : i64, tpu.core_type = #tpu.core_type<tc>, window_params = [{transform_indices = @transform_0, window_bounds = array<i64: 1, 16, 256>}, {pipeline_mode = #tpu.pipeline_mode<synchronous>, transform_indices = @transform_1, window_bounds = array<i64: 16, 256>}, {pipeline_mode = #tpu.pipeline_mode<synchronous>, transform_indices = @transform_2, window_bounds = array<i64: 16, 256>}, {pipeline_mode = #tpu.pipeline_mode<synchronous>, transform_indices = @transform_3, window_bounds = array<i64: 16, 256>}, {transform_indices = @transform_4, window_bounds = array<i64: 1, 16, 256>}]} {
    %c0 = arith.constant 0 : index
    %c0_0 = arith.constant 0 : index
    %c0_1 = arith.constant 0 : index
    %0 = vector.load %arg1[%c0, %c0_0, %c0_1] : memref<1x16x256xf32, #tpu.memory_space<vmem>>, vector<1x16x256xf32>
    %1 = vector.shape_cast %0 : vector<1x16x256xf32> to vector<1x16x2x128xf32>
    %2 = tpu.transpose %1, [0, 1, 3, 2] : vector<1x16x2x128xf32> -> vector<1x16x128x2xf32>
    %3 = vector.shape_cast %2 : vector<1x16x128x2xf32> to vector<1x16x256xf32>
    %cst = arith.constant dense<0.000000e+00> : vector<1x16xf32>
    %4 = vector.multi_reduction <add>, %3, %cst [2] : vector<1x16x256xf32> to vector<1x16xf32>
    %5 = vector.shape_cast %4 : vector<1x16xf32> to vector<1x16x1xf32>
    %cst_2 = arith.constant 2.560000e+02 : f32
    %6 = vector.broadcast %cst_2 : f32 to vector<1x16x1xf32>
    %7 = arith.divf %5, %6 : vector<1x16x1xf32>
    %8 = vector.broadcast %7 : vector<1x16x1xf32> to vector<1x16x256xf32>
    %9 = arith.subf %3, %8 : vector<1x16x256xf32>
    %10 = arith.mulf %9, %9 : vector<1x16x256xf32>
    %cst_3 = arith.constant dense<0.000000e+00> : vector<1x16xf32>
    %11 = vector.multi_reduction <add>, %10, %cst_3 [2] : vector<1x16x256xf32> to vector<1x16xf32>
    %12 = vector.shape_cast %11 : vector<1x16xf32> to vector<1x16x1xf32>
    %cst_4 = arith.constant 0.00392156886 : f32
    %13 = vector.broadcast %cst_4 : f32 to vector<1x16x1xf32>
    %14 = arith.mulf %12, %13 : vector<1x16x1xf32>
    %15 = math.sqrt %14 : vector<1x16x1xf32>
    %cst_5 = arith.constant 1.000000e-10 : f32
    %16 = vector.broadcast %cst_5 : f32 to vector<1x16x1xf32>
    %17 = arith.addf %15, %16 : vector<1x16x1xf32>
    %cst_6 = arith.constant 1.000000e+00 : f32
    %18 = vector.broadcast %cst_6 : f32 to vector<1x16x1xf32>
    %19 = arith.divf %18, %17 : vector<1x16x1xf32>
    %20 = vector.broadcast %19 : vector<1x16x1xf32> to vector<1x16x256xf32>
    %21 = arith.mulf %9, %20 : vector<1x16x256xf32>
    %c0_7 = arith.constant 0 : index
    %c0_8 = arith.constant 0 : index
    %22 = vector.load %arg2[%c0_7, %c0_8] : memref<16x256xf32, #tpu.memory_space<vmem>>, vector<16x256xf32>
    %23 = vector.shape_cast %22 : vector<16x256xf32> to vector<1x16x256xf32>
    %24 = arith.mulf %21, %23 : vector<1x16x256xf32>
    %c0_9 = arith.constant 0 : index
    %c0_10 = arith.constant 0 : index
    %25 = vector.load %arg3[%c0_9, %c0_10] : memref<16x256xf32, #tpu.memory_space<vmem>>, vector<16x256xf32>
    %26 = vector.shape_cast %25 : vector<16x256xf32> to vector<1x16x256xf32>
    %27 = arith.addf %24, %26 : vector<1x16x256xf32>
    %c0_11 = arith.constant 0 : index
    %c0_12 = arith.constant 0 : index
    %28 = vector.load %arg4[%c0_11, %c0_12] : memref<16x256xf32, #tpu.memory_space<vmem>>, vector<16x256xf32>
    %29 = vector.shape_cast %28 : vector<16x256xf32> to vector<1x16x256xf32>
    %30 = arith.mulf %27, %29 : vector<1x16x256xf32>
    %cst_13 = arith.constant 0.000000e+00 : f32
    %31 = vector.broadcast %cst_13 : f32 to vector<1x16x256xf32>
    %32 = arith.cmpf oge, %30, %31 : vector<1x16x256xf32>
    %cst_14 = arith.constant 0.000000e+00 : f32
    %33 = vector.broadcast %cst_14 : f32 to vector<1x16x256xf32>
    %34 = arith.select %32, %27, %33 : vector<1x16x256xi1>, vector<1x16x256xf32>
    %35 = arith.subf %27, %34 : vector<1x16x256xf32>
    %36 = vector.extract_strided_slice %34 {offsets = [0, 0, 0], sizes = [1, 8, 256], strides = [1, 1, 1]} : vector<1x16x256xf32> to vector<1x8x256xf32>
    %37 = vector.extract_strided_slice %35 {offsets = [0, 8, 0], sizes = [1, 8, 256], strides = [1, 1, 1]} : vector<1x16x256xf32> to vector<1x8x256xf32>
    %38 = arith.addf %36, %37 : vector<1x8x256xf32>
    %c0_15 = arith.constant 0 : index
    %c0_16 = arith.constant 0 : index
    %c0_17 = arith.constant 0 : index
    %39 = vector.load %arg5[%c0_15, %c0_16, %c0_17] : memref<1x16x256xf32, #tpu.memory_space<vmem>>, vector<1x8x256xf32>
    tpu.vector_store %arg5[%c0_15, %c0_16, %c0_17], %38 {strides = array<i32>} : memref<1x16x256xf32, #tpu.memory_space<vmem>>, vector<1x8x256xf32>,
    %40 = vector.extract_strided_slice %34 {offsets = [0, 8, 0], sizes = [1, 8, 256], strides = [1, 1, 1]} : vector<1x16x256xf32> to vector<1x8x256xf32>
    %41 = vector.extract_strided_slice %35 {offsets = [0, 0, 0], sizes = [1, 8, 256], strides = [1, 1, 1]} : vector<1x16x256xf32> to vector<1x8x256xf32>
    %42 = arith.addf %40, %41 : vector<1x8x256xf32>
    %c0_18 = arith.constant 0 : index
    %c8 = arith.constant 8 : index
    %c0_19 = arith.constant 0 : index
    %43 = vector.load %arg5[%c0_18, %c8, %c0_19] : memref<1x16x256xf32, #tpu.memory_space<vmem>>, vector<1x8x256xf32>
    tpu.vector_store %arg5[%c0_18, %c8, %c0_19], %42 {strides = array<i32>} : memref<1x16x256xf32, #tpu.memory_space<vmem>>, vector<1x8x256xf32>,
    return
  }
  func.func @transform_0(%arg0: i32) -> (i32, i32, i32) {
    %c0_i32 = arith.constant 0 : i32
    %c0_i32_0 = arith.constant 0 : i32
    %c0_i32_1 = arith.constant 0 : i32
    return %arg0, %c0_i32, %c0_i32_0 : i32, i32, i32
  }
  func.func @transform_1(%arg0: i32) -> (i32, i32) {
    %c0_i32 = arith.constant 0 : i32
    %c0_i32_0 = arith.constant 0 : i32
    %c0_i32_1 = arith.constant 0 : i32
    return %c0_i32, %c0_i32_0 : i32, i32
  }
  func.func @transform_2(%arg0: i32) -> (i32, i32) {
    %c0_i32 = arith.constant 0 : i32
    %c0_i32_0 = arith.constant 0 : i32
    %c0_i32_1 = arith.constant 0 : i32
    return %c0_i32, %c0_i32_0 : i32, i32
  }
  func.func @transform_3(%arg0: i32) -> (i32, i32) {
    %c0_i32 = arith.constant 0 : i32
    %c0_i32_0 = arith.constant 0 : i32
    %c0_i32_1 = arith.constant 0 : i32
    return %c0_i32, %c0_i32_0 : i32, i32
  }
  func.func @transform_4(%arg0: i32) -> (i32, i32, i32) {
    %c0_i32 = arith.constant 0 : i32
    %c0_i32_0 = arith.constant 0 : i32
    %c0_i32_1 = arith.constant 0 : i32
    return %arg0, %c0_i32, %c0_i32_0 : i32, i32, i32
  }
}

</mosaic_0001>

<llo_original>
// kernel: tpu_custom_call.1
$region0: #{tpu_custom_call.1}
  #allocation0 [shape = 'u32[]', space=smem, size = 0x4, offset = 0x4, fixed_abs, tag = 'smem constant byte address 0x4 - core index']
  #allocation1 [shape = 'u32[144,128]{1,0:T(1,128)}', space=vmem, size = 0x12000, scoped, tag = 'internal scratch']
  %s0 = inlined_call_operand.hbm [shape: f32[2,16,256], index: 0, kind: input, shape index: {}]
  %s1 = inlined_call_operand.hbm [shape: f32[16,256], index: 1, kind: input, shape index: {}]
  %s2 = inlined_call_operand.hbm [shape: f32[16,256], index: 2, kind: input, shape index: {}]
  %s3 = inlined_call_operand.hbm [shape: f32[16,256], index: 3, kind: input, shape index: {}]
  %s4 = inlined_call_operand.hbm [shape: f32[2,16,256], index: 4, kind: output, shape index: {}]
  %s5 = sld [smem:[#allocation0]]
  $region65: #{tpu_custom_call.1} parent=0
    _
  %s7 = ssub.s32 1, %s5
  %s8 = scalar_select 0, %s7, %s5
  $region1: #{tpu_custom_call.1} parent=0
    #allocation2 [shape = 'u8[32768]{0}', space=vmem, size = 0x8000, scoped, tag = 'input window, operand 0']
    #allocation3 [shape = 's32[2]{0}', space=sflag, size = 0x8, scoped, tag = 'scoped memory for tpu_custom_call.1']
    #allocation4 [shape = 's32[2]{0}', space=sflag, size = 0x8, scoped, tag = 'scoped memory for tpu_custom_call.1']
    #allocation5 [shape = 'u8[16384]{0}', space=vmem, size = 0x4000, scoped, tag = 'input window, operand 1, single buffered']
    #allocation6 [shape = 's32[1]{0}', space=sflag, size = 0x4, scoped, tag = 'scoped memory for tpu_custom_call.1']
    #allocation7 [shape = 'u8[16384]{0}', space=vmem, size = 0x4000, scoped, tag = 'input window, operand 2, single buffered']
    #allocation8 [shape = 'u8[16384]{0}', space=vmem, size = 0x4000, scoped, tag = 'input window, operand 3, single buffered']
    #allocation9 [shape = 's32[1]{0}', space=sflag, size = 0x4, scoped, tag = 'scoped memory for tpu_custom_call.1']
    #allocation10 [shape = 'u8[32768]{0}', space=vmem, size = 0x8000, scoped, tag = 'output window, operand 0']
    %9 = vsyncpa [#allocation3], 0
    %s10 = scalar_lea.sflag [#allocation3], 1
    %11 = vsyncpa %s10, 0
    %12 = vsyncpa [#allocation6], 0
    %13 = vsyncpa [#allocation9], 0
    %14 = vsyncpa [#allocation4], 0
    %s15 = scalar_lea.sflag [#allocation4], 1
    %16 = vsyncpa %s15, 0
    loop: start=0, step=1, limit=4
    $region2: #{tpu_custom_call.1} parent=1 // loop_pre_header
      _
    $region3: #{tpu_custom_call.1} parent=1 // loop_header
      %s18 = sphi 0, %s22
      %p19 = scmp.ge.s32.totalorder %s18, 4
      %s28 = sphi 0, %s30
      %s31 = sphi 0, %s28
      %s32 = sphi 0, %s31
      %s48 = sphi 0, %s32
      %s52 = sphi 0, %s52
      %s54 = sphi 0, %s52
      %s55 = sphi 0, %s54
      %s69 = sphi 0, %s55
      %s73 = sphi 0, %s73
      %s75 = sphi 0, %s73
      %s76 = sphi 0, %s75
      %s90 = sphi 0, %s76
      %s94 = sphi 0, %s94
      %s96 = sphi 0, %s94
      %s97 = sphi 0, %s96
      %s111 = sphi 0, %s97
      %s117 = sphi 0, %s119
      %s120 = sphi 0, %s117
      %s121 = sphi 0, %s120
      %s137 = sphi 0, %s121
    $region4: #{tpu_custom_call.1} parent=1 // loop_header_branch
      %21 = sbr.rel (%p19) target = $region8
    $region5: #{tpu_custom_call.1} parent=1 // loop_body
      %s23 = ssub.s32 %s18, 1
      %s24 = ssub.s32 %s18, 2
      %s25 = sadd.s32 %s18, 1
      %s26 = ssub.s32 %s18, %s25
      %p27 = scmp.eq.s32.totalorder %s26, 0
      %s29 = sadd.s32 %s28, 1
      %s30 = scalar_select %p27, %s28, %s29
      %p33 = pneg %p27
      %p34 = scmp.eq.s32.totalorder %s18, 1
      %p35 = por %p33, %p34
      %p36 = scmp.ne.s32.totalorder %s28, %s31
      %p37 = scmp.eq.s32.totalorder %s18, 0
      %p38 = por %p36, %p37
      %p39 = scmp.ne.s32.totalorder %s28, %s31
      %p40 = scmp.eq.s32.totalorder %s23, 1
      %p41 = por %p39, %p40
      %p42 = scmp.ne.s32.totalorder %s31, %s32
      %p43 = scmp.eq.s32.totalorder %s23, 0
      %p44 = por %p42, %p43
      %p45 = scmp.ne.s32.totalorder %s31, %s32
      %p46 = scmp.eq.s32.totalorder %s24, 1
      %p47 = por %p45, %p46
      %p49 = scmp.ne.s32.totalorder %s32, %s48
      %p50 = scmp.eq.s32.totalorder %s24, 0
      %p51 = por %p49, %p50
      %s53 = sadd.s32 %s52, 1
      %p56 = scmp.eq.s32.totalorder %s18, 1
      %p57 = scmp.ne.s32.totalorder %s52, %s54
      %p58 = scmp.eq.s32.totalorder %s18, 0
      %p59 = por %p57, %p58
      %p60 = scmp.ne.s32.totalorder %s52, %s54
      %p61 = scmp.eq.s32.totalorder %s23, 1
      %p62 = por %p60, %p61
      %p63 = scmp.ne.s32.totalorder %s54, %s55
      %p64 = scmp.eq.s32.totalorder %s23, 0
      %p65 = por %p63, %p64
      %p66 = scmp.ne.s32.totalorder %s54, %s55
      %p67 = scmp.eq.s32.totalorder %s24, 1
      %p68 = por %p66, %p67
      %p70 = scmp.ne.s32.totalorder %s55, %s69
      %p71 = scmp.eq.s32.totalorder %s24, 0
      %p72 = por %p70, %p71
      %s74 = sadd.s32 %s73, 1
      %p77 = scmp.eq.s32.totalorder %s18, 1
      %p78 = scmp.ne.s32.totalorder %s73, %s75
      %p79 = scmp.eq.s32.totalorder %s18, 0
      %p80 = por %p78, %p79
      %p81 = scmp.ne.s32.totalorder %s73, %s75
      %p82 = scmp.eq.s32.totalorder %s23, 1
      %p83 = por %p81, %p82
      %p84 = scmp.ne.s32.totalorder %s75, %s76
      %p85 = scmp.eq.s32.totalorder %s23, 0
      %p86 = por %p84, %p85
      %p87 = scmp.ne.s32.totalorder %s75, %s76
      %p88 = scmp.eq.s32.totalorder %s24, 1
      %p89 = por %p87, %p88
      %p91 = scmp.ne.s32.totalorder %s76, %s90
      %p92 = scmp.eq.s32.totalorder %s24, 0
      %p93 = por %p91, %p92
      %s95 = sadd.s32 %s94, 1
      %p98 = scmp.eq.s32.totalorder %s18, 1
      %p99 = scmp.ne.s32.totalorder %s94, %s96
      %p100 = scmp.eq.s32.totalorder %s18, 0
      %p101 = por %p99, %p100
      %p102 = scmp.ne.s32.totalorder %s94, %s96
      %p103 = scmp.eq.s32.totalorder %s23, 1
      %p104 = por %p102, %p103
      %p105 = scmp.ne.s32.totalorder %s96, %s97
      %p106 = scmp.eq.s32.totalorder %s23, 0
      %p107 = por %p105, %p106
      %p108 = scmp.ne.s32.totalorder %s96, %s97
      %p109 = scmp.eq.s32.totalorder %s24, 1
      %p110 = por %p108, %p109
      %p112 = scmp.ne.s32.totalorder %s97, %s111
      %p113 = scmp.eq.s32.totalorder %s24, 0
      %p114 = por %p112, %p113
      %s115 = ssub.s32 %s18, %s25
      %p116 = scmp.eq.s32.totalorder %s115, 0
      %s118 = sadd.s32 %s117, 1
      %s119 = scalar_select %p116, %s117, %s118
      %p122 = pneg %p116
      %p123 = scmp.eq.s32.totalorder %s18, 1
      %p124 = por %p122, %p123
      %p125 = scmp.ne.s32.totalorder %s117, %s120
      %p126 = scmp.eq.s32.totalorder %s18, 0
      %p127 = por %p125, %p126
      %p128 = scmp.ne.s32.totalorder %s117, %s120
      %p129 = scmp.eq.s32.totalorder %s23, 1
      %p130 = por %p128, %p129
      %p131 = scmp.ne.s32.totalorder %s120, %s121
      %p132 = scmp.eq.s32.totalorder %s23, 0
      %p133 = por %p131, %p132
      %p134 = scmp.ne.s32.totalorder %s120, %s121
      %p135 = scmp.eq.s32.totalorder %s24, 1
      %p136 = por %p134, %p135
      %p138 = scmp.ne.s32.totalorder %s121, %s137
      %p139 = scmp.eq.s32.totalorder %s24, 0
      %p140 = por %p138, %p139
      %p141 = scmp.le.s32.totalorder 1, %s18
      %p142 = scmp.lt.s32.totalorder %s18, 3
      %p143 = pnand %p141, %p142
      %p144 = pneg %p143
      // Predicated region
      $region9: #{tpu_custom_call.1} parent=5 // pred_check
        _
      $region10: #{tpu_custom_call.1} parent=5 // pred_check_branch
        %146 = sbr.rel (%p143) target = $region12
      $region11: #{tpu_custom_call.1} parent=5 // pred_region
        %s147 = ssub.s32 %s18, 1
        // Predicated region
        $region13: #{tpu_custom_call.1} parent=11 // pred_check
          %p148 = pneg %p65
        $region14: #{tpu_custom_call.1} parent=11 // pred_check_branch
          %150 = sbr.rel (%p148) target = $region16
        $region15: #{tpu_custom_call.1} parent=11 // pred_region
          %s152 = ssub.s32 512, 512
          %153 = vsyncadd [#allocation6], %s152
          %s154 = sshll.u32 [#allocation5], 4
          %s155 = int_to_ptr.vmem [resolvable:$true] %s154
          %160 = dma.hbm_to_vmem [thread:$0]  %s1, 512, %s155, [#allocation6], 256, 256, 16
        $region16: #{tpu_custom_call.1} parent=11 // pred_fallthru
          _
        // Predicated region
        $region17: #{tpu_custom_call.1} parent=11 // pred_check
          %p161 = pneg %p86
        $region18: #{tpu_custom_call.1} parent=11 // pred_check_branch
          %163 = sbr.rel (%p161) target = $region20
        $region19: #{tpu_custom_call.1} parent=11 // pred_region
          %s165 = ssub.s32 512, 512
          %166 = vsyncadd [#allocation6], %s165
          %s167 = sshll.u32 [#allocation7], 4
          %s168 = int_to_ptr.vmem [resolvable:$true] %s167
          %173 = dma.hbm_to_vmem [thread:$0]  %s2, 512, %s168, [#allocation6], 256, 256, 16
        $region20: #{tpu_custom_call.1} parent=11 // pred_fallthru
          _
        // Predicated region
        $region21: #{tpu_custom_call.1} parent=11 // pred_check
          %p174 = pneg %p107
        $region22: #{tpu_custom_call.1} parent=11 // pred_check_branch
          %176 = sbr.rel (%p174) target = $region24
        $region23: #{tpu_custom_call.1} parent=11 // pred_region
          %s178 = ssub.s32 512, 512
          %179 = vsyncadd [#allocation9], %s178
          %s180 = sshll.u32 [#allocation8], 4
          %s181 = int_to_ptr.vmem [resolvable:$true] %s180
          %186 = dma.hbm_to_vmem [thread:$0]  %s3, 512, %s181, [#allocation9], 256, 256, 16
        $region24: #{tpu_custom_call.1} parent=11 // pred_fallthru
          _
      $region12: #{tpu_custom_call.1} parent=5 // pred_fallthru
        _
      %p187 = scmp.lt.s32.totalorder %s18, 2
      // Predicated region
      $region25: #{tpu_custom_call.1} parent=5 // pred_check
        %p188 = pneg %p187
      $region26: #{tpu_custom_call.1} parent=5 // pred_check_branch
        %190 = sbr.rel (%p188) target = $region28
      $region27: #{tpu_custom_call.1} parent=5 // pred_region
        // Predicated region
        $region29: #{tpu_custom_call.1} parent=27 // pred_check
          %p191 = pneg %p38
        $region30: #{tpu_custom_call.1} parent=27 // pred_check_branch
          %193 = sbr.rel (%p191) target = $region32
        $region31: #{tpu_custom_call.1} parent=27 // pred_region
          %s194 = sand.u32 %s28, 1
          %s195 = scalar_lea.sflag [#allocation3], %s194
          %s196 = sand.u32 %s28, 1
          %s197 = smul.addr %s196, 32
          %s198 = scalar_lea.vmem [#allocation2], %s197
          %s200 = ssub.s32 512, 512
          %201 = vsyncadd %s195, %s200
          %s202 = smul.addr %s18, 4
          %s203 = smul.addr %s202, 128
          %s204 = scalar_lea.hbm %s0, %s203
          %s205 = sshll.u32 %s198, 4
          %s206 = int_to_ptr.vmem [resolvable:$true] %s205
          %211 = dma.hbm_to_vmem [thread:$0]  %s204, 512, %s206, %s195, 256, 256, 16
        $region32: #{tpu_custom_call.1} parent=27 // pred_fallthru
          _
      $region28: #{tpu_custom_call.1} parent=5 // pred_fallthru
        _
      %p212 = scmp.le.s32.totalorder 1, %s18
      %p213 = scmp.lt.s32.totalorder %s18, 3
      %p214 = pnand %p212, %p213
      %p215 = pneg %p214
      // Predicated region
      $region33: #{tpu_custom_call.1} parent=5 // pred_check
        _
      $region34: #{tpu_custom_call.1} parent=5 // pred_check_branch
        %217 = sbr.rel (%p214) target = $region36
      $region35: #{tpu_custom_call.1} parent=5 // pred_region
        %s218 = ssub.s32 %s18, 1
        %s219 = sand.u32 %s31, 1
        %s220 = scalar_lea.sflag [#allocation3], %s219
        %s221 = sand.u32 %s31, 1
        %s222 = smul.addr %s221, 32
        %s223 = scalar_lea.vmem [#allocation2], %s222
        // Predicated region
        $region37: #{tpu_custom_call.1} parent=35 // pred_check
          %p224 = pneg %p44
        $region38: #{tpu_custom_call.1} parent=35 // pred_check_branch
          %226 = sbr.rel (%p224) target = $region40
        $region39: #{tpu_custom_call.1} parent=35 // pred_region
          %227 = dma.done %s220, 512
        $region40: #{tpu_custom_call.1} parent=35 // pred_fallthru
          _
        // Predicated region
        $region41: #{tpu_custom_call.1} parent=35 // pred_check
          %p228 = pneg %p65
        $region42: #{tpu_custom_call.1} parent=35 // pred_check_branch
          %230 = sbr.rel (%p228) target = $region44
        $region43: #{tpu_custom_call.1} parent=35 // pred_region
          %231 = dma.done [#allocation6], 512
        $region44: #{tpu_custom_call.1} parent=35 // pred_fallthru
          _
        // Predicated region
        $region45: #{tpu_custom_call.1} parent=35 // pred_check
          %p232 = pneg %p86
        $region46: #{tpu_custom_call.1} parent=35 // pred_check_branch
          %234 = sbr.rel (%p232) target = $region48
        $region47: #{tpu_custom_call.1} parent=35 // pred_region
          %235 = dma.done [#allocation6], 512
        $region48: #{tpu_custom_call.1} parent=35 // pred_fallthru
          _
        // Predicated region
        $region49: #{tpu_custom_call.1} parent=35 // pred_check
          %p236 = pneg %p107
        $region50: #{tpu_custom_call.1} parent=35 // pred_check_branch
          %238 = sbr.rel (%p236) target = $region52
        $region51: #{tpu_custom_call.1} parent=35 // pred_region
          %239 = dma.done [#allocation9], 512
        $region52: #{tpu_custom_call.1} parent=35 // pred_fallthru
          _
        %s240 = sand.u32 %s31, 1
        %s241 = scalar_lea.sflag [#allocation3], %s240
        %s242 = sand.u32 %s31, 1
        %s243 = smul.addr %s242, 32
        %s244 = scalar_lea.vmem [#allocation2], %s243
        %p245 = pneg %p44
        %p246 = pneg %p41
        %p247 = pneg %p65
        %p248 = pneg %p62
        %p249 = pneg %p86
        %p250 = pneg %p83
        %p251 = pneg %p107
        %p252 = pneg %p104
        %p253 = pneg %p133
        %p254 = pneg %p130
        %s255 = sand.u32 %s120, 1
        %s256 = scalar_lea.sflag [#allocation4], %s255
        %s257 = sand.u32 %s120, 1
        %s258 = smul.addr %s257, 32
        %s259 = scalar_lea.vmem [#allocation10], %s258
        %v260 = vld [vmem:[%s223] sm:$0xff]
        %v261 = vld [vmem:[%s223 + $0x8] sm:$0xff]
        %v262 = vld [vmem:[%s223 + $0x10] sm:$0xff]
        %v263 = vld [vmem:[%s223 + $0x18] sm:$0xff]
        %v264 = vcombine.high %v260, 0.0
        %v266 = vunpack.c.l.s4 1983009808
        %v267 = vunpack.c.0.s8 %v266
        %v268 = vlaneseq
        %v269 = vshrl.u32 %v268, 7
        %v270 = vsub.s32 %v267, %v269
        %v271 = vrot.slane %v260, %v270
        %v273 = vunpack.c.l.s4 1983009808
        %v274 = vunpack.c.0.s8 %v273
        %v275 = vlaneseq
        %v276 = vshrl.u32 %v275, 7
        %v277 = vsub.s32 %v274, %v276
        %v278 = vrot.slane %v264, %v277
        %v279 = vcombine.high %v261, 0.0
        %v281 = vunpack.c.l.s4 1983009808
        %v282 = vunpack.c.0.s8 %v281
        %v283 = vlaneseq
        %v284 = vshrl.u32 %v283, 7
        %v285 = vsub.s32 %v282, %v284
        %v286 = vrot.slane %v261, %v285
        %v288 = vunpack.c.l.s4 1983009808
        %v289 = vunpack.c.0.s8 %v288
        %v290 = vlaneseq
        %v291 = vshrl.u32 %v290, 7
        %v292 = vsub.s32 %v289, %v291
        %v293 = vrot.slane %v279, %v292
        %v294 = vcombine.low %v271, %v286
        %v295 = vcombine.high %v271, %v286
        %v297 = vunpack.c.l.s4 1934713408
        %v298 = vunpack.c.0.s8 %v297
        %v299 = vlaneseq
        %v300 = vshrl.u32 %v299, 7
        %v301 = vsub.s32 %v298, %v300
        %v302 = vrot.slane %v294, %v301
        %v304 = vunpack.c.l.s4 1934713408
        %v305 = vunpack.c.0.s8 %v304
        %v306 = vlaneseq
        %v307 = vshrl.u32 %v306, 7
        %v308 = vsub.s32 %v305, %v307
        %v309 = vrot.slane %v295, %v308
        %v310 = vcombine.low %v278, %v293
        %v311 = vcombine.high %v278, %v293
        %v313 = vunpack.c.l.s4 1934713408
        %v314 = vunpack.c.0.s8 %v313
        %v315 = vlaneseq
        %v316 = vshrl.u32 %v315, 7
        %v317 = vsub.s32 %v314, %v316
        %v318 = vrot.slane %v310, %v317
        %v320 = vunpack.c.l.s4 1934713408
        %v321 = vunpack.c.0.s8 %v320
        %v322 = vlaneseq
        %v323 = vshrl.u32 %v322, 7
        %v324 = vsub.s32 %v321, %v323
        %v325 = vrot.slane %v311, %v324
        %v326 = vcombine.high %v302, 0.0
        %v327 = vcombine.high %v309, 0.0
        %v328 = vcombine.high %v318, 0.0
        %v329 = vcombine.high %v325, 0.0
        %v330 = vcombine.high %v262, 0.0
        %v332 = vunpack.c.l.s4 1983009808
        %v333 = vunpack.c.0.s8 %v332
        %v334 = vlaneseq
        %v335 = vshrl.u32 %v334, 7
        %v336 = vsub.s32 %v333, %v335
        %v337 = vrot.slane %v262, %v336
        %v339 = vunpack.c.l.s4 1983009808
        %v340 = vunpack.c.0.s8 %v339
        %v341 = vlaneseq
        %v342 = vshrl.u32 %v341, 7
        %v343 = vsub.s32 %v340, %v342
        %v344 = vrot.slane %v330, %v343
        %v345 = vcombine.high %v263, 0.0
        %v347 = vunpack.c.l.s4 1983009808
        %v348 = vunpack.c.0.s8 %v347
        %v349 = vlaneseq
        %v350 = vshrl.u32 %v349, 7
        %v351 = vsub.s32 %v348, %v350
        %v352 = vrot.slane %v263, %v351
        %v354 = vunpack.c.l.s4 1983009808
        %v355 = vunpack.c.0.s8 %v354
        %v356 = vlaneseq
        %v357 = vshrl.u32 %v356, 7
        %v358 = vsub.s32 %v355, %v357
        %v359 = vrot.slane %v345, %v358
        %v360 = vcombine.low %v337, %v352
        %v361 = vcombine.high %v337, %v352
        %v363 = vunpack.c.l.s4 1934713408
        %v364 = vunpack.c.0.s8 %v363
        %v365 = vlaneseq
        %v366 = vshrl.u32 %v365, 7
        %v367 = vsub.s32 %v364, %v366
        %v368 = vrot.slane %v360, %v367
        %v370 = vunpack.c.l.s4 1934713408
        %v371 = vunpack.c.0.s8 %v370
        %v372 = vlaneseq
        %v373 = vshrl.u32 %v372, 7
        %v374 = vsub.s32 %v371, %v373
        %v375 = vrot.slane %v361, %v374
        %v376 = vcombine.low %v344, %v359
        %v377 = vcombine.high %v344, %v359
        %v379 = vunpack.c.l.s4 1934713408
        %v380 = vunpack.c.0.s8 %v379
        %v381 = vlaneseq
        %v382 = vshrl.u32 %v381, 7
        %v383 = vsub.s32 %v380, %v382
        %v384 = vrot.slane %v376, %v383
        %v386 = vunpack.c.l.s4 1934713408
        %v387 = vunpack.c.0.s8 %v386
        %v388 = vlaneseq
        %v389 = vshrl.u32 %v388, 7
        %v390 = vsub.s32 %v387, %v389
        %v391 = vrot.slane %v377, %v390
        %v392 = vcombine.high %v368, 0.0
        %v393 = vcombine.high %v375, 0.0
        %v394 = vcombine.high %v384, 0.0
        %v395 = vcombine.high %v391, 0.0
        %396 = vxpose.xlu0.b32.start [1/16] %v302, 128
        %397 = vxpose.xlu0.b32.cont [2/16] 0.0, 128
        %398 = vxpose.xlu0.b32.cont [3/16] 0.0, 128
        %399 = vxpose.xlu0.b32.cont [4/16] 0.0, 128
        %400 = vxpose.xlu0.b32.cont [5/16] 0.0, 128
        %401 = vxpose.xlu0.b32.cont [6/16] 0.0, 128
        %402 = vxpose.xlu0.b32.cont [7/16] 0.0, 128
        %403 = vxpose.xlu0.b32.cont [8/16] 0.0, 128
        %404 = vxpose.xlu0.b32.cont [9/16] 0.0, 128
        %405 = vxpose.xlu0.b32.cont [10/16] 0.0, 128
        %406 = vxpose.xlu0.b32.cont [11/16] 0.0, 128
        %407 = vxpose.xlu0.b32.cont [12/16] 0.0, 128
        %408 = vxpose.xlu0.b32.cont [13/16] 0.0, 128
        %409 = vxpose.xlu0.b32.cont [14/16] 0.0, 128
        %410 = vxpose.xlu0.b32.cont [15/16] 0.0, 128
        %411 = vxpose.xlu0.b32.end [16/16] 0.0, 128
        %v412 = vpop.trf.xlu0
        %v413 = vpop.trf.xlu0
        %v414 = vpop.trf.xlu0
        %v415 = vpop.trf.xlu0
        %v416 = vpop.trf.xlu0
        %v417 = vpop.trf.xlu0
        %v418 = vpop.trf.xlu0
        %v419 = vpop.trf.xlu0
        %v420 = vpop.trf.xlu0
        %v421 = vpop.trf.xlu0
        %v422 = vpop.trf.xlu0
        %v423 = vpop.trf.xlu0
        %v424 = vpop.trf.xlu0
        %v425 = vpop.trf.xlu0
        %v426 = vpop.trf.xlu0
        %v427 = vpop.trf.xlu0
        %428 = vxpose.xlu0.b32.start [1/16] %v326, 128
        %429 = vxpose.xlu0.b32.cont [2/16] 0.0, 128
        %430 = vxpose.xlu0.b32.cont [3/16] 0.0, 128
        %431 = vxpose.xlu0.b32.cont [4/16] 0.0, 128
        %432 = vxpose.xlu0.b32.cont [5/16] 0.0, 128
        %433 = vxpose.xlu0.b32.cont [6/16] 0.0, 128
        %434 = vxpose.xlu0.b32.cont [7/16] 0.0, 128
        %435 = vxpose.xlu0.b32.cont [8/16] 0.0, 128
        %436 = vxpose.xlu0.b32.cont [9/16] 0.0, 128
        %437 = vxpose.xlu0.b32.cont [10/16] 0.0, 128
        %438 = vxpose.xlu0.b32.cont [11/16] 0.0, 128
        %439 = vxpose.xlu0.b32.cont [12/16] 0.0, 128
        %440 = vxpose.xlu0.b32.cont [13/16] 0.0, 128
        %441 = vxpose.xlu0.b32.cont [14/16] 0.0, 128
        %442 = vxpose.xlu0.b32.cont [15/16] 0.0, 128
        %443 = vxpose.xlu0.b32.end [16/16] 0.0, 128
        %v444 = vpop.trf.xlu0
        %v445 = vpop.trf.xlu0
        %v446 = vpop.trf.xlu0
        %v447 = vpop.trf.xlu0
        %v448 = vpop.trf.xlu0
        %v449 = vpop.trf.xlu0
        %v450 = vpop.trf.xlu0
        %v451 = vpop.trf.xlu0
        %v452 = vpop.trf.xlu0
        %v453 = vpop.trf.xlu0
        %v454 = vpop.trf.xlu0
        %v455 = vpop.trf.xlu0
        %v456 = vpop.trf.xlu0
        %v457 = vpop.trf.xlu0
        %v458 = vpop.trf.xlu0
        %v459 = vpop.trf.xlu0
        %460 = vxpose.xlu0.b32.start [1/16] %v309, 128
        %461 = vxpose.xlu0.b32.cont [2/16] 0.0, 128
        %462 = vxpose.xlu0.b32.cont [3/16] 0.0, 128
        %463 = vxpose.xlu0.b32.cont [4/16] 0.0, 128
        %464 = vxpose.xlu0.b32.cont [5/16] 0.0, 128
        %465 = vxpose.xlu0.b32.cont [6/16] 0.0, 128
        %466 = vxpose.xlu0.b32.cont [7/16] 0.0, 128
        %467 = vxpose.xlu0.b32.cont [8/16] 0.0, 128
        %468 = vxpose.xlu0.b32.cont [9/16] 0.0, 128
        %469 = vxpose.xlu0.b32.cont [10/16] 0.0, 128
        %470 = vxpose.xlu0.b32.cont [11/16] 0.0, 128
        %471 = vxpose.xlu0.b32.cont [12/16] 0.0, 128
        %472 = vxpose.xlu0.b32.cont [13/16] 0.0, 128
        %473 = vxpose.xlu0.b32.cont [14/16] 0.0, 128
        %474 = vxpose.xlu0.b32.cont [15/16] 0.0, 128
        %475 = vxpose.xlu0.b32.end [16/16] 0.0, 128
        %v476 = vpop.trf.xlu0
        %v477 = vpop.trf.xlu0
        %v478 = vpop.trf.xlu0
        %v479 = vpop.trf.xlu0
        %v480 = vpop.trf.xlu0
        %v481 = vpop.trf.xlu0
        %v482 = vpop.trf.xlu0
        %v483 = vpop.trf.xlu0
        %v484 = vpop.trf.xlu0
        %v485 = vpop.trf.xlu0
        %v486 = vpop.trf.xlu0
        %v487 = vpop.trf.xlu0
        %v488 = vpop.trf.xlu0
        %v489 = vpop.trf.xlu0
        %v490 = vpop.trf.xlu0
        %v491 = vpop.trf.xlu0
        %492 = vxpose.xlu0.b32.start [1/16] %v327, 128
        %493 = vxpose.xlu0.b32.cont [2/16] 0.0, 128
        %494 = vxpose.xlu0.b32.cont [3/16] 0.0, 128
        %495 = vxpose.xlu0.b32.cont [4/16] 0.0, 128
        %496 = vxpose.xlu0.b32.cont [5/16] 0.0, 128
        %497 = vxpose.xlu0.b32.cont [6/16] 0.0, 128
        %498 = vxpose.xlu0.b32.cont [7/16] 0.0, 128
        %499 = vxpose.xlu0.b32.cont [8/16] 0.0, 128
        %500 = vxpose.xlu0.b32.cont [9/16] 0.0, 128
        %501 = vxpose.xlu0.b32.cont [10/16] 0.0, 128
        %502 = vxpose.xlu0.b32.cont [11/16] 0.0, 128
        %503 = vxpose.xlu0.b32.cont [12/16] 0.0, 128
        %504 = vxpose.xlu0.b32.cont [13/16] 0.0, 128
        %505 = vxpose.xlu0.b32.cont [14/16] 0.0, 128
        %506 = vxpose.xlu0.b32.cont [15/16] 0.0, 128
        %507 = vxpose.xlu0.b32.end [16/16] 0.0, 128
        %v508 = vpop.trf.xlu0
        %v509 = vpop.trf.xlu0
        %v510 = vpop.trf.xlu0
        %v511 = vpop.trf.xlu0
        %v512 = vpop.trf.xlu0
        %v513 = vpop.trf.xlu0
        %v514 = vpop.trf.xlu0
        %v515 = vpop.trf.xlu0
        %v516 = vpop.trf.xlu0
        %v517 = vpop.trf.xlu0
        %v518 = vpop.trf.xlu0
        %v519 = vpop.trf.xlu0
        %v520 = vpop.trf.xlu0
        %v521 = vpop.trf.xlu0
        %v522 = vpop.trf.xlu0
        %v523 = vpop.trf.xlu0
        %524 = vxpose.xlu0.b32.start [1/16] %v318, 128
        %525 = vxpose.xlu0.b32.cont [2/16] 0.0, 128
        %526 = vxpose.xlu0.b32.cont [3/16] 0.0, 128
        %527 = vxpose.xlu0.b32.cont [4/16] 0.0, 128
        %528 = vxpose.xlu0.b32.cont [5/16] 0.0, 128
        %529 = vxpose.xlu0.b32.cont [6/16] 0.0, 128
        %530 = vxpose.xlu0.b32.cont [7/16] 0.0, 128
        %531 = vxpose.xlu0.b32.cont [8/16] 0.0, 128
        %532 = vxpose.xlu0.b32.cont [9/16] 0.0, 128
        %533 = vxpose.xlu0.b32.cont [10/16] 0.0, 128
        %534 = vxpose.xlu0.b32.cont [11/16] 0.0, 128
        %535 = vxpose.xlu0.b32.cont [12/16] 0.0, 128
        %536 = vxpose.xlu0.b32.cont [13/16] 0.0, 128
        %537 = vxpose.xlu0.b32.cont [14/16] 0.0, 128
        %538 = vxpose.xlu0.b32.cont [15/16] 0.0, 128
        %539 = vxpose.xlu0.b32.end [16/16] 0.0, 128
        %v540 = vpop.trf.xlu0
        %v541 = vpop.trf.xlu0
        %v542 = vpop.trf.xlu0
        %v543 = vpop.trf.xlu0
        %v544 = vpop.trf.xlu0
        %v545 = vpop.trf.xlu0
        %v546 = vpop.trf.xlu0
        %v547 = vpop.trf.xlu0
        %v548 = vpop.trf.xlu0
        %v549 = vpop.trf.xlu0
        %v550 = vpop.trf.xlu0
        %v551 = vpop.trf.xlu0
        %v552 = vpop.trf.xlu0
        %v553 = vpop.trf.xlu0
        %v554 = vpop.trf.xlu0
        %v555 = vpop.trf.xlu0
        %556 = vxpose.xlu0.b32.start [1/16] %v328, 128
        %557 = vxpose.xlu0.b32.cont [2/16] 0.0, 128
        %558 = vxpose.xlu0.b32.cont [3/16] 0.0, 128
        %559 = vxpose.xlu0.b32.cont [4/16] 0.0, 128
        %560 = vxpose.xlu0.b32.cont [5/16] 0.0, 128
        %561 = vxpose.xlu0.b32.cont [6/16] 0.0, 128
        %562 = vxpose.xlu0.b32.cont [7/16] 0.0, 128
        %563 = vxpose.xlu0.b32.cont [8/16] 0.0, 128
        %564 = vxpose.xlu0.b32.cont [9/16] 0.0, 128
        %565 = vxpose.xlu0.b32.cont [10/16] 0.0, 128
        %566 = vxpose.xlu0.b32.cont [11/16] 0.0, 128
        %567 = vxpose.xlu0.b32.cont [12/16] 0.0, 128
        %568 = vxpose.xlu0.b32.cont [13/16] 0.0, 128
        %569 = vxpose.xlu0.b32.cont [14/16] 0.0, 128
        %570 = vxpose.xlu0.b32.cont [15/16] 0.0, 128
        %571 = vxpose.xlu0.b32.end [16/16] 0.0, 128
        %v572 = vpop.trf.xlu0
        %v573 = vpop.trf.xlu0
        %v574 = vpop.trf.xlu0
        %v575 = vpop.trf.xlu0
        %v576 = vpop.trf.xlu0
        %v577 = vpop.trf.xlu0
        %v578 = vpop.trf.xlu0
        %v579 = vpop.trf.xlu0
        %v580 = vpop.trf.xlu0
        %v581 = vpop.trf.xlu0
        %v582 = vpop.trf.xlu0
        %v583 = vpop.trf.xlu0
        %v584 = vpop.trf.xlu0
        %v585 = vpop.trf.xlu0
        %v586 = vpop.trf.xlu0
        %v587 = vpop.trf.xlu0
        %588 = vxpose.xlu0.b32.start [1/16] %v325, 128
        %589 = vxpose.xlu0.b32.cont [2/16] 0.0, 128
        %590 = vxpose.xlu0.b32.cont [3/16] 0.0, 128
        %591 = vxpose.xlu0.b32.cont [4/16] 0.0, 128
        %592 = vxpose.xlu0.b32.cont [5/16] 0.0, 128
        %593 = vxpose.xlu0.b32.cont [6/16] 0.0, 128
        %594 = vxpose.xlu0.b32.cont [7/16] 0.0, 128
        %595 = vxpose.xlu0.b32.cont [8/16] 0.0, 128
        %596 = vxpose.xlu0.b32.cont [9/16] 0.0, 128
        %597 = vxpose.xlu0.b32.cont [10/16] 0.0, 128
        %598 = vxpose.xlu0.b32.cont [11/16] 0.0, 128
        %599 = vxpose.xlu0.b32.cont [12/16] 0.0, 128
        %600 = vxpose.xlu0.b32.cont [13/16] 0.0, 128
        %601 = vxpose.xlu0.b32.cont [14/16] 0.0, 128
        %602 = vxpose.xlu0.b32.cont [15/16] 0.0, 128
        %603 = vxpose.xlu0.b32.end [16/16] 0.0, 128
        %v604 = vpop.trf.xlu0
        %v605 = vpop.trf.xlu0
        %v606 = vpop.trf.xlu0
        %v607 = vpop.trf.xlu0
        %v608 = vpop.trf.xlu0
        %v609 = vpop.trf.xlu0
        %v610 = vpop.trf.xlu0
        %v611 = vpop.trf.xlu0
        %v612 = vpop.trf.xlu0
        %v613 = vpop.trf.xlu0
        %v614 = vpop.trf.xlu0
        %v615 = vpop.trf.xlu0
        %v616 = vpop.trf.xlu0
        %v617 = vpop.trf.xlu0
        %v618 = vpop.trf.xlu0
        %v619 = vpop.trf.xlu0
        %620 = vxpose.xlu0.b32.start [1/16] %v329, 128
        %621 = vxpose.xlu0.b32.cont [2/16] 0.0, 128
        %622 = vxpose.xlu0.b32.cont [3/16] 0.0, 128
        %623 = vxpose.xlu0.b32.cont [4/16] 0.0, 128
        %624 = vxpose.xlu0.b32.cont [5/16] 0.0, 128
        %625 = vxpose.xlu0.b32.cont [6/16] 0.0, 128
        %626 = vxpose.xlu0.b32.cont [7/16] 0.0, 128
        %627 = vxpose.xlu0.b32.cont [8/16] 0.0, 128
        %628 = vxpose.xlu0.b32.cont [9/16] 0.0, 128
        %629 = vxpose.xlu0.b32.cont [10/16] 0.0, 128
        %630 = vxpose.xlu0.b32.cont [11/16] 0.0, 128
        %631 = vxpose.xlu0.b32.cont [12/16] 0.0, 128
        %632 = vxpose.xlu0.b32.cont [13/16] 0.0, 128
        %633 = vxpose.xlu0.b32.cont [14/16] 0.0, 128
        %634 = vxpose.xlu0.b32.cont [15/16] 0.0, 128
        %635 = vxpose.xlu0.b32.end [16/16] 0.0, 128
        %v636 = vpop.trf.xlu0
        %v637 = vpop.trf.xlu0
        %v638 = vpop.trf.xlu0
        %v639 = vpop.trf.xlu0
        %v640 = vpop.trf.xlu0
        %v641 = vpop.trf.xlu0
        %v642 = vpop.trf.xlu0
        %v643 = vpop.trf.xlu0
        %v644 = vpop.trf.xlu0
        %v645 = vpop.trf.xlu0
        %v646 = vpop.trf.xlu0
        %v647 = vpop.trf.xlu0
        %v648 = vpop.trf.xlu0
        %v649 = vpop.trf.xlu0
        %v650 = vpop.trf.xlu0
        %v651 = vpop.trf.xlu0
        %652 = vxpose.xlu0.b32.start [1/16] %v368, 128
        %653 = vxpose.xlu0.b32.cont [2/16] 0.0, 128
        %654 = vxpose.xlu0.b32.cont [3/16] 0.0, 128
        %655 = vxpose.xlu0.b32.cont [4/16] 0.0, 128
        %656 = vxpose.xlu0.b32.cont [5/16] 0.0, 128
        %657 = vxpose.xlu0.b32.cont [6/16] 0.0, 128
        %658 = vxpose.xlu0.b32.cont [7/16] 0.0, 128
        %659 = vxpose.xlu0.b32.cont [8/16] 0.0, 128
        %660 = vxpose.xlu0.b32.cont [9/16] 0.0, 128
        %661 = vxpose.xlu0.b32.cont [10/16] 0.0, 128
        %662 = vxpose.xlu0.b32.cont [11/16] 0.0, 128
        %663 = vxpose.xlu0.b32.cont [12/16] 0.0, 128
        %664 = vxpose.xlu0.b32.cont [13/16] 0.0, 128
        %665 = vxpose.xlu0.b32.cont [14/16] 0.0, 128
        %666 = vxpose.xlu0.b32.cont [15/16] 0.0, 128
        %667 = vxpose.xlu0.b32.end [16/16] 0.0, 128
        %v668 = vpop.trf.xlu0
        %v669 = vpop.trf.xlu0
        %v670 = vpop.trf.xlu0
        %v671 = vpop.trf.xlu0
        %v672 = vpop.trf.xlu0
        %v673 = vpop.trf.xlu0
        %v674 = vpop.trf.xlu0
        %v675 = vpop.trf.xlu0
        %v676 = vpop.trf.xlu0
        %v677 = vpop.trf.xlu0
        %v678 = vpop.trf.xlu0
        %v679 = vpop.trf.xlu0
        %v680 = vpop.trf.xlu0
        %v681 = vpop.trf.xlu0
        %v682 = vpop.trf.xlu0
        %v683 = vpop.trf.xlu0
        %684 = vxpose.xlu0.b32.start [1/16] %v392, 128
        %685 = vxpose.xlu0.b32.cont [2/16] 0.0, 128
        %686 = vxpose.xlu0.b32.cont [3/16] 0.0, 128
        %687 = vxpose.xlu0.b32.cont [4/16] 0.0, 128
        %688 = vxpose.xlu0.b32.cont [5/16] 0.0, 128
        %689 = vxpose.xlu0.b32.cont [6/16] 0.0, 128
        %690 = vxpose.xlu0.b32.cont [7/16] 0.0, 128
        %691 = vxpose.xlu0.b32.cont [8/16] 0.0, 128
        %692 = vxpose.xlu0.b32.cont [9/16] 0.0, 128
        %693 = vxpose.xlu0.b32.cont [10/16] 0.0, 128
        %694 = vxpose.xlu0.b32.cont [11/16] 0.0, 128
        %695 = vxpose.xlu0.b32.cont [12/16] 0.0, 128
        %696 = vxpose.xlu0.b32.cont [13/16] 0.0, 128
        %697 = vxpose.xlu0.b32.cont [14/16] 0.0, 128
        %698 = vxpose.xlu0.b32.cont [15/16] 0.0, 128
        %699 = vxpose.xlu0.b32.end [16/16] 0.0, 128
        %v700 = vpop.trf.xlu0
        %v701 = vpop.trf.xlu0
        %v702 = vpop.trf.xlu0
        %v703 = vpop.trf.xlu0
        %v704 = vpop.trf.xlu0
        %v705 = vpop.trf.xlu0
        %v706 = vpop.trf.xlu0
        %v707 = vpop.trf.xlu0
        %v708 = vpop.trf.xlu0
        %v709 = vpop.trf.xlu0
        %v710 = vpop.trf.xlu0
        %v711 = vpop.trf.xlu0
        %v712 = vpop.trf.xlu0
        %v713 = vpop.trf.xlu0
        %v714 = vpop.trf.xlu0
        %v715 = vpop.trf.xlu0
        %716 = vxpose.xlu0.b32.start [1/16] %v375, 128
        %717 = vxpose.xlu0.b32.cont [2/16] 0.0, 128
        %718 = vxpose.xlu0.b32.cont [3/16] 0.0, 128
        %719 = vxpose.xlu0.b32.cont [4/16] 0.0, 128
        %720 = vxpose.xlu0.b32.cont [5/16] 0.0, 128
        %721 = vxpose.xlu0.b32.cont [6/16] 0.0, 128
        %722 = vxpose.xlu0.b32.cont [7/16] 0.0, 128
        %723 = vxpose.xlu0.b32.cont [8/16] 0.0, 128
        %724 = vxpose.xlu0.b32.cont [9/16] 0.0, 128
        %725 = vxpose.xlu0.b32.cont [10/16] 0.0, 128
        %726 = vxpose.xlu0.b32.cont [11/16] 0.0, 128
        %727 = vxpose.xlu0.b32.cont [12/16] 0.0, 128
        %728 = vxpose.xlu0.b32.cont [13/16] 0.0, 128
        %729 = vxpose.xlu0.b32.cont [14/16] 0.0, 128
        %730 = vxpose.xlu0.b32.cont [15/16] 0.0, 128
        %731 = vxpose.xlu0.b32.end [16/16] 0.0, 128
        %v732 = vpop.trf.xlu0
        %v733 = vpop.trf.xlu0
        %v734 = vpop.trf.xlu0
        %v735 = vpop.trf.xlu0
        %v736 = vpop.trf.xlu0
        %v737 = vpop.trf.xlu0
        %v738 = vpop.trf.xlu0
        %v739 = vpop.trf.xlu0
        %v740 = vpop.trf.xlu0
        %v741 = vpop.trf.xlu0
        %v742 = vpop.trf.xlu0
        %v743 = vpop.trf.xlu0
        %v744 = vpop.trf.xlu0
        %v745 = vpop.trf.xlu0
        %v746 = vpop.trf.xlu0
        %v747 = vpop.trf.xlu0
        %748 = vxpose.xlu0.b32.start [1/16] %v393, 128
        %749 = vxpose.xlu0.b32.cont [2/16] 0.0, 128
        %750 = vxpose.xlu0.b32.cont [3/16] 0.0, 128
        %751 = vxpose.xlu0.b32.cont [4/16] 0.0, 128
        %752 = vxpose.xlu0.b32.cont [5/16] 0.0, 128
        %753 = vxpose.xlu0.b32.cont [6/16] 0.0, 128
        %754 = vxpose.xlu0.b32.cont [7/16] 0.0, 128
        %755 = vxpose.xlu0.b32.cont [8/16] 0.0, 128
        %756 = vxpose.xlu0.b32.cont [9/16] 0.0, 128
        %757 = vxpose.xlu0.b32.cont [10/16] 0.0, 128
        %758 = vxpose.xlu0.b32.cont [11/16] 0.0, 128
        %759 = vxpose.xlu0.b32.cont [12/16] 0.0, 128
        %760 = vxpose.xlu0.b32.cont [13/16] 0.0, 128
        %761 = vxpose.xlu0.b32.cont [14/16] 0.0, 128
        %762 = vxpose.xlu0.b32.cont [15/16] 0.0, 128
        %763 = vxpose.xlu0.b32.end [16/16] 0.0, 128
        %v764 = vpop.trf.xlu0
        %v765 = vpop.trf.xlu0
        %v766 = vpop.trf.xlu0
        %v767 = vpop.trf.xlu0
        %v768 = vpop.trf.xlu0
        %v769 = vpop.trf.xlu0
        %v770 = vpop.trf.xlu0
        %v771 = vpop.trf.xlu0
        %v772 = vpop.trf.xlu0
        %v773 = vpop.trf.xlu0
        %v774 = vpop.trf.xlu0
        %v775 = vpop.trf.xlu0
        %v776 = vpop.trf.xlu0
        %v777 = vpop.trf.xlu0
        %v778 = vpop.trf.xlu0
        %v779 = vpop.trf.xlu0
        %780 = vxpose.xlu0.b32.start [1/16] %v384, 128
        %781 = vxpose.xlu0.b32.cont [2/16] 0.0, 128
        %782 = vxpose.xlu0.b32.cont [3/16] 0.0, 128
        %783 = vxpose.xlu0.b32.cont [4/16] 0.0, 128
        %784 = vxpose.xlu0.b32.cont [5/16] 0.0, 128
        %785 = vxpose.xlu0.b32.cont [6/16] 0.0, 128
        %786 = vxpose.xlu0.b32.cont [7/16] 0.0, 128
        %787 = vxpose.xlu0.b32.cont [8/16] 0.0, 128
        %788 = vxpose.xlu0.b32.cont [9/16] 0.0, 128
        %789 = vxpose.xlu0.b32.cont [10/16] 0.0, 128
        %790 = vxpose.xlu0.b32.cont [11/16] 0.0, 128
        %791 = vxpose.xlu0.b32.cont [12/16] 0.0, 128
        %792 = vxpose.xlu0.b32.cont [13/16] 0.0, 128
        %793 = vxpose.xlu0.b32.cont [14/16] 0.0, 128
        %794 = vxpose.xlu0.b32.cont [15/16] 0.0, 128
        %795 = vxpose.xlu0.b32.end [16/16] 0.0, 128
        %v796 = vpop.trf.xlu0
        %v797 = vpop.trf.xlu0
        %v798 = vpop.trf.xlu0
        %v799 = vpop.trf.xlu0
        %v800 = vpop.trf.xlu0
        %v801 = vpop.trf.xlu0
        %v802 = vpop.trf.xlu0
        %v803 = vpop.trf.xlu0
        %v804 = vpop.trf.xlu0
        %v805 = vpop.trf.xlu0
        %v806 = vpop.trf.xlu0
        %v807 = vpop.trf.xlu0
        %v808 = vpop.trf.xlu0
        %v809 = vpop.trf.xlu0
        %v810 = vpop.trf.xlu0
        %v811 = vpop.trf.xlu0
        %812 = vxpose.xlu0.b32.start [1/16] %v394, 128
        %813 = vxpose.xlu0.b32.cont [2/16] 0.0, 128
        %814 = vxpose.xlu0.b32.cont [3/16] 0.0, 128
        %815 = vxpose.xlu0.b32.cont [4/16] 0.0, 128
        %816 = vxpose.xlu0.b32.cont [5/16] 0.0, 128
        %817 = vxpose.xlu0.b32.cont [6/16] 0.0, 128
        %818 = vxpose.xlu0.b32.cont [7/16] 0.0, 128
        %819 = vxpose.xlu0.b32.cont [8/16] 0.0, 128
        %820 = vxpose.xlu0.b32.cont [9/16] 0.0, 128
        %821 = vxpose.xlu0.b32.cont [10/16] 0.0, 128
        %822 = vxpose.xlu0.b32.cont [11/16] 0.0, 128
        %823 = vxpose.xlu0.b32.cont [12/16] 0.0, 128
        %824 = vxpose.xlu0.b32.cont [13/16] 0.0, 128
        %825 = vxpose.xlu0.b32.cont [14/16] 0.0, 128
        %826 = vxpose.xlu0.b32.cont [15/16] 0.0, 128
        %827 = vxpose.xlu0.b32.end [16/16] 0.0, 128
        %v828 = vpop.trf.xlu0
        %v829 = vpop.trf.xlu0
        %v830 = vpop.trf.xlu0
        %v831 = vpop.trf.xlu0
        %v832 = vpop.trf.xlu0
        %v833 = vpop.trf.xlu0
        %v834 = vpop.trf.xlu0
        %v835 = vpop.trf.xlu0
        %v836 = vpop.trf.xlu0
        %v837 = vpop.trf.xlu0
        %v838 = vpop.trf.xlu0
        %v839 = vpop.trf.xlu0
        %v840 = vpop.trf.xlu0
        %v841 = vpop.trf.xlu0
        %v842 = vpop.trf.xlu0
        %v843 = vpop.trf.xlu0
        %844 = vxpose.xlu0.b32.start [1/16] %v391, 128
        %845 = vxpose.xlu0.b32.cont [2/16] 0.0, 128
        %846 = vxpose.xlu0.b32.cont [3/16] 0.0, 128
        %847 = vxpose.xlu0.b32.cont [4/16] 0.0, 128
        %848 = vxpose.xlu0.b32.cont [5/16] 0.0, 128
        %849 = vxpose.xlu0.b32.cont [6/16] 0.0, 128
        %850 = vxpose.xlu0.b32.cont [7/16] 0.0, 128
        %851 = vxpose.xlu0.b32.cont [8/16] 0.0, 128
        %852 = vxpose.xlu0.b32.cont [9/16] 0.0, 128
        %853 = vxpose.xlu0.b32.cont [10/16] 0.0, 128
        %854 = vxpose.xlu0.b32.cont [11/16] 0.0, 128
        %855 = vxpose.xlu0.b32.cont [12/16] 0.0, 128
        %856 = vxpose.xlu0.b32.cont [13/16] 0.0, 128
        %857 = vxpose.xlu0.b32.cont [14/16] 0.0, 128
        %858 = vxpose.xlu0.b32.cont [15/16] 0.0, 128
        %859 = vxpose.xlu0.b32.end [16/16] 0.0, 128
        %v860 = vpop.trf.xlu0
        %v861 = vpop.trf.xlu0
        %v862 = vpop.trf.xlu0
        %v863 = vpop.trf.xlu0
        %v864 = vpop.trf.xlu0
        %v865 = vpop.trf.xlu0
        %v866 = vpop.trf.xlu0
        %v867 = vpop.trf.xlu0
        %v868 = vpop.trf.xlu0
        %v869 = vpop.trf.xlu0
        %v870 = vpop.trf.xlu0
        %v871 = vpop.trf.xlu0
        %v872 = vpop.trf.xlu0
        %v873 = vpop.trf.xlu0
        %v874 = vpop.trf.xlu0
        %v875 = vpop.trf.xlu0
        %876 = vxpose.xlu0.b32.start [1/16] %v395, 128
        %877 = vxpose.xlu0.b32.cont [2/16] 0.0, 128
        %878 = vxpose.xlu0.b32.cont [3/16] 0.0, 128
        %879 = vxpose.xlu0.b32.cont [4/16] 0.0, 128
        %880 = vxpose.xlu0.b32.cont [5/16] 0.0, 128
        %881 = vxpose.xlu0.b32.cont [6/16] 0.0, 128
        %882 = vxpose.xlu0.b32.cont [7/16] 0.0, 128
        %883 = vxpose.xlu0.b32.cont [8/16] 0.0, 128
        %884 = vxpose.xlu0.b32.cont [9/16] 0.0, 128
        %885 = vxpose.xlu0.b32.cont [10/16] 0.0, 128
        %886 = vxpose.xlu0.b32.cont [11/16] 0.0, 128
        %887 = vxpose.xlu0.b32.cont [12/16] 0.0, 128
        %888 = vxpose.xlu0.b32.cont [13/16] 0.0, 128
        %889 = vxpose.xlu0.b32.cont [14/16] 0.0, 128
        %890 = vxpose.xlu0.b32.cont [15/16] 0.0, 128
        %891 = vxpose.xlu0.b32.end [16/16] 0.0, 128
        %v892 = vpop.trf.xlu0
        %v893 = vpop.trf.xlu0
        %v894 = vpop.trf.xlu0
        %v895 = vpop.trf.xlu0
        %v896 = vpop.trf.xlu0
        %v897 = vpop.trf.xlu0
        %v898 = vpop.trf.xlu0
        %v899 = vpop.trf.xlu0
        %v900 = vpop.trf.xlu0
        %v901 = vpop.trf.xlu0
        %v902 = vpop.trf.xlu0
        %v903 = vpop.trf.xlu0
        %v904 = vpop.trf.xlu0
        %v905 = vpop.trf.xlu0
        %v906 = vpop.trf.xlu0
        %v907 = vpop.trf.xlu0
        %v908 = vcombine.low %v412, %v476
        %v909 = vcombine.high %v412, %v476
        %v911 = vunpack.c.l.s4 1983009808
        %v912 = vunpack.c.0.s8 %v911
        %v913 = vlaneseq
        %v914 = vshrl.u32 %v913, 7
        %v915 = vsub.s32 %v912, %v914
        %v916 = vrot.slane %v908, %v915
        %v918 = vunpack.c.l.s4 1983009808
        %v919 = vunpack.c.0.s8 %v918
        %v920 = vlaneseq
        %v921 = vshrl.u32 %v920, 7
        %v922 = vsub.s32 %v919, %v921
        %v923 = vrot.slane %v909, %v922
        %v924 = vcombine.low %v444, %v508
        %v925 = vcombine.high %v444, %v508
        %v927 = vunpack.c.l.s4 1983009808
        %v928 = vunpack.c.0.s8 %v927
        %v929 = vlaneseq
        %v930 = vshrl.u32 %v929, 7
        %v931 = vsub.s32 %v928, %v930
        %v932 = vrot.slane %v924, %v931
        %v934 = vunpack.c.l.s4 1983009808
        %v935 = vunpack.c.0.s8 %v934
        %v936 = vlaneseq
        %v937 = vshrl.u32 %v936, 7
        %v938 = vsub.s32 %v935, %v937
        %v939 = vrot.slane %v925, %v938
        %v940 = vcombine.low %v540, %v604
        %v941 = vcombine.high %v540, %v604
        %v943 = vunpack.c.l.s4 1983009808
        %v944 = vunpack.c.0.s8 %v943
        %v945 = vlaneseq
        %v946 = vshrl.u32 %v945, 7
        %v947 = vsub.s32 %v944, %v946
        %v948 = vrot.slane %v940, %v947
        %v950 = vunpack.c.l.s4 1983009808
        %v951 = vunpack.c.0.s8 %v950
        %v952 = vlaneseq
        %v953 = vshrl.u32 %v952, 7
        %v954 = vsub.s32 %v951, %v953
        %v955 = vrot.slane %v941, %v954
        %v956 = vcombine.low %v572, %v636
        %v957 = vcombine.high %v572, %v636
        %v959 = vunpack.c.l.s4 1983009808
        %v960 = vunpack.c.0.s8 %v959
        %v961 = vlaneseq
        %v962 = vshrl.u32 %v961, 7
        %v963 = vsub.s32 %v960, %v962
        %v964 = vrot.slane %v956, %v963
        %v966 = vunpack.c.l.s4 1983009808
        %v967 = vunpack.c.0.s8 %v966
        %v968 = vlaneseq
        %v969 = vshrl.u32 %v968, 7
        %v970 = vsub.s32 %v967, %v969
        %v971 = vrot.slane %v957, %v970
        %v972 = vcombine.low %v916, %v932
        %v973 = vcombine.high %v916, %v932
        %v975 = vunpack.c.l.s4 1934713408
        %v976 = vunpack.c.0.s8 %v975
        %v977 = vlaneseq
        %v978 = vshrl.u32 %v977, 7
        %v979 = vsub.s32 %v976, %v978
        %v980 = vrot.slane %v972, %v979
        %v982 = vunpack.c.l.s4 1934713408
        %v983 = vunpack.c.0.s8 %v982
        %v984 = vlaneseq
        %v985 = vshrl.u32 %v984, 7
        %v986 = vsub.s32 %v983, %v985
        %v987 = vrot.slane %v973, %v986
        %v988 = vcombine.low %v923, %v939
        %v989 = vcombine.high %v923, %v939
        %v991 = vunpack.c.l.s4 1934713408
        %v992 = vunpack.c.0.s8 %v991
        %v993 = vlaneseq
        %v994 = vshrl.u32 %v993, 7
        %v995 = vsub.s32 %v992, %v994
        %v996 = vrot.slane %v988, %v995
        %v998 = vunpack.c.l.s4 1934713408
        %v999 = vunpack.c.0.s8 %v998
        %v1000 = vlaneseq
        %v1001 = vshrl.u32 %v1000, 7
        %v1002 = vsub.s32 %v999, %v1001
        %v1003 = vrot.slane %v989, %v1002
        %v1004 = vcombine.low %v948, %v964
        %v1005 = vcombine.high %v948, %v964
        %v1007 = vunpack.c.l.s4 1934713408
        %v1008 = vunpack.c.0.s8 %v1007
        %v1009 = vlaneseq
        %v1010 = vshrl.u32 %v1009, 7
        %v1011 = vsub.s32 %v1008, %v1010
        %v1012 = vrot.slane %v1004, %v1011
        %v1014 = vunpack.c.l.s4 1934713408
        %v1015 = vunpack.c.0.s8 %v1014
        %v1016 = vlaneseq
        %v1017 = vshrl.u32 %v1016, 7
        %v1018 = vsub.s32 %v1015, %v1017
        %v1019 = vrot.slane %v1005, %v1018
        %v1020 = vcombine.low %v955, %v971
        %v1021 = vcombine.high %v955, %v971
        %v1023 = vunpack.c.l.s4 1934713408
        %v1024 = vunpack.c.0.s8 %v1023
        %v1025 = vlaneseq
        %v1026 = vshrl.u32 %v1025, 7
        %v1027 = vsub.s32 %v1024, %v1026
        %v1028 = vrot.slane %v1020, %v1027
        %v1030 = vunpack.c.l.s4 1934713408
        %v1031 = vunpack.c.0.s8 %v1030
        %v1032 = vlaneseq
        %v1033 = vshrl.u32 %v1032, 7
        %v1034 = vsub.s32 %v1031, %v1033
        %v1035 = vrot.slane %v1021, %v1034
        %v1036 = vcombine.low %v980, %v1012
        %v1037 = vcombine.high %v980, %v1012
        %v1038 = vcombine.low %v987, %v1019
        %v1039 = vcombine.high %v987, %v1019
        %v1040 = vcombine.low %v996, %v1028
        %v1041 = vcombine.high %v996, %v1028
        %v1042 = vcombine.low %v1003, %v1035
        %v1043 = vcombine.high %v1003, %v1035
        %v1044 = vcombine.low %v668, %v732
        %v1045 = vcombine.high %v668, %v732
        %v1047 = vunpack.c.l.s4 1983009808
        %v1048 = vunpack.c.0.s8 %v1047
        %v1049 = vlaneseq
        %v1050 = vshrl.u32 %v1049, 7
        %v1051 = vsub.s32 %v1048, %v1050
        %v1052 = vrot.slane %v1044, %v1051
        %v1054 = vunpack.c.l.s4 1983009808
        %v1055 = vunpack.c.0.s8 %v1054
        %v1056 = vlaneseq
        %v1057 = vshrl.u32 %v1056, 7
        %v1058 = vsub.s32 %v1055, %v1057
        %v1059 = vrot.slane %v1045, %v1058
        %v1060 = vcombine.low %v700, %v764
        %v1061 = vcombine.high %v700, %v764
        %v1063 = vunpack.c.l.s4 1983009808
        %v1064 = vunpack.c.0.s8 %v1063
        %v1065 = vlaneseq
        %v1066 = vshrl.u32 %v1065, 7
        %v1067 = vsub.s32 %v1064, %v1066
        %v1068 = vrot.slane %v1060, %v1067
        %v1070 = vunpack.c.l.s4 1983009808
        %v1071 = vunpack.c.0.s8 %v1070
        %v1072 = vlaneseq
        %v1073 = vshrl.u32 %v1072, 7
        %v1074 = vsub.s32 %v1071, %v1073
        %v1075 = vrot.slane %v1061, %v1074
        %v1076 = vcombine.low %v796, %v860
        %v1077 = vcombine.high %v796, %v860
        %v1079 = vunpack.c.l.s4 1983009808
        %v1080 = vunpack.c.0.s8 %v1079
        %v1081 = vlaneseq
        %v1082 = vshrl.u32 %v1081, 7
        %v1083 = vsub.s32 %v1080, %v1082
        %v1084 = vrot.slane %v1076, %v1083
        %v1086 = vunpack.c.l.s4 1983009808
        %v1087 = vunpack.c.0.s8 %v1086
        %v1088 = vlaneseq
        %v1089 = vshrl.u32 %v1088, 7
        %v1090 = vsub.s32 %v1087, %v1089
        %v1091 = vrot.slane %v1077, %v1090
        %v1092 = vcombine.low %v828, %v892
        %v1093 = vcombine.high %v828, %v892
        %v1095 = vunpack.c.l.s4 1983009808
        %v1096 = vunpack.c.0.s8 %v1095
        %v1097 = vlaneseq
        %v1098 = vshrl.u32 %v1097, 7
        %v1099 = vsub.s32 %v1096, %v1098
        %v1100 = vrot.slane %v1092, %v1099
        %v1102 = vunpack.c.l.s4 1983009808
        %v1103 = vunpack.c.0.s8 %v1102
        %v1104 = vlaneseq
        %v1105 = vshrl.u32 %v1104, 7
        %v1106 = vsub.s32 %v1103, %v1105
        %v1107 = vrot.slane %v1093, %v1106
        %v1108 = vcombine.low %v1052, %v1068
        %v1109 = vcombine.high %v1052, %v1068
        %v1111 = vunpack.c.l.s4 1934713408
        %v1112 = vunpack.c.0.s8 %v1111
        %v1113 = vlaneseq
        %v1114 = vshrl.u32 %v1113, 7
        %v1115 = vsub.s32 %v1112, %v1114
        %v1116 = vrot.slane %v1108, %v1115
        %v1118 = vunpack.c.l.s4 1934713408
        %v1119 = vunpack.c.0.s8 %v1118
        %v1120 = vlaneseq
        %v1121 = vshrl.u32 %v1120, 7
        %v1122 = vsub.s32 %v1119, %v1121
        %v1123 = vrot.slane %v1109, %v1122
        %v1124 = vcombine.low %v1059, %v1075
        %v1125 = vcombine.high %v1059, %v1075
        %v1127 = vunpack.c.l.s4 1934713408
        %v1128 = vunpack.c.0.s8 %v1127
        %v1129 = vlaneseq
        %v1130 = vshrl.u32 %v1129, 7
        %v1131 = vsub.s32 %v1128, %v1130
        %v1132 = vrot.slane %v1124, %v1131
        %v1134 = vunpack.c.l.s4 1934713408
        %v1135 = vunpack.c.0.s8 %v1134
        %v1136 = vlaneseq
        %v1137 = vshrl.u32 %v1136, 7
        %v1138 = vsub.s32 %v1135, %v1137
        %v1139 = vrot.slane %v1125, %v1138
        %v1140 = vcombine.low %v1084, %v1100
        %v1141 = vcombine.high %v1084, %v1100
        %v1143 = vunpack.c.l.s4 1934713408
        %v1144 = vunpack.c.0.s8 %v1143
        %v1145 = vlaneseq
        %v1146 = vshrl.u32 %v1145, 7
        %v1147 = vsub.s32 %v1144, %v1146
        %v1148 = vrot.slane %v1140, %v1147
        %v1150 = vunpack.c.l.s4 1934713408
        %v1151 = vunpack.c.0.s8 %v1150
        %v1152 = vlaneseq
        %v1153 = vshrl.u32 %v1152, 7
        %v1154 = vsub.s32 %v1151, %v1153
        %v1155 = vrot.slane %v1141, %v1154
        %v1156 = vcombine.low %v1091, %v1107
        %v1157 = vcombine.high %v1091, %v1107
        %v1159 = vunpack.c.l.s4 1934713408
        %v1160 = vunpack.c.0.s8 %v1159
        %v1161 = vlaneseq
        %v1162 = vshrl.u32 %v1161, 7
        %v1163 = vsub.s32 %v1160, %v1162
        %v1164 = vrot.slane %v1156, %v1163
        %v1166 = vunpack.c.l.s4 1934713408
        %v1167 = vunpack.c.0.s8 %v1166
        %v1168 = vlaneseq
        %v1169 = vshrl.u32 %v1168, 7
        %v1170 = vsub.s32 %v1167, %v1169
        %v1171 = vrot.slane %v1157, %v1170
        %v1172 = vcombine.low %v1116, %v1148
        %v1173 = vcombine.high %v1116, %v1148
        %v1174 = vcombine.low %v1123, %v1155
        %v1175 = vcombine.high %v1123, %v1155
        %v1176 = vcombine.low %v1132, %v1164
        %v1177 = vcombine.high %v1132, %v1164
        %v1178 = vcombine.low %v1139, %v1171
        %v1179 = vcombine.high %v1139, %v1171
        %v1180 = vcombine.low %v413, %v477
        %v1181 = vcombine.high %v413, %v477
        %v1183 = vunpack.c.l.s4 1983009808
        %v1184 = vunpack.c.0.s8 %v1183
        %v1185 = vlaneseq
        %v1186 = vshrl.u32 %v1185, 7
        %v1187 = vsub.s32 %v1184, %v1186
        %v1188 = vrot.slane %v1180, %v1187
        %v1190 = vunpack.c.l.s4 1983009808
        %v1191 = vunpack.c.0.s8 %v1190
        %v1192 = vlaneseq
        %v1193 = vshrl.u32 %v1192, 7
        %v1194 = vsub.s32 %v1191, %v1193
        %v1195 = vrot.slane %v1181, %v1194
        %v1196 = vcombine.low %v445, %v509
        %v1197 = vcombine.high %v445, %v509
        %v1199 = vunpack.c.l.s4 1983009808
        %v1200 = vunpack.c.0.s8 %v1199
        %v1201 = vlaneseq
        %v1202 = vshrl.u32 %v1201, 7
        %v1203 = vsub.s32 %v1200, %v1202
        %v1204 = vrot.slane %v1196, %v1203
        %v1206 = vunpack.c.l.s4 1983009808
        %v1207 = vunpack.c.0.s8 %v1206
        %v1208 = vlaneseq
        %v1209 = vshrl.u32 %v1208, 7
        %v1210 = vsub.s32 %v1207, %v1209
        %v1211 = vrot.slane %v1197, %v1210
        %v1212 = vcombine.low %v541, %v605
        %v1213 = vcombine.high %v541, %v605
        %v1215 = vunpack.c.l.s4 1983009808
        %v1216 = vunpack.c.0.s8 %v1215
        %v1217 = vlaneseq
        %v1218 = vshrl.u32 %v1217, 7
        %v1219 = vsub.s32 %v1216, %v1218
        %v1220 = vrot.slane %v1212, %v1219
        %v1222 = vunpack.c.l.s4 1983009808
        %v1223 = vunpack.c.0.s8 %v1222
        %v1224 = vlaneseq
        %v1225 = vshrl.u32 %v1224, 7
        %v1226 = vsub.s32 %v1223, %v1225
        %v1227 = vrot.slane %v1213, %v1226
        %v1228 = vcombine.low %v573, %v637
        %v1229 = vcombine.high %v573, %v637
        %v1231 = vunpack.c.l.s4 1983009808
        %v1232 = vunpack.c.0.s8 %v1231
        %v1233 = vlaneseq
        %v1234 = vshrl.u32 %v1233, 7
        %v1235 = vsub.s32 %v1232, %v1234
        %v1236 = vrot.slane %v1228, %v1235
        %v1238 = vunpack.c.l.s4 1983009808
        %v1239 = vunpack.c.0.s8 %v1238
        %v1240 = vlaneseq
        %v1241 = vshrl.u32 %v1240, 7
        %v1242 = vsub.s32 %v1239, %v1241
        %v1243 = vrot.slane %v1229, %v1242
        %v1244 = vcombine.low %v1188, %v1204
        %v1245 = vcombine.high %v1188, %v1204
        %v1247 = vunpack.c.l.s4 1934713408
        %v1248 = vunpack.c.0.s8 %v1247
        %v1249 = vlaneseq
        %v1250 = vshrl.u32 %v1249, 7
        %v1251 = vsub.s32 %v1248, %v1250
        %v1252 = vrot.slane %v1244, %v1251
        %v1254 = vunpack.c.l.s4 1934713408
        %v1255 = vunpack.c.0.s8 %v1254
        %v1256 = vlaneseq
        %v1257 = vshrl.u32 %v1256, 7
        %v1258 = vsub.s32 %v1255, %v1257
        %v1259 = vrot.slane %v1245, %v1258
        %v1260 = vcombine.low %v1195, %v1211
        %v1261 = vcombine.high %v1195, %v1211
        %v1263 = vunpack.c.l.s4 1934713408
        %v1264 = vunpack.c.0.s8 %v1263
        %v1265 = vlaneseq
        %v1266 = vshrl.u32 %v1265, 7
        %v1267 = vsub.s32 %v1264, %v1266
        %v1268 = vrot.slane %v1260, %v1267
        %v1270 = vunpack.c.l.s4 1934713408
        %v1271 = vunpack.c.0.s8 %v1270
        %v1272 = vlaneseq
        %v1273 = vshrl.u32 %v1272, 7
        %v1274 = vsub.s32 %v1271, %v1273
        %v1275 = vrot.slane %v1261, %v1274
        %v1276 = vcombine.low %v1220, %v1236
        %v1277 = vcombine.high %v1220, %v1236
        %v1279 = vunpack.c.l.s4 1934713408
        %v1280 = vunpack.c.0.s8 %v1279
        %v1281 = vlaneseq
        %v1282 = vshrl.u32 %v1281, 7
        %v1283 = vsub.s32 %v1280, %v1282
        %v1284 = vrot.slane %v1276, %v1283
        %v1286 = vunpack.c.l.s4 1934713408
        %v1287 = vunpack.c.0.s8 %v1286
        %v1288 = vlaneseq
        %v1289 = vshrl.u32 %v1288, 7
        %v1290 = vsub.s32 %v1287, %v1289
        %v1291 = vrot.slane %v1277, %v1290
        %v1292 = vcombine.low %v1227, %v1243
        %v1293 = vcombine.high %v1227, %v1243
        %v1295 = vunpack.c.l.s4 1934713408
        %v1296 = vunpack.c.0.s8 %v1295
        %v1297 = vlaneseq
        %v1298 = vshrl.u32 %v1297, 7
        %v1299 = vsub.s32 %v1296, %v1298
        %v1300 = vrot.slane %v1292, %v1299
        %v1302 = vunpack.c.l.s4 1934713408
        %v1303 = vunpack.c.0.s8 %v1302
        %v1304 = vlaneseq
        %v1305 = vshrl.u32 %v1304, 7
        %v1306 = vsub.s32 %v1303, %v1305
        %v1307 = vrot.slane %v1293, %v1306
        %v1308 = vcombine.low %v1252, %v1284
        %v1309 = vcombine.high %v1252, %v1284
        %v1310 = vcombine.low %v1259, %v1291
        %v1311 = vcombine.high %v1259, %v1291
        %v1312 = vcombine.low %v1268, %v1300
        %v1313 = vcombine.high %v1268, %v1300
        %v1314 = vcombine.low %v1275, %v1307
        %v1315 = vcombine.high %v1275, %v1307
        %v1316 = vcombine.low %v669, %v733
        %v1317 = vcombine.high %v669, %v733
        %v1319 = vunpack.c.l.s4 1983009808
        %v1320 = vunpack.c.0.s8 %v1319
        %v1321 = vlaneseq
        %v1322 = vshrl.u32 %v1321, 7
        %v1323 = vsub.s32 %v1320, %v1322
        %v1324 = vrot.slane %v1316, %v1323
        %v1326 = vunpack.c.l.s4 1983009808
        %v1327 = vunpack.c.0.s8 %v1326
        %v1328 = vlaneseq
        %v1329 = vshrl.u32 %v1328, 7
        %v1330 = vsub.s32 %v1327, %v1329
        %v1331 = vrot.slane %v1317, %v1330
        %v1332 = vcombine.low %v701, %v765
        %v1333 = vcombine.high %v701, %v765
        %v1335 = vunpack.c.l.s4 1983009808
        %v1336 = vunpack.c.0.s8 %v1335
        %v1337 = vlaneseq
        %v1338 = vshrl.u32 %v1337, 7
        %v1339 = vsub.s32 %v1336, %v1338
        %v1340 = vrot.slane %v1332, %v1339
        %v1342 = vunpack.c.l.s4 1983009808
        %v1343 = vunpack.c.0.s8 %v1342
        %v1344 = vlaneseq
        %v1345 = vshrl.u32 %v1344, 7
        %v1346 = vsub.s32 %v1343, %v1345
        %v1347 = vrot.slane %v1333, %v1346
        %v1348 = vcombine.low %v797, %v861
        %v1349 = vcombine.high %v797, %v861
        %v1351 = vunpack.c.l.s4 1983009808
        %v1352 = vunpack.c.0.s8 %v1351
        %v1353 = vlaneseq
        %v1354 = vshrl.u32 %v1353, 7
        %v1355 = vsub.s32 %v1352, %v1354
        %v1356 = vrot.slane %v1348, %v1355
        %v1358 = vunpack.c.l.s4 1983009808
        %v1359 = vunpack.c.0.s8 %v1358
        %v1360 = vlaneseq
        %v1361 = vshrl.u32 %v1360, 7
        %v1362 = vsub.s32 %v1359, %v1361
        %v1363 = vrot.slane %v1349, %v1362
        %v1364 = vcombine.low %v829, %v893
        %v1365 = vcombine.high %v829, %v893
        %v1367 = vunpack.c.l.s4 1983009808
        %v1368 = vunpack.c.0.s8 %v1367
        %v1369 = vlaneseq
        %v1370 = vshrl.u32 %v1369, 7
        %v1371 = vsub.s32 %v1368, %v1370
        %v1372 = vrot.slane %v1364, %v1371
        %v1374 = vunpack.c.l.s4 1983009808
        %v1375 = vunpack.c.0.s8 %v1374
        %v1376 = vlaneseq
        %v1377 = vshrl.u32 %v1376, 7
        %v1378 = vsub.s32 %v1375, %v1377
        %v1379 = vrot.slane %v1365, %v1378
        %v1380 = vcombine.low %v1324, %v1340
        %v1381 = vcombine.high %v1324, %v1340
        %v1383 = vunpack.c.l.s4 1934713408
        %v1384 = vunpack.c.0.s8 %v1383
        %v1385 = vlaneseq
        %v1386 = vshrl.u32 %v1385, 7
        %v1387 = vsub.s32 %v1384, %v1386
        %v1388 = vrot.slane %v1380, %v1387
        %v1390 = vunpack.c.l.s4 1934713408
        %v1391 = vunpack.c.0.s8 %v1390
        %v1392 = vlaneseq
        %v1393 = vshrl.u32 %v1392, 7
        %v1394 = vsub.s32 %v1391, %v1393
        %v1395 = vrot.slane %v1381, %v1394
        %v1396 = vcombine.low %v1331, %v1347
        %v1397 = vcombine.high %v1331, %v1347
        %v1399 = vunpack.c.l.s4 1934713408
        %v1400 = vunpack.c.0.s8 %v1399
        %v1401 = vlaneseq
        %v1402 = vshrl.u32 %v1401, 7
        %v1403 = vsub.s32 %v1400, %v1402
        %v1404 = vrot.slane %v1396, %v1403
        %v1406 = vunpack.c.l.s4 1934713408
        %v1407 = vunpack.c.0.s8 %v1406
        %v1408 = vlaneseq
        %v1409 = vshrl.u32 %v1408, 7
        %v1410 = vsub.s32 %v1407, %v1409
        %v1411 = vrot.slane %v1397, %v1410
        %v1412 = vcombine.low %v1356, %v1372
        %v1413 = vcombine.high %v1356, %v1372
        %v1415 = vunpack.c.l.s4 1934713408
        %v1416 = vunpack.c.0.s8 %v1415
        %v1417 = vlaneseq
        %v1418 = vshrl.u32 %v1417, 7
        %v1419 = vsub.s32 %v1416, %v1418
        %v1420 = vrot.slane %v1412, %v1419
        %v1422 = vunpack.c.l.s4 1934713408
        %v1423 = vunpack.c.0.s8 %v1422
        %v1424 = vlaneseq
        %v1425 = vshrl.u32 %v1424, 7
        %v1426 = vsub.s32 %v1423, %v1425
        %v1427 = vrot.slane %v1413, %v1426
        %v1428 = vcombine.low %v1363, %v1379
        %v1429 = vcombine.high %v1363, %v1379
        %v1431 = vunpack.c.l.s4 1934713408
        %v1432 = vunpack.c.0.s8 %v1431
        %v1433 = vlaneseq
        %v1434 = vshrl.u32 %v1433, 7
        %v1435 = vsub.s32 %v1432, %v1434
        %v1436 = vrot.slane %v1428, %v1435
        %v1438 = vunpack.c.l.s4 1934713408
        %v1439 = vunpack.c.0.s8 %v1438
        %v1440 = vlaneseq
        %v1441 = vshrl.u32 %v1440, 7
        %v1442 = vsub.s32 %v1439, %v1441
        %v1443 = vrot.slane %v1429, %v1442
        %v1444 = vcombine.low %v1388, %v1420
        %v1445 = vcombine.high %v1388, %v1420
        %v1446 = vcombine.low %v1395, %v1427
        %v1447 = vcombine.high %v1395, %v1427
        %v1448 = vcombine.low %v1404, %v1436
        %v1449 = vcombine.high %v1404, %v1436
        %v1450 = vcombine.low %v1411, %v1443
        %v1451 = vcombine.high %v1411, %v1443
        %v1452 = vcombine.low %v414, %v478
        %v1453 = vcombine.high %v414, %v478
        %v1455 = vunpack.c.l.s4 1983009808
        %v1456 = vunpack.c.0.s8 %v1455
        %v1457 = vlaneseq
        %v1458 = vshrl.u32 %v1457, 7
        %v1459 = vsub.s32 %v1456, %v1458
        %v1460 = vrot.slane %v1452, %v1459
        %v1462 = vunpack.c.l.s4 1983009808
        %v1463 = vunpack.c.0.s8 %v1462
        %v1464 = vlaneseq
        %v1465 = vshrl.u32 %v1464, 7
        %v1466 = vsub.s32 %v1463, %v1465
        %v1467 = vrot.slane %v1453, %v1466
        %v1468 = vcombine.low %v446, %v510
        %v1469 = vcombine.high %v446, %v510
        %v1471 = vunpack.c.l.s4 1983009808
        %v1472 = vunpack.c.0.s8 %v1471
        %v1473 = vlaneseq
        %v1474 = vshrl.u32 %v1473, 7
        %v1475 = vsub.s32 %v1472, %v1474
        %v1476 = vrot.slane %v1468, %v1475
        %v1478 = vunpack.c.l.s4 1983009808
        %v1479 = vunpack.c.0.s8 %v1478
        %v1480 = vlaneseq
        %v1481 = vshrl.u32 %v1480, 7
        %v1482 = vsub.s32 %v1479, %v1481
        %v1483 = vrot.slane %v1469, %v1482
        %v1484 = vcombine.low %v542, %v606
        %v1485 = vcombine.high %v542, %v606
        %v1487 = vunpack.c.l.s4 1983009808
        %v1488 = vunpack.c.0.s8 %v1487
        %v1489 = vlaneseq
        %v1490 = vshrl.u32 %v1489, 7
        %v1491 = vsub.s32 %v1488, %v1490
        %v1492 = vrot.slane %v1484, %v1491
        %v1494 = vunpack.c.l.s4 1983009808
        %v1495 = vunpack.c.0.s8 %v1494
        %v1496 = vlaneseq
        %v1497 = vshrl.u32 %v1496, 7
        %v1498 = vsub.s32 %v1495, %v1497
        %v1499 = vrot.slane %v1485, %v1498
        %v1500 = vcombine.low %v574, %v638
        %v1501 = vcombine.high %v574, %v638
        %v1503 = vunpack.c.l.s4 1983009808
        %v1504 = vunpack.c.0.s8 %v1503
        %v1505 = vlaneseq
        %v1506 = vshrl.u32 %v1505, 7
        %v1507 = vsub.s32 %v1504, %v1506
        %v1508 = vrot.slane %v1500, %v1507
        %v1510 = vunpack.c.l.s4 1983009808
        %v1511 = vunpack.c.0.s8 %v1510
        %v1512 = vlaneseq
        %v1513 = vshrl.u32 %v1512, 7
        %v1514 = vsub.s32 %v1511, %v1513
        %v1515 = vrot.slane %v1501, %v1514
        %v1516 = vcombine.low %v1460, %v1476
        %v1517 = vcombine.high %v1460, %v1476
        %v1519 = vunpack.c.l.s4 1934713408
        %v1520 = vunpack.c.0.s8 %v1519
        %v1521 = vlaneseq
        %v1522 = vshrl.u32 %v1521, 7
        %v1523 = vsub.s32 %v1520, %v1522
        %v1524 = vrot.slane %v1516, %v1523
        %v1526 = vunpack.c.l.s4 1934713408
        %v1527 = vunpack.c.0.s8 %v1526
        %v1528 = vlaneseq
        %v1529 = vshrl.u32 %v1528, 7
        %v1530 = vsub.s32 %v1527, %v1529
        %v1531 = vrot.slane %v1517, %v1530
        %v1532 = vcombine.low %v1467, %v1483
        %v1533 = vcombine.high %v1467, %v1483
        %v1535 = vunpack.c.l.s4 1934713408
        %v1536 = vunpack.c.0.s8 %v1535
        %v1537 = vlaneseq
        %v1538 = vshrl.u32 %v1537, 7
        %v1539 = vsub.s32 %v1536, %v1538
        %v1540 = vrot.slane %v1532, %v1539
        %v1542 = vunpack.c.l.s4 1934713408
        %v1543 = vunpack.c.0.s8 %v1542
        %v1544 = vlaneseq
        %v1545 = vshrl.u32 %v1544, 7
        %v1546 = vsub.s32 %v1543, %v1545
        %v1547 = vrot.slane %v1533, %v1546
        %v1548 = vcombine.low %v1492, %v1508
        %v1549 = vcombine.high %v1492, %v1508
        %v1551 = vunpack.c.l.s4 1934713408
        %v1552 = vunpack.c.0.s8 %v1551
        %v1553 = vlaneseq
        %v1554 = vshrl.u32 %v1553, 7
        %v1555 = vsub.s32 %v1552, %v1554
        %v1556 = vrot.slane %v1548, %v1555
        %v1558 = vunpack.c.l.s4 1934713408
        %v1559 = vunpack.c.0.s8 %v1558
        %v1560 = vlaneseq
        %v1561 = vshrl.u32 %v1560, 7
        %v1562 = vsub.s32 %v1559, %v1561
        %v1563 = vrot.slane %v1549, %v1562
        %v1564 = vcombine.low %v1499, %v1515
        %v1565 = vcombine.high %v1499, %v1515
        %v1567 = vunpack.c.l.s4 1934713408
        %v1568 = vunpack.c.0.s8 %v1567
        %v1569 = vlaneseq
        %v1570 = vshrl.u32 %v1569, 7
        %v1571 = vsub.s32 %v1568, %v1570
        %v1572 = vrot.slane %v1564, %v1571
        %v1574 = vunpack.c.l.s4 1934713408
        %v1575 = vunpack.c.0.s8 %v1574
        %v1576 = vlaneseq
        %v1577 = vshrl.u32 %v1576, 7
        %v1578 = vsub.s32 %v1575, %v1577
        %v1579 = vrot.slane %v1565, %v1578
        %v1580 = vcombine.low %v1524, %v1556
        %v1581 = vcombine.high %v1524, %v1556
        %v1582 = vcombine.low %v1531, %v1563
        %v1583 = vcombine.high %v1531, %v1563
        %v1584 = vcombine.low %v1540, %v1572
        %v1585 = vcombine.high %v1540, %v1572
        %v1586 = vcombine.low %v1547, %v1579
        %v1587 = vcombine.high %v1547, %v1579
        %v1588 = vcombine.low %v670, %v734
        %v1589 = vcombine.high %v670, %v734
        %v1591 = vunpack.c.l.s4 1983009808
        %v1592 = vunpack.c.0.s8 %v1591
        %v1593 = vlaneseq
        %v1594 = vshrl.u32 %v1593, 7
        %v1595 = vsub.s32 %v1592, %v1594
        %v1596 = vrot.slane %v1588, %v1595
        %v1598 = vunpack.c.l.s4 1983009808
        %v1599 = vunpack.c.0.s8 %v1598
        %v1600 = vlaneseq
        %v1601 = vshrl.u32 %v1600, 7
        %v1602 = vsub.s32 %v1599, %v1601
        %v1603 = vrot.slane %v1589, %v1602
        %v1604 = vcombine.low %v702, %v766
        %v1605 = vcombine.high %v702, %v766
        %v1607 = vunpack.c.l.s4 1983009808
        %v1608 = vunpack.c.0.s8 %v1607
        %v1609 = vlaneseq
        %v1610 = vshrl.u32 %v1609, 7
        %v1611 = vsub.s32 %v1608, %v1610
        %v1612 = vrot.slane %v1604, %v1611
        %v1614 = vunpack.c.l.s4 1983009808
        %v1615 = vunpack.c.0.s8 %v1614
        %v1616 = vlaneseq
        %v1617 = vshrl.u32 %v1616, 7
        %v1618 = vsub.s32 %v1615, %v1617
        %v1619 = vrot.slane %v1605, %v1618
        %v1620 = vcombine.low %v798, %v862
        %v1621 = vcombine.high %v798, %v862
        %v1623 = vunpack.c.l.s4 1983009808
        %v1624 = vunpack.c.0.s8 %v1623
        %v1625 = vlaneseq
        %v1626 = vshrl.u32 %v1625, 7
        %v1627 = vsub.s32 %v1624, %v1626
        %v1628 = vrot.slane %v1620, %v1627
        %v1630 = vunpack.c.l.s4 1983009808
        %v1631 = vunpack.c.0.s8 %v1630
        %v1632 = vlaneseq
        %v1633 = vshrl.u32 %v1632, 7
        %v1634 = vsub.s32 %v1631, %v1633
        %v1635 = vrot.slane %v1621, %v1634
        %v1636 = vcombine.low %v830, %v894
        %v1637 = vcombine.high %v830, %v894
        %v1639 = vunpack.c.l.s4 1983009808
        %v1640 = vunpack.c.0.s8 %v1639
        %v1641 = vlaneseq
        %v1642 = vshrl.u32 %v1641, 7
        %v1643 = vsub.s32 %v1640, %v1642
        %v1644 = vrot.slane %v1636, %v1643
        %v1646 = vunpack.c.l.s4 1983009808
        %v1647 = vunpack.c.0.s8 %v1646
        %v1648 = vlaneseq
        %v1649 = vshrl.u32 %v1648, 7
        %v1650 = vsub.s32 %v1647, %v1649
        %v1651 = vrot.slane %v1637, %v1650
        %v1652 = vcombine.low %v1596, %v1612
        %v1653 = vcombine.high %v1596, %v1612
        %v1655 = vunpack.c.l.s4 1934713408
        %v1656 = vunpack.c.0.s8 %v1655
        %v1657 = vlaneseq
        %v1658 = vshrl.u32 %v1657, 7
        %v1659 = vsub.s32 %v1656, %v1658
        %v1660 = vrot.slane %v1652, %v1659
        %v1662 = vunpack.c.l.s4 1934713408
        %v1663 = vunpack.c.0.s8 %v1662
        %v1664 = vlaneseq
        %v1665 = vshrl.u32 %v1664, 7
        %v1666 = vsub.s32 %v1663, %v1665
        %v1667 = vrot.slane %v1653, %v1666
        %v1668 = vcombine.low %v1603, %v1619
        %v1669 = vcombine.high %v1603, %v1619
        %v1671 = vunpack.c.l.s4 1934713408
        %v1672 = vunpack.c.0.s8 %v1671
        %v1673 = vlaneseq
        %v1674 = vshrl.u32 %v1673, 7
        %v1675 = vsub.s32 %v1672, %v1674
        %v1676 = vrot.slane %v1668, %v1675
        %v1678 = vunpack.c.l.s4 1934713408
        %v1679 = vunpack.c.0.s8 %v1678
        %v1680 = vlaneseq
        %v1681 = vshrl.u32 %v1680, 7
        %v1682 = vsub.s32 %v1679, %v1681
        %v1683 = vrot.slane %v1669, %v1682
        %v1684 = vcombine.low %v1628, %v1644
        %v1685 = vcombine.high %v1628, %v1644
        %v1687 = vunpack.c.l.s4 1934713408
        %v1688 = vunpack.c.0.s8 %v1687
        %v1689 = vlaneseq
        %v1690 = vshrl.u32 %v1689, 7
        %v1691 = vsub.s32 %v1688, %v1690
        %v1692 = vrot.slane %v1684, %v1691
        %v1694 = vunpack.c.l.s4 1934713408
        %v1695 = vunpack.c.0.s8 %v1694
        %v1696 = vlaneseq
        %v1697 = vshrl.u32 %v1696, 7
        %v1698 = vsub.s32 %v1695, %v1697
        %v1699 = vrot.slane %v1685, %v1698
        %v1700 = vcombine.low %v1635, %v1651
        %v1701 = vcombine.high %v1635, %v1651
        %v1703 = vunpack.c.l.s4 1934713408
        %v1704 = vunpack.c.0.s8 %v1703
        %v1705 = vlaneseq
        %v1706 = vshrl.u32 %v1705, 7
        %v1707 = vsub.s32 %v1704, %v1706
        %v1708 = vrot.slane %v1700, %v1707
        %v1710 = vunpack.c.l.s4 1934713408
        %v1711 = vunpack.c.0.s8 %v1710
        %v1712 = vlaneseq
        %v1713 = vshrl.u32 %v1712, 7
        %v1714 = vsub.s32 %v1711, %v1713
        %v1715 = vrot.slane %v1701, %v1714
        %v1716 = vcombine.low %v1660, %v1692
        %v1717 = vcombine.high %v1660, %v1692
        %v1718 = vcombine.low %v1667, %v1699
        %v1719 = vcombine.high %v1667, %v1699
        %v1720 = vcombine.low %v1676, %v1708
        %v1721 = vcombine.high %v1676, %v1708
        %v1722 = vcombine.low %v1683, %v1715
        %v1723 = vcombine.high %v1683, %v1715
        %v1724 = vcombine.low %v415, %v479
        %v1725 = vcombine.high %v415, %v479
        %v1727 = vunpack.c.l.s4 1983009808
        %v1728 = vunpack.c.0.s8 %v1727
        %v1729 = vlaneseq
        %v1730 = vshrl.u32 %v1729, 7
        %v1731 = vsub.s32 %v1728, %v1730
        %v1732 = vrot.slane %v1724, %v1731
        %v1734 = vunpack.c.l.s4 1983009808
        %v1735 = vunpack.c.0.s8 %v1734
        %v1736 = vlaneseq
        %v1737 = vshrl.u32 %v1736, 7
        %v1738 = vsub.s32 %v1735, %v1737
        %v1739 = vrot.slane %v1725, %v1738
        %v1740 = vcombine.low %v447, %v511
        %v1741 = vcombine.high %v447, %v511
        %v1743 = vunpack.c.l.s4 1983009808
        %v1744 = vunpack.c.0.s8 %v1743
        %v1745 = vlaneseq
        %v1746 = vshrl.u32 %v1745, 7
        %v1747 = vsub.s32 %v1744, %v1746
        %v1748 = vrot.slane %v1740, %v1747
        %v1750 = vunpack.c.l.s4 1983009808
        %v1751 = vunpack.c.0.s8 %v1750
        %v1752 = vlaneseq
        %v1753 = vshrl.u32 %v1752, 7
        %v1754 = vsub.s32 %v1751, %v1753
        %v1755 = vrot.slane %v1741, %v1754
        %v1756 = vcombine.low %v543, %v607
        %v1757 = vcombine.high %v543, %v607
        %v1759 = vunpack.c.l.s4 1983009808
        %v1760 = vunpack.c.0.s8 %v1759
        %v1761 = vlaneseq
        %v1762 = vshrl.u32 %v1761, 7
        %v1763 = vsub.s32 %v1760, %v1762
        %v1764 = vrot.slane %v1756, %v1763
        %v1766 = vunpack.c.l.s4 1983009808
        %v1767 = vunpack.c.0.s8 %v1766
        %v1768 = vlaneseq
        %v1769 = vshrl.u32 %v1768, 7
        %v1770 = vsub.s32 %v1767, %v1769
        %v1771 = vrot.slane %v1757, %v1770
        %v1772 = vcombine.low %v575, %v639
        %v1773 = vcombine.high %v575, %v639
        %v1775 = vunpack.c.l.s4 1983009808
        %v1776 = vunpack.c.0.s8 %v1775
        %v1777 = vlaneseq
        %v1778 = vshrl.u32 %v1777, 7
        %v1779 = vsub.s32 %v1776, %v1778
        %v1780 = vrot.slane %v1772, %v1779
        %v1782 = vunpack.c.l.s4 1983009808
        %v1783 = vunpack.c.0.s8 %v1782
        %v1784 = vlaneseq
        %v1785 = vshrl.u32 %v1784, 7
        %v1786 = vsub.s32 %v1783, %v1785
        %v1787 = vrot.slane %v1773, %v1786
        %v1788 = vcombine.low %v1732, %v1748
        %v1789 = vcombine.high %v1732, %v1748
        %v1791 = vunpack.c.l.s4 1934713408
        %v1792 = vunpack.c.0.s8 %v1791
        %v1793 = vlaneseq
        %v1794 = vshrl.u32 %v1793, 7
        %v1795 = vsub.s32 %v1792, %v1794
        %v1796 = vrot.slane %v1788, %v1795
        %v1798 = vunpack.c.l.s4 1934713408
        %v1799 = vunpack.c.0.s8 %v1798
        %v1800 = vlaneseq
        %v1801 = vshrl.u32 %v1800, 7
        %v1802 = vsub.s32 %v1799, %v1801
        %v1803 = vrot.slane %v1789, %v1802
        %v1804 = vcombine.low %v1739, %v1755
        %v1805 = vcombine.high %v1739, %v1755
        %v1807 = vunpack.c.l.s4 1934713408
        %v1808 = vunpack.c.0.s8 %v1807
        %v1809 = vlaneseq
        %v1810 = vshrl.u32 %v1809, 7
        %v1811 = vsub.s32 %v1808, %v1810
        %v1812 = vrot.slane %v1804, %v1811
        %v1814 = vunpack.c.l.s4 1934713408
        %v1815 = vunpack.c.0.s8 %v1814
        %v1816 = vlaneseq
        %v1817 = vshrl.u32 %v1816, 7
        %v1818 = vsub.s32 %v1815, %v1817
        %v1819 = vrot.slane %v1805, %v1818
        %v1820 = vcombine.low %v1764, %v1780
        %v1821 = vcombine.high %v1764, %v1780
        %v1823 = vunpack.c.l.s4 1934713408
        %v1824 = vunpack.c.0.s8 %v1823
        %v1825 = vlaneseq
        %v1826 = vshrl.u32 %v1825, 7
        %v1827 = vsub.s32 %v1824, %v1826
        %v1828 = vrot.slane %v1820, %v1827
        %v1830 = vunpack.c.l.s4 1934713408
        %v1831 = vunpack.c.0.s8 %v1830
        %v1832 = vlaneseq
        %v1833 = vshrl.u32 %v1832, 7
        %v1834 = vsub.s32 %v1831, %v1833
        %v1835 = vrot.slane %v1821, %v1834
        %v1836 = vcombine.low %v1771, %v1787
        %v1837 = vcombine.high %v1771, %v1787
        %v1839 = vunpack.c.l.s4 1934713408
        %v1840 = vunpack.c.0.s8 %v1839
        %v1841 = vlaneseq
        %v1842 = vshrl.u32 %v1841, 7
        %v1843 = vsub.s32 %v1840, %v1842
        %v1844 = vrot.slane %v1836, %v1843
        %v1846 = vunpack.c.l.s4 1934713408
        %v1847 = vunpack.c.0.s8 %v1846
        %v1848 = vlaneseq
        %v1849 = vshrl.u32 %v1848, 7
        %v1850 = vsub.s32 %v1847, %v1849
        %v1851 = vrot.slane %v1837, %v1850
        %v1852 = vcombine.low %v1796, %v1828
        %v1853 = vcombine.high %v1796, %v1828
        %v1854 = vcombine.low %v1803, %v1835
        %v1855 = vcombine.high %v1803, %v1835
        %v1856 = vcombine.low %v1812, %v1844
        %v1857 = vcombine.high %v1812, %v1844
        %v1858 = vcombine.low %v1819, %v1851
        %v1859 = vcombine.high %v1819, %v1851
        %v1860 = vcombine.low %v671, %v735
        %v1861 = vcombine.high %v671, %v735
        %v1863 = vunpack.c.l.s4 1983009808
        %v1864 = vunpack.c.0.s8 %v1863
        %v1865 = vlaneseq
        %v1866 = vshrl.u32 %v1865, 7
        %v1867 = vsub.s32 %v1864, %v1866
        %v1868 = vrot.slane %v1860, %v1867
        %v1870 = vunpack.c.l.s4 1983009808
        %v1871 = vunpack.c.0.s8 %v1870
        %v1872 = vlaneseq
        %v1873 = vshrl.u32 %v1872, 7
        %v1874 = vsub.s32 %v1871, %v1873
        %v1875 = vrot.slane %v1861, %v1874
        %v1876 = vcombine.low %v703, %v767
        %v1877 = vcombine.high %v703, %v767
        %v1879 = vunpack.c.l.s4 1983009808
        %v1880 = vunpack.c.0.s8 %v1879
        %v1881 = vlaneseq
        %v1882 = vshrl.u32 %v1881, 7
        %v1883 = vsub.s32 %v1880, %v1882
        %v1884 = vrot.slane %v1876, %v1883
        %v1886 = vunpack.c.l.s4 1983009808
        %v1887 = vunpack.c.0.s8 %v1886
        %v1888 = vlaneseq
        %v1889 = vshrl.u32 %v1888, 7
        %v1890 = vsub.s32 %v1887, %v1889
        %v1891 = vrot.slane %v1877, %v1890
        %v1892 = vcombine.low %v799, %v863
        %v1893 = vcombine.high %v799, %v863
        %v1895 = vunpack.c.l.s4 1983009808
        %v1896 = vunpack.c.0.s8 %v1895
        %v1897 = vlaneseq
        %v1898 = vshrl.u32 %v1897, 7
        %v1899 = vsub.s32 %v1896, %v1898
        %v1900 = vrot.slane %v1892, %v1899
        %v1902 = vunpack.c.l.s4 1983009808
        %v1903 = vunpack.c.0.s8 %v1902
        %v1904 = vlaneseq
        %v1905 = vshrl.u32 %v1904, 7
        %v1906 = vsub.s32 %v1903, %v1905
        %v1907 = vrot.slane %v1893, %v1906
        %v1908 = vcombine.low %v831, %v895
        %v1909 = vcombine.high %v831, %v895
        %v1911 = vunpack.c.l.s4 1983009808
        %v1912 = vunpack.c.0.s8 %v1911
        %v1913 = vlaneseq
        %v1914 = vshrl.u32 %v1913, 7
        %v1915 = vsub.s32 %v1912, %v1914
        %v1916 = vrot.slane %v1908, %v1915
        %v1918 = vunpack.c.l.s4 1983009808
        %v1919 = vunpack.c.0.s8 %v1918
        %v1920 = vlaneseq
        %v1921 = vshrl.u32 %v1920, 7
        %v1922 = vsub.s32 %v1919, %v1921
        %v1923 = vrot.slane %v1909, %v1922
        %v1924 = vcombine.low %v1868, %v1884
        %v1925 = vcombine.high %v1868, %v1884
        %v1927 = vunpack.c.l.s4 1934713408
        %v1928 = vunpack.c.0.s8 %v1927
        %v1929 = vlaneseq
        %v1930 = vshrl.u32 %v1929, 7
        %v1931 = vsub.s32 %v1928, %v1930
        %v1932 = vrot.slane %v1924, %v1931
        %v1934 = vunpack.c.l.s4 1934713408
        %v1935 = vunpack.c.0.s8 %v1934
        %v1936 = vlaneseq
        %v1937 = vshrl.u32 %v1936, 7
        %v1938 = vsub.s32 %v1935, %v1937
        %v1939 = vrot.slane %v1925, %v1938
        %v1940 = vcombine.low %v1875, %v1891
        %v1941 = vcombine.high %v1875, %v1891
        %v1943 = vunpack.c.l.s4 1934713408
        %v1944 = vunpack.c.0.s8 %v1943
        %v1945 = vlaneseq
        %v1946 = vshrl.u32 %v1945, 7
        %v1947 = vsub.s32 %v1944, %v1946
        %v1948 = vrot.slane %v1940, %v1947
        %v1950 = vunpack.c.l.s4 1934713408
        %v1951 = vunpack.c.0.s8 %v1950
        %v1952 = vlaneseq
        %v1953 = vshrl.u32 %v1952, 7
        %v1954 = vsub.s32 %v1951, %v1953
        %v1955 = vrot.slane %v1941, %v1954
        %v1956 = vcombine.low %v1900, %v1916
        %v1957 = vcombine.high %v1900, %v1916
        %v1959 = vunpack.c.l.s4 1934713408
        %v1960 = vunpack.c.0.s8 %v1959
        %v1961 = vlaneseq
        %v1962 = vshrl.u32 %v1961, 7
        %v1963 = vsub.s32 %v1960, %v1962
        %v1964 = vrot.slane %v1956, %v1963
        %v1966 = vunpack.c.l.s4 1934713408
        %v1967 = vunpack.c.0.s8 %v1966
        %v1968 = vlaneseq
        %v1969 = vshrl.u32 %v1968, 7
        %v1970 = vsub.s32 %v1967, %v1969
        %v1971 = vrot.slane %v1957, %v1970
        %v1972 = vcombine.low %v1907, %v1923
        %v1973 = vcombine.high %v1907, %v1923
        %v1975 = vunpack.c.l.s4 1934713408
        %v1976 = vunpack.c.0.s8 %v1975
        %v1977 = vlaneseq
        %v1978 = vshrl.u32 %v1977, 7
        %v1979 = vsub.s32 %v1976, %v1978
        %v1980 = vrot.slane %v1972, %v1979
        %v1982 = vunpack.c.l.s4 1934713408
        %v1983 = vunpack.c.0.s8 %v1982
        %v1984 = vlaneseq
        %v1985 = vshrl.u32 %v1984, 7
        %v1986 = vsub.s32 %v1983, %v1985
        %v1987 = vrot.slane %v1973, %v1986
        %v1988 = vcombine.low %v1932, %v1964
        %v1989 = vcombine.high %v1932, %v1964
        %v1990 = vcombine.low %v1939, %v1971
        %v1991 = vcombine.high %v1939, %v1971
        %v1992 = vcombine.low %v1948, %v1980
        %v1993 = vcombine.high %v1948, %v1980
        %v1994 = vcombine.low %v1955, %v1987
        %v1995 = vcombine.high %v1955, %v1987
        %v1996 = vcombine.low %v416, %v480
        %v1997 = vcombine.high %v416, %v480
        %v1999 = vunpack.c.l.s4 1983009808
        %v2000 = vunpack.c.0.s8 %v1999
        %v2001 = vlaneseq
        %v2002 = vshrl.u32 %v2001, 7
        %v2003 = vsub.s32 %v2000, %v2002
        %v2004 = vrot.slane %v1996, %v2003
        %v2006 = vunpack.c.l.s4 1983009808
        %v2007 = vunpack.c.0.s8 %v2006
        %v2008 = vlaneseq
        %v2009 = vshrl.u32 %v2008, 7
        %v2010 = vsub.s32 %v2007, %v2009
        %v2011 = vrot.slane %v1997, %v2010
        %v2012 = vcombine.low %v448, %v512
        %v2013 = vcombine.high %v448, %v512
        %v2015 = vunpack.c.l.s4 1983009808
        %v2016 = vunpack.c.0.s8 %v2015
        %v2017 = vlaneseq
        %v2018 = vshrl.u32 %v2017, 7
        %v2019 = vsub.s32 %v2016, %v2018
        %v2020 = vrot.slane %v2012, %v2019
        %v2022 = vunpack.c.l.s4 1983009808
        %v2023 = vunpack.c.0.s8 %v2022
        %v2024 = vlaneseq
        %v2025 = vshrl.u32 %v2024, 7
        %v2026 = vsub.s32 %v2023, %v2025
        %v2027 = vrot.slane %v2013, %v2026
        %v2028 = vcombine.low %v544, %v608
        %v2029 = vcombine.high %v544, %v608
        %v2031 = vunpack.c.l.s4 1983009808
        %v2032 = vunpack.c.0.s8 %v2031
        %v2033 = vlaneseq
        %v2034 = vshrl.u32 %v2033, 7
        %v2035 = vsub.s32 %v2032, %v2034
        %v2036 = vrot.slane %v2028, %v2035
        %v2038 = vunpack.c.l.s4 1983009808
        %v2039 = vunpack.c.0.s8 %v2038
        %v2040 = vlaneseq
        %v2041 = vshrl.u32 %v2040, 7
        %v2042 = vsub.s32 %v2039, %v2041
        %v2043 = vrot.slane %v2029, %v2042
        %v2044 = vcombine.low %v576, %v640
        %v2045 = vcombine.high %v576, %v640
        %v2047 = vunpack.c.l.s4 1983009808
        %v2048 = vunpack.c.0.s8 %v2047
        %v2049 = vlaneseq
        %v2050 = vshrl.u32 %v2049, 7
        %v2051 = vsub.s32 %v2048, %v2050
        %v2052 = vrot.slane %v2044, %v2051
        %v2054 = vunpack.c.l.s4 1983009808
        %v2055 = vunpack.c.0.s8 %v2054
        %v2056 = vlaneseq
        %v2057 = vshrl.u32 %v2056, 7
        %v2058 = vsub.s32 %v2055, %v2057
        %v2059 = vrot.slane %v2045, %v2058
        %v2060 = vcombine.low %v2004, %v2020
        %v2061 = vcombine.high %v2004, %v2020
        %v2063 = vunpack.c.l.s4 1934713408
        %v2064 = vunpack.c.0.s8 %v2063
        %v2065 = vlaneseq
        %v2066 = vshrl.u32 %v2065, 7
        %v2067 = vsub.s32 %v2064, %v2066
        %v2068 = vrot.slane %v2060, %v2067
        %v2070 = vunpack.c.l.s4 1934713408
        %v2071 = vunpack.c.0.s8 %v2070
        %v2072 = vlaneseq
        %v2073 = vshrl.u32 %v2072, 7
        %v2074 = vsub.s32 %v2071, %v2073
        %v2075 = vrot.slane %v2061, %v2074
        %v2076 = vcombine.low %v2011, %v2027
        %v2077 = vcombine.high %v2011, %v2027
        %v2079 = vunpack.c.l.s4 1934713408
        %v2080 = vunpack.c.0.s8 %v2079
        %v2081 = vlaneseq
        %v2082 = vshrl.u32 %v2081, 7
        %v2083 = vsub.s32 %v2080, %v2082
        %v2084 = vrot.slane %v2076, %v2083
        %v2086 = vunpack.c.l.s4 1934713408
        %v2087 = vunpack.c.0.s8 %v2086
        %v2088 = vlaneseq
        %v2089 = vshrl.u32 %v2088, 7
        %v2090 = vsub.s32 %v2087, %v2089
        %v2091 = vrot.slane %v2077, %v2090
        %v2092 = vcombine.low %v2036, %v2052
        %v2093 = vcombine.high %v2036, %v2052
        %v2095 = vunpack.c.l.s4 1934713408
        %v2096 = vunpack.c.0.s8 %v2095
        %v2097 = vlaneseq
        %v2098 = vshrl.u32 %v2097, 7
        %v2099 = vsub.s32 %v2096, %v2098
        %v2100 = vrot.slane %v2092, %v2099
        %v2102 = vunpack.c.l.s4 1934713408
        %v2103 = vunpack.c.0.s8 %v2102
        %v2104 = vlaneseq
        %v2105 = vshrl.u32 %v2104, 7
        %v2106 = vsub.s32 %v2103, %v2105
        %v2107 = vrot.slane %v2093, %v2106
        %v2108 = vcombine.low %v2043, %v2059
        %v2109 = vcombine.high %v2043, %v2059
        %v2111 = vunpack.c.l.s4 1934713408
        %v2112 = vunpack.c.0.s8 %v2111
        %v2113 = vlaneseq
        %v2114 = vshrl.u32 %v2113, 7
        %v2115 = vsub.s32 %v2112, %v2114
        %v2116 = vrot.slane %v2108, %v2115
        %v2118 = vunpack.c.l.s4 1934713408
        %v2119 = vunpack.c.0.s8 %v2118
        %v2120 = vlaneseq
        %v2121 = vshrl.u32 %v2120, 7
        %v2122 = vsub.s32 %v2119, %v2121
        %v2123 = vrot.slane %v2109, %v2122
        %v2124 = vcombine.low %v2068, %v2100
        %v2125 = vcombine.high %v2068, %v2100
        %v2126 = vcombine.low %v2075, %v2107
        %v2127 = vcombine.high %v2075, %v2107
        %v2128 = vcombine.low %v2084, %v2116
        %v2129 = vcombine.high %v2084, %v2116
        %v2130 = vcombine.low %v2091, %v2123
        %v2131 = vcombine.high %v2091, %v2123
        %v2132 = vcombine.low %v672, %v736
        %v2133 = vcombine.high %v672, %v736
        %v2135 = vunpack.c.l.s4 1983009808
        %v2136 = vunpack.c.0.s8 %v2135
        %v2137 = vlaneseq
        %v2138 = vshrl.u32 %v2137, 7
        %v2139 = vsub.s32 %v2136, %v2138
        %v2140 = vrot.slane %v2132, %v2139
        %v2142 = vunpack.c.l.s4 1983009808
        %v2143 = vunpack.c.0.s8 %v2142
        %v2144 = vlaneseq
        %v2145 = vshrl.u32 %v2144, 7
        %v2146 = vsub.s32 %v2143, %v2145
        %v2147 = vrot.slane %v2133, %v2146
        %v2148 = vcombine.low %v704, %v768
        %v2149 = vcombine.high %v704, %v768
        %v2151 = vunpack.c.l.s4 1983009808
        %v2152 = vunpack.c.0.s8 %v2151
        %v2153 = vlaneseq
        %v2154 = vshrl.u32 %v2153, 7
        %v2155 = vsub.s32 %v2152, %v2154
        %v2156 = vrot.slane %v2148, %v2155
        %v2158 = vunpack.c.l.s4 1983009808
        %v2159 = vunpack.c.0.s8 %v2158
        %v2160 = vlaneseq
        %v2161 = vshrl.u32 %v2160, 7
        %v2162 = vsub.s32 %v2159, %v2161
        %v2163 = vrot.slane %v2149, %v2162
        %v2164 = vcombine.low %v800, %v864
        %v2165 = vcombine.high %v800, %v864
        %v2167 = vunpack.c.l.s4 1983009808
        %v2168 = vunpack.c.0.s8 %v2167
        %v2169 = vlaneseq
        %v2170 = vshrl.u32 %v2169, 7
        %v2171 = vsub.s32 %v2168, %v2170
        %v2172 = vrot.slane %v2164, %v2171
        %v2174 = vunpack.c.l.s4 1983009808
        %v2175 = vunpack.c.0.s8 %v2174
        %v2176 = vlaneseq
        %v2177 = vshrl.u32 %v2176, 7
        %v2178 = vsub.s32 %v2175, %v2177
        %v2179 = vrot.slane %v2165, %v2178
        %v2180 = vcombine.low %v832, %v896
        %v2181 = vcombine.high %v832, %v896
        %v2183 = vunpack.c.l.s4 1983009808
        %v2184 = vunpack.c.0.s8 %v2183
        %v2185 = vlaneseq
        %v2186 = vshrl.u32 %v2185, 7
        %v2187 = vsub.s32 %v2184, %v2186
        %v2188 = vrot.slane %v2180, %v2187
        %v2190 = vunpack.c.l.s4 1983009808
        %v2191 = vunpack.c.0.s8 %v2190
        %v2192 = vlaneseq
        %v2193 = vshrl.u32 %v2192, 7
        %v2194 = vsub.s32 %v2191, %v2193
        %v2195 = vrot.slane %v2181, %v2194
        %v2196 = vcombine.low %v2140, %v2156
        %v2197 = vcombine.high %v2140, %v2156
        %v2199 = vunpack.c.l.s4 1934713408
        %v2200 = vunpack.c.0.s8 %v2199
        %v2201 = vlaneseq
        %v2202 = vshrl.u32 %v2201, 7
        %v2203 = vsub.s32 %v2200, %v2202
        %v2204 = vrot.slane %v2196, %v2203
        %v2206 = vunpack.c.l.s4 1934713408
        %v2207 = vunpack.c.0.s8 %v2206
        %v2208 = vlaneseq
        %v2209 = vshrl.u32 %v2208, 7
        %v2210 = vsub.s32 %v2207, %v2209
        %v2211 = vrot.slane %v2197, %v2210
        %v2212 = vcombine.low %v2147, %v2163
        %v2213 = vcombine.high %v2147, %v2163
        %v2215 = vunpack.c.l.s4 1934713408
        %v2216 = vunpack.c.0.s8 %v2215
        %v2217 = vlaneseq
        %v2218 = vshrl.u32 %v2217, 7
        %v2219 = vsub.s32 %v2216, %v2218
        %v2220 = vrot.slane %v2212, %v2219
        %v2222 = vunpack.c.l.s4 1934713408
        %v2223 = vunpack.c.0.s8 %v2222
        %v2224 = vlaneseq
        %v2225 = vshrl.u32 %v2224, 7
        %v2226 = vsub.s32 %v2223, %v2225
        %v2227 = vrot.slane %v2213, %v2226
        %v2228 = vcombine.low %v2172, %v2188
        %v2229 = vcombine.high %v2172, %v2188
        %v2231 = vunpack.c.l.s4 1934713408
        %v2232 = vunpack.c.0.s8 %v2231
        %v2233 = vlaneseq
        %v2234 = vshrl.u32 %v2233, 7
        %v2235 = vsub.s32 %v2232, %v2234
        %v2236 = vrot.slane %v2228, %v2235
        %v2238 = vunpack.c.l.s4 1934713408
        %v2239 = vunpack.c.0.s8 %v2238
        %v2240 = vlaneseq
        %v2241 = vshrl.u32 %v2240, 7
        %v2242 = vsub.s32 %v2239, %v2241
        %v2243 = vrot.slane %v2229, %v2242
        %v2244 = vcombine.low %v2179, %v2195
        %v2245 = vcombine.high %v2179, %v2195
        %v2247 = vunpack.c.l.s4 1934713408
        %v2248 = vunpack.c.0.s8 %v2247
        %v2249 = vlaneseq
        %v2250 = vshrl.u32 %v2249, 7
        %v2251 = vsub.s32 %v2248, %v2250
        %v2252 = vrot.slane %v2244, %v2251
        %v2254 = vunpack.c.l.s4 1934713408
        %v2255 = vunpack.c.0.s8 %v2254
        %v2256 = vlaneseq
        %v2257 = vshrl.u32 %v2256, 7
        %v2258 = vsub.s32 %v2255, %v2257
        %v2259 = vrot.slane %v2245, %v2258
        %v2260 = vcombine.low %v2204, %v2236
        %v2261 = vcombine.high %v2204, %v2236
        %v2262 = vcombine.low %v2211, %v2243
        %v2263 = vcombine.high %v2211, %v2243
        %v2264 = vcombine.low %v2220, %v2252
        %v2265 = vcombine.high %v2220, %v2252
        %v2266 = vcombine.low %v2227, %v2259
        %v2267 = vcombine.high %v2227, %v2259
        %v2268 = vcombine.low %v417, %v481
        %v2269 = vcombine.high %v417, %v481
        %v2271 = vunpack.c.l.s4 1983009808
        %v2272 = vunpack.c.0.s8 %v2271
        %v2273 = vlaneseq
        %v2274 = vshrl.u32 %v2273, 7
        %v2275 = vsub.s32 %v2272, %v2274
        %v2276 = vrot.slane %v2268, %v2275
        %v2278 = vunpack.c.l.s4 1983009808
        %v2279 = vunpack.c.0.s8 %v2278
        %v2280 = vlaneseq
        %v2281 = vshrl.u32 %v2280, 7
        %v2282 = vsub.s32 %v2279, %v2281
        %v2283 = vrot.slane %v2269, %v2282
        %v2284 = vcombine.low %v449, %v513
        %v2285 = vcombine.high %v449, %v513
        %v2287 = vunpack.c.l.s4 1983009808
        %v2288 = vunpack.c.0.s8 %v2287
        %v2289 = vlaneseq
        %v2290 = vshrl.u32 %v2289, 7
        %v2291 = vsub.s32 %v2288, %v2290
        %v2292 = vrot.slane %v2284, %v2291
        %v2294 = vunpack.c.l.s4 1983009808
        %v2295 = vunpack.c.0.s8 %v2294
        %v2296 = vlaneseq
        %v2297 = vshrl.u32 %v2296, 7
        %v2298 = vsub.s32 %v2295, %v2297
        %v2299 = vrot.slane %v2285, %v2298
        %v2300 = vcombine.low %v545, %v609
        %v2301 = vcombine.high %v545, %v609
        %v2303 = vunpack.c.l.s4 1983009808
        %v2304 = vunpack.c.0.s8 %v2303
        %v2305 = vlaneseq
        %v2306 = vshrl.u32 %v2305, 7
        %v2307 = vsub.s32 %v2304, %v2306
        %v2308 = vrot.slane %v2300, %v2307
        %v2310 = vunpack.c.l.s4 1983009808
        %v2311 = vunpack.c.0.s8 %v2310
        %v2312 = vlaneseq
        %v2313 = vshrl.u32 %v2312, 7
        %v2314 = vsub.s32 %v2311, %v2313
        %v2315 = vrot.slane %v2301, %v2314
        %v2316 = vcombine.low %v577, %v641
        %v2317 = vcombine.high %v577, %v641
        %v2319 = vunpack.c.l.s4 1983009808
        %v2320 = vunpack.c.0.s8 %v2319
        %v2321 = vlaneseq
        %v2322 = vshrl.u32 %v2321, 7
        %v2323 = vsub.s32 %v2320, %v2322
        %v2324 = vrot.slane %v2316, %v2323
        %v2326 = vunpack.c.l.s4 1983009808
        %v2327 = vunpack.c.0.s8 %v2326
        %v2328 = vlaneseq
        %v2329 = vshrl.u32 %v2328, 7
        %v2330 = vsub.s32 %v2327, %v2329
        %v2331 = vrot.slane %v2317, %v2330
        %v2332 = vcombine.low %v2276, %v2292
        %v2333 = vcombine.high %v2276, %v2292
        %v2335 = vunpack.c.l.s4 1934713408
        %v2336 = vunpack.c.0.s8 %v2335
        %v2337 = vlaneseq
        %v2338 = vshrl.u32 %v2337, 7
        %v2339 = vsub.s32 %v2336, %v2338
        %v2340 = vrot.slane %v2332, %v2339
        %v2342 = vunpack.c.l.s4 1934713408
        %v2343 = vunpack.c.0.s8 %v2342
        %v2344 = vlaneseq
        %v2345 = vshrl.u32 %v2344, 7
        %v2346 = vsub.s32 %v2343, %v2345
        %v2347 = vrot.slane %v2333, %v2346
        %v2348 = vcombine.low %v2283, %v2299
        %v2349 = vcombine.high %v2283, %v2299
        %v2351 = vunpack.c.l.s4 1934713408
        %v2352 = vunpack.c.0.s8 %v2351
        %v2353 = vlaneseq
        %v2354 = vshrl.u32 %v2353, 7
        %v2355 = vsub.s32 %v2352, %v2354
        %v2356 = vrot.slane %v2348, %v2355
        %v2358 = vunpack.c.l.s4 1934713408
        %v2359 = vunpack.c.0.s8 %v2358
        %v2360 = vlaneseq
        %v2361 = vshrl.u32 %v2360, 7
        %v2362 = vsub.s32 %v2359, %v2361
        %v2363 = vrot.slane %v2349, %v2362
        %v2364 = vcombine.low %v2308, %v2324
        %v2365 = vcombine.high %v2308, %v2324
        %v2367 = vunpack.c.l.s4 1934713408
        %v2368 = vunpack.c.0.s8 %v2367
        %v2369 = vlaneseq
        %v2370 = vshrl.u32 %v2369, 7
        %v2371 = vsub.s32 %v2368, %v2370
        %v2372 = vrot.slane %v2364, %v2371
        %v2374 = vunpack.c.l.s4 1934713408
        %v2375 = vunpack.c.0.s8 %v2374
        %v2376 = vlaneseq
        %v2377 = vshrl.u32 %v2376, 7
        %v2378 = vsub.s32 %v2375, %v2377
        %v2379 = vrot.slane %v2365, %v2378
        %v2380 = vcombine.low %v2315, %v2331
        %v2381 = vcombine.high %v2315, %v2331
        %v2383 = vunpack.c.l.s4 1934713408
        %v2384 = vunpack.c.0.s8 %v2383
        %v2385 = vlaneseq
        %v2386 = vshrl.u32 %v2385, 7
        %v2387 = vsub.s32 %v2384, %v2386
        %v2388 = vrot.slane %v2380, %v2387
        %v2390 = vunpack.c.l.s4 1934713408
        %v2391 = vunpack.c.0.s8 %v2390
        %v2392 = vlaneseq
        %v2393 = vshrl.u32 %v2392, 7
        %v2394 = vsub.s32 %v2391, %v2393
        %v2395 = vrot.slane %v2381, %v2394
        %v2396 = vcombine.low %v2340, %v2372
        %v2397 = vcombine.high %v2340, %v2372
        %v2398 = vcombine.low %v2347, %v2379
        %v2399 = vcombine.high %v2347, %v2379
        %v2400 = vcombine.low %v2356, %v2388
        %v2401 = vcombine.high %v2356, %v2388
        %v2402 = vcombine.low %v2363, %v2395
        %v2403 = vcombine.high %v2363, %v2395
        %v2404 = vcombine.low %v673, %v737
        %v2405 = vcombine.high %v673, %v737
        %v2407 = vunpack.c.l.s4 1983009808
        %v2408 = vunpack.c.0.s8 %v2407
        %v2409 = vlaneseq
        %v2410 = vshrl.u32 %v2409, 7
        %v2411 = vsub.s32 %v2408, %v2410
        %v2412 = vrot.slane %v2404, %v2411
        %v2414 = vunpack.c.l.s4 1983009808
        %v2415 = vunpack.c.0.s8 %v2414
        %v2416 = vlaneseq
        %v2417 = vshrl.u32 %v2416, 7
        %v2418 = vsub.s32 %v2415, %v2417
        %v2419 = vrot.slane %v2405, %v2418
        %v2420 = vcombine.low %v705, %v769
        %v2421 = vcombine.high %v705, %v769
        %v2423 = vunpack.c.l.s4 1983009808
        %v2424 = vunpack.c.0.s8 %v2423
        %v2425 = vlaneseq
        %v2426 = vshrl.u32 %v2425, 7
        %v2427 = vsub.s32 %v2424, %v2426
        %v2428 = vrot.slane %v2420, %v2427
        %v2430 = vunpack.c.l.s4 1983009808
        %v2431 = vunpack.c.0.s8 %v2430
        %v2432 = vlaneseq
        %v2433 = vshrl.u32 %v2432, 7
        %v2434 = vsub.s32 %v2431, %v2433
        %v2435 = vrot.slane %v2421, %v2434
        %v2436 = vcombine.low %v801, %v865
        %v2437 = vcombine.high %v801, %v865
        %v2439 = vunpack.c.l.s4 1983009808
        %v2440 = vunpack.c.0.s8 %v2439
        %v2441 = vlaneseq
        %v2442 = vshrl.u32 %v2441, 7
        %v2443 = vsub.s32 %v2440, %v2442
        %v2444 = vrot.slane %v2436, %v2443
        %v2446 = vunpack.c.l.s4 1983009808
        %v2447 = vunpack.c.0.s8 %v2446
        %v2448 = vlaneseq
        %v2449 = vshrl.u32 %v2448, 7
        %v2450 = vsub.s32 %v2447, %v2449
        %v2451 = vrot.slane %v2437, %v2450
        %v2452 = vcombine.low %v833, %v897
        %v2453 = vcombine.high %v833, %v897
        %v2455 = vunpack.c.l.s4 1983009808
        %v2456 = vunpack.c.0.s8 %v2455
        %v2457 = vlaneseq
        %v2458 = vshrl.u32 %v2457, 7
        %v2459 = vsub.s32 %v2456, %v2458
        %v2460 = vrot.slane %v2452, %v2459
        %v2462 = vunpack.c.l.s4 1983009808
        %v2463 = vunpack.c.0.s8 %v2462
        %v2464 = vlaneseq
        %v2465 = vshrl.u32 %v2464, 7
        %v2466 = vsub.s32 %v2463, %v2465
        %v2467 = vrot.slane %v2453, %v2466
        %v2468 = vcombine.low %v2412, %v2428
        %v2469 = vcombine.high %v2412, %v2428
        %v2471 = vunpack.c.l.s4 1934713408
        %v2472 = vunpack.c.0.s8 %v2471
        %v2473 = vlaneseq
        %v2474 = vshrl.u32 %v2473, 7
        %v2475 = vsub.s32 %v2472, %v2474
        %v2476 = vrot.slane %v2468, %v2475
        %v2478 = vunpack.c.l.s4 1934713408
        %v2479 = vunpack.c.0.s8 %v2478
        %v2480 = vlaneseq
        %v2481 = vshrl.u32 %v2480, 7
        %v2482 = vsub.s32 %v2479, %v2481
        %v2483 = vrot.slane %v2469, %v2482
        %v2484 = vcombine.low %v2419, %v2435
        %v2485 = vcombine.high %v2419, %v2435
        %v2487 = vunpack.c.l.s4 1934713408
        %v2488 = vunpack.c.0.s8 %v2487
        %v2489 = vlaneseq
        %v2490 = vshrl.u32 %v2489, 7
        %v2491 = vsub.s32 %v2488, %v2490
        %v2492 = vrot.slane %v2484, %v2491
        %v2494 = vunpack.c.l.s4 1934713408
        %v2495 = vunpack.c.0.s8 %v2494
        %v2496 = vlaneseq
        %v2497 = vshrl.u32 %v2496, 7
        %v2498 = vsub.s32 %v2495, %v2497
        %v2499 = vrot.slane %v2485, %v2498
        %v2500 = vcombine.low %v2444, %v2460
        %v2501 = vcombine.high %v2444, %v2460
        %v2503 = vunpack.c.l.s4 1934713408
        %v2504 = vunpack.c.0.s8 %v2503
        %v2505 = vlaneseq
        %v2506 = vshrl.u32 %v2505, 7
        %v2507 = vsub.s32 %v2504, %v2506
        %v2508 = vrot.slane %v2500, %v2507
        %v2510 = vunpack.c.l.s4 1934713408
        %v2511 = vunpack.c.0.s8 %v2510
        %v2512 = vlaneseq
        %v2513 = vshrl.u32 %v2512, 7
        %v2514 = vsub.s32 %v2511, %v2513
        %v2515 = vrot.slane %v2501, %v2514
        %v2516 = vcombine.low %v2451, %v2467
        %v2517 = vcombine.high %v2451, %v2467
        %v2519 = vunpack.c.l.s4 1934713408
        %v2520 = vunpack.c.0.s8 %v2519
        %v2521 = vlaneseq
        %v2522 = vshrl.u32 %v2521, 7
        %v2523 = vsub.s32 %v2520, %v2522
        %v2524 = vrot.slane %v2516, %v2523
        %v2526 = vunpack.c.l.s4 1934713408
        %v2527 = vunpack.c.0.s8 %v2526
        %v2528 = vlaneseq
        %v2529 = vshrl.u32 %v2528, 7
        %v2530 = vsub.s32 %v2527, %v2529
        %v2531 = vrot.slane %v2517, %v2530
        %v2532 = vcombine.low %v2476, %v2508
        %v2533 = vcombine.high %v2476, %v2508
        %v2534 = vcombine.low %v2483, %v2515
        %v2535 = vcombine.high %v2483, %v2515
        %v2536 = vcombine.low %v2492, %v2524
        %v2537 = vcombine.high %v2492, %v2524
        %v2538 = vcombine.low %v2499, %v2531
        %v2539 = vcombine.high %v2499, %v2531
        %v2540 = vcombine.low %v418, %v482
        %v2541 = vcombine.high %v418, %v482
        %v2543 = vunpack.c.l.s4 1983009808
        %v2544 = vunpack.c.0.s8 %v2543
        %v2545 = vlaneseq
        %v2546 = vshrl.u32 %v2545, 7
        %v2547 = vsub.s32 %v2544, %v2546
        %v2548 = vrot.slane %v2540, %v2547
        %v2550 = vunpack.c.l.s4 1983009808
        %v2551 = vunpack.c.0.s8 %v2550
        %v2552 = vlaneseq
        %v2553 = vshrl.u32 %v2552, 7
        %v2554 = vsub.s32 %v2551, %v2553
        %v2555 = vrot.slane %v2541, %v2554
        %v2556 = vcombine.low %v450, %v514
        %v2557 = vcombine.high %v450, %v514
        %v2559 = vunpack.c.l.s4 1983009808
        %v2560 = vunpack.c.0.s8 %v2559
        %v2561 = vlaneseq
        %v2562 = vshrl.u32 %v2561, 7
        %v2563 = vsub.s32 %v2560, %v2562
        %v2564 = vrot.slane %v2556, %v2563
        %v2566 = vunpack.c.l.s4 1983009808
        %v2567 = vunpack.c.0.s8 %v2566
        %v2568 = vlaneseq
        %v2569 = vshrl.u32 %v2568, 7
        %v2570 = vsub.s32 %v2567, %v2569
        %v2571 = vrot.slane %v2557, %v2570
        %v2572 = vcombine.low %v546, %v610
        %v2573 = vcombine.high %v546, %v610
        %v2575 = vunpack.c.l.s4 1983009808
        %v2576 = vunpack.c.0.s8 %v2575
        %v2577 = vlaneseq
        %v2578 = vshrl.u32 %v2577, 7
        %v2579 = vsub.s32 %v2576, %v2578
        %v2580 = vrot.slane %v2572, %v2579
        %v2582 = vunpack.c.l.s4 1983009808
        %v2583 = vunpack.c.0.s8 %v2582
        %v2584 = vlaneseq
        %v2585 = vshrl.u32 %v2584, 7
        %v2586 = vsub.s32 %v2583, %v2585
        %v2587 = vrot.slane %v2573, %v2586
        %v2588 = vcombine.low %v578, %v642
        %v2589 = vcombine.high %v578, %v642
        %v2591 = vunpack.c.l.s4 1983009808
        %v2592 = vunpack.c.0.s8 %v2591
        %v2593 = vlaneseq
        %v2594 = vshrl.u32 %v2593, 7
        %v2595 = vsub.s32 %v2592, %v2594
        %v2596 = vrot.slane %v2588, %v2595
        %v2598 = vunpack.c.l.s4 1983009808
        %v2599 = vunpack.c.0.s8 %v2598
        %v2600 = vlaneseq
        %v2601 = vshrl.u32 %v2600, 7
        %v2602 = vsub.s32 %v2599, %v2601
        %v2603 = vrot.slane %v2589, %v2602
        %v2604 = vcombine.low %v2548, %v2564
        %v2605 = vcombine.high %v2548, %v2564
        %v2607 = vunpack.c.l.s4 1934713408
        %v2608 = vunpack.c.0.s8 %v2607
        %v2609 = vlaneseq
        %v2610 = vshrl.u32 %v2609, 7
        %v2611 = vsub.s32 %v2608, %v2610
        %v2612 = vrot.slane %v2604, %v2611
        %v2614 = vunpack.c.l.s4 1934713408
        %v2615 = vunpack.c.0.s8 %v2614
        %v2616 = vlaneseq
        %v2617 = vshrl.u32 %v2616, 7
        %v2618 = vsub.s32 %v2615, %v2617
        %v2619 = vrot.slane %v2605, %v2618
        %v2620 = vcombine.low %v2555, %v2571
        %v2621 = vcombine.high %v2555, %v2571
        %v2623 = vunpack.c.l.s4 1934713408
        %v2624 = vunpack.c.0.s8 %v2623
        %v2625 = vlaneseq
        %v2626 = vshrl.u32 %v2625, 7
        %v2627 = vsub.s32 %v2624, %v2626
        %v2628 = vrot.slane %v2620, %v2627
        %v2630 = vunpack.c.l.s4 1934713408
        %v2631 = vunpack.c.0.s8 %v2630
        %v2632 = vlaneseq
        %v2633 = vshrl.u32 %v2632, 7
        %v2634 = vsub.s32 %v2631, %v2633
        %v2635 = vrot.slane %v2621, %v2634
        %v2636 = vcombine.low %v2580, %v2596
        %v2637 = vcombine.high %v2580, %v2596
        %v2639 = vunpack.c.l.s4 1934713408
        %v2640 = vunpack.c.0.s8 %v2639
        %v2641 = vlaneseq
        %v2642 = vshrl.u32 %v2641, 7
        %v2643 = vsub.s32 %v2640, %v2642
        %v2644 = vrot.slane %v2636, %v2643
        %v2646 = vunpack.c.l.s4 1934713408
        %v2647 = vunpack.c.0.s8 %v2646
        %v2648 = vlaneseq
        %v2649 = vshrl.u32 %v2648, 7
        %v2650 = vsub.s32 %v2647, %v2649
        %v2651 = vrot.slane %v2637, %v2650
        %v2652 = vcombine.low %v2587, %v2603
        %v2653 = vcombine.high %v2587, %v2603
        %v2655 = vunpack.c.l.s4 1934713408
        %v2656 = vunpack.c.0.s8 %v2655
        %v2657 = vlaneseq
        %v2658 = vshrl.u32 %v2657, 7
        %v2659 = vsub.s32 %v2656, %v2658
        %v2660 = vrot.slane %v2652, %v2659
        %v2662 = vunpack.c.l.s4 1934713408
        %v2663 = vunpack.c.0.s8 %v2662
        %v2664 = vlaneseq
        %v2665 = vshrl.u32 %v2664, 7
        %v2666 = vsub.s32 %v2663, %v2665
        %v2667 = vrot.slane %v2653, %v2666
        %v2668 = vcombine.low %v2612, %v2644
        %v2669 = vcombine.high %v2612, %v2644
        %v2670 = vcombine.low %v2619, %v2651
        %v2671 = vcombine.high %v2619, %v2651
        %v2672 = vcombine.low %v2628, %v2660
        %v2673 = vcombine.high %v2628, %v2660
        %v2674 = vcombine.low %v2635, %v2667
        %v2675 = vcombine.high %v2635, %v2667
        %v2676 = vcombine.low %v674, %v738
        %v2677 = vcombine.high %v674, %v738
        %v2679 = vunpack.c.l.s4 1983009808
        %v2680 = vunpack.c.0.s8 %v2679
        %v2681 = vlaneseq
        %v2682 = vshrl.u32 %v2681, 7
        %v2683 = vsub.s32 %v2680, %v2682
        %v2684 = vrot.slane %v2676, %v2683
        %v2686 = vunpack.c.l.s4 1983009808
        %v2687 = vunpack.c.0.s8 %v2686
        %v2688 = vlaneseq
        %v2689 = vshrl.u32 %v2688, 7
        %v2690 = vsub.s32 %v2687, %v2689
        %v2691 = vrot.slane %v2677, %v2690
        %v2692 = vcombine.low %v706, %v770
        %v2693 = vcombine.high %v706, %v770
        %v2695 = vunpack.c.l.s4 1983009808
        %v2696 = vunpack.c.0.s8 %v2695
        %v2697 = vlaneseq
        %v2698 = vshrl.u32 %v2697, 7
        %v2699 = vsub.s32 %v2696, %v2698
        %v2700 = vrot.slane %v2692, %v2699
        %v2702 = vunpack.c.l.s4 1983009808
        %v2703 = vunpack.c.0.s8 %v2702
        %v2704 = vlaneseq
        %v2705 = vshrl.u32 %v2704, 7
        %v2706 = vsub.s32 %v2703, %v2705
        %v2707 = vrot.slane %v2693, %v2706
        %v2708 = vcombine.low %v802, %v866
        %v2709 = vcombine.high %v802, %v866
        %v2711 = vunpack.c.l.s4 1983009808
        %v2712 = vunpack.c.0.s8 %v2711
        %v2713 = vlaneseq
        %v2714 = vshrl.u32 %v2713, 7
        %v2715 = vsub.s32 %v2712, %v2714
        %v2716 = vrot.slane %v2708, %v2715
        %v2718 = vunpack.c.l.s4 1983009808
        %v2719 = vunpack.c.0.s8 %v2718
        %v2720 = vlaneseq
        %v2721 = vshrl.u32 %v2720, 7
        %v2722 = vsub.s32 %v2719, %v2721
        %v2723 = vrot.slane %v2709, %v2722
        %v2724 = vcombine.low %v834, %v898
        %v2725 = vcombine.high %v834, %v898
        %v2727 = vunpack.c.l.s4 1983009808
        %v2728 = vunpack.c.0.s8 %v2727
        %v2729 = vlaneseq
        %v2730 = vshrl.u32 %v2729, 7
        %v2731 = vsub.s32 %v2728, %v2730
        %v2732 = vrot.slane %v2724, %v2731
        %v2734 = vunpack.c.l.s4 1983009808
        %v2735 = vunpack.c.0.s8 %v2734
        %v2736 = vlaneseq
        %v2737 = vshrl.u32 %v2736, 7
        %v2738 = vsub.s32 %v2735, %v2737
        %v2739 = vrot.slane %v2725, %v2738
        %v2740 = vcombine.low %v2684, %v2700
        %v2741 = vcombine.high %v2684, %v2700
        %v2743 = vunpack.c.l.s4 1934713408
        %v2744 = vunpack.c.0.s8 %v2743
        %v2745 = vlaneseq
        %v2746 = vshrl.u32 %v2745, 7
        %v2747 = vsub.s32 %v2744, %v2746
        %v2748 = vrot.slane %v2740, %v2747
        %v2750 = vunpack.c.l.s4 1934713408
        %v2751 = vunpack.c.0.s8 %v2750
        %v2752 = vlaneseq
        %v2753 = vshrl.u32 %v2752, 7
        %v2754 = vsub.s32 %v2751, %v2753
        %v2755 = vrot.slane %v2741, %v2754
        %v2756 = vcombine.low %v2691, %v2707
        %v2757 = vcombine.high %v2691, %v2707
        %v2759 = vunpack.c.l.s4 1934713408
        %v2760 = vunpack.c.0.s8 %v2759
        %v2761 = vlaneseq
        %v2762 = vshrl.u32 %v2761, 7
        %v2763 = vsub.s32 %v2760, %v2762
        %v2764 = vrot.slane %v2756, %v2763
        %v2766 = vunpack.c.l.s4 1934713408
        %v2767 = vunpack.c.0.s8 %v2766
        %v2768 = vlaneseq
        %v2769 = vshrl.u32 %v2768, 7
        %v2770 = vsub.s32 %v2767, %v2769
        %v2771 = vrot.slane %v2757, %v2770
        %v2772 = vcombine.low %v2716, %v2732
        %v2773 = vcombine.high %v2716, %v2732
        %v2775 = vunpack.c.l.s4 1934713408
        %v2776 = vunpack.c.0.s8 %v2775
        %v2777 = vlaneseq
        %v2778 = vshrl.u32 %v2777, 7
        %v2779 = vsub.s32 %v2776, %v2778
        %v2780 = vrot.slane %v2772, %v2779
        %v2782 = vunpack.c.l.s4 1934713408
        %v2783 = vunpack.c.0.s8 %v2782
        %v2784 = vlaneseq
        %v2785 = vshrl.u32 %v2784, 7
        %v2786 = vsub.s32 %v2783, %v2785
        %v2787 = vrot.slane %v2773, %v2786
        %v2788 = vcombine.low %v2723, %v2739
        %v2789 = vcombine.high %v2723, %v2739
        %v2791 = vunpack.c.l.s4 1934713408
        %v2792 = vunpack.c.0.s8 %v2791
        %v2793 = vlaneseq
        %v2794 = vshrl.u32 %v2793, 7
        %v2795 = vsub.s32 %v2792, %v2794
        %v2796 = vrot.slane %v2788, %v2795
        %v2798 = vunpack.c.l.s4 1934713408
        %v2799 = vunpack.c.0.s8 %v2798
        %v2800 = vlaneseq
        %v2801 = vshrl.u32 %v2800, 7
        %v2802 = vsub.s32 %v2799, %v2801
        %v2803 = vrot.slane %v2789, %v2802
        %v2804 = vcombine.low %v2748, %v2780
        %v2805 = vcombine.high %v2748, %v2780
        %v2806 = vcombine.low %v2755, %v2787
        %v2807 = vcombine.high %v2755, %v2787
        %v2808 = vcombine.low %v2764, %v2796
        %v2809 = vcombine.high %v2764, %v2796
        %v2810 = vcombine.low %v2771, %v2803
        %v2811 = vcombine.high %v2771, %v2803
        %v2812 = vcombine.low %v419, %v483
        %v2813 = vcombine.high %v419, %v483
        %v2815 = vunpack.c.l.s4 1983009808
        %v2816 = vunpack.c.0.s8 %v2815
        %v2817 = vlaneseq
        %v2818 = vshrl.u32 %v2817, 7
        %v2819 = vsub.s32 %v2816, %v2818
        %v2820 = vrot.slane %v2812, %v2819
        %v2822 = vunpack.c.l.s4 1983009808
        %v2823 = vunpack.c.0.s8 %v2822
        %v2824 = vlaneseq
        %v2825 = vshrl.u32 %v2824, 7
        %v2826 = vsub.s32 %v2823, %v2825
        %v2827 = vrot.slane %v2813, %v2826
        %v2828 = vcombine.low %v451, %v515
        %v2829 = vcombine.high %v451, %v515
        %v2831 = vunpack.c.l.s4 1983009808
        %v2832 = vunpack.c.0.s8 %v2831
        %v2833 = vlaneseq
        %v2834 = vshrl.u32 %v2833, 7
        %v2835 = vsub.s32 %v2832, %v2834
        %v2836 = vrot.slane %v2828, %v2835
        %v2838 = vunpack.c.l.s4 1983009808
        %v2839 = vunpack.c.0.s8 %v2838
        %v2840 = vlaneseq
        %v2841 = vshrl.u32 %v2840, 7
        %v2842 = vsub.s32 %v2839, %v2841
        %v2843 = vrot.slane %v2829, %v2842
        %v2844 = vcombine.low %v547, %v611
        %v2845 = vcombine.high %v547, %v611
        %v2847 = vunpack.c.l.s4 1983009808
        %v2848 = vunpack.c.0.s8 %v2847
        %v2849 = vlaneseq
        %v2850 = vshrl.u32 %v2849, 7
        %v2851 = vsub.s32 %v2848, %v2850
        %v2852 = vrot.slane %v2844, %v2851
        %v2854 = vunpack.c.l.s4 1983009808
        %v2855 = vunpack.c.0.s8 %v2854
        %v2856 = vlaneseq
        %v2857 = vshrl.u32 %v2856, 7
        %v2858 = vsub.s32 %v2855, %v2857
        %v2859 = vrot.slane %v2845, %v2858
        %v2860 = vcombine.low %v579, %v643
        %v2861 = vcombine.high %v579, %v643
        %v2863 = vunpack.c.l.s4 1983009808
        %v2864 = vunpack.c.0.s8 %v2863
        %v2865 = vlaneseq
        %v2866 = vshrl.u32 %v2865, 7
        %v2867 = vsub.s32 %v2864, %v2866
        %v2868 = vrot.slane %v2860, %v2867
        %v2870 = vunpack.c.l.s4 1983009808
        %v2871 = vunpack.c.0.s8 %v2870
        %v2872 = vlaneseq
        %v2873 = vshrl.u32 %v2872, 7
        %v2874 = vsub.s32 %v2871, %v2873
        %v2875 = vrot.slane %v2861, %v2874
        %v2876 = vcombine.low %v2820, %v2836
        %v2877 = vcombine.high %v2820, %v2836
        %v2879 = vunpack.c.l.s4 1934713408
        %v2880 = vunpack.c.0.s8 %v2879
        %v2881 = vlaneseq
        %v2882 = vshrl.u32 %v2881, 7
        %v2883 = vsub.s32 %v2880, %v2882
        %v2884 = vrot.slane %v2876, %v2883
        %v2886 = vunpack.c.l.s4 1934713408
        %v2887 = vunpack.c.0.s8 %v2886
        %v2888 = vlaneseq
        %v2889 = vshrl.u32 %v2888, 7
        %v2890 = vsub.s32 %v2887, %v2889
        %v2891 = vrot.slane %v2877, %v2890
        %v2892 = vcombine.low %v2827, %v2843
        %v2893 = vcombine.high %v2827, %v2843
        %v2895 = vunpack.c.l.s4 1934713408
        %v2896 = vunpack.c.0.s8 %v2895
        %v2897 = vlaneseq
        %v2898 = vshrl.u32 %v2897, 7
        %v2899 = vsub.s32 %v2896, %v2898
        %v2900 = vrot.slane %v2892, %v2899
        %v2902 = vunpack.c.l.s4 1934713408
        %v2903 = vunpack.c.0.s8 %v2902
        %v2904 = vlaneseq
        %v2905 = vshrl.u32 %v2904, 7
        %v2906 = vsub.s32 %v2903, %v2905
        %v2907 = vrot.slane %v2893, %v2906
        %v2908 = vcombine.low %v2852, %v2868
        %v2909 = vcombine.high %v2852, %v2868
        %v2911 = vunpack.c.l.s4 1934713408
        %v2912 = vunpack.c.0.s8 %v2911
        %v2913 = vlaneseq
        %v2914 = vshrl.u32 %v2913, 7
        %v2915 = vsub.s32 %v2912, %v2914
        %v2916 = vrot.slane %v2908, %v2915
        %v2918 = vunpack.c.l.s4 1934713408
        %v2919 = vunpack.c.0.s8 %v2918
        %v2920 = vlaneseq
        %v2921 = vshrl.u32 %v2920, 7
        %v2922 = vsub.s32 %v2919, %v2921
        %v2923 = vrot.slane %v2909, %v2922
        %v2924 = vcombine.low %v2859, %v2875
        %v2925 = vcombine.high %v2859, %v2875
        %v2927 = vunpack.c.l.s4 1934713408
        %v2928 = vunpack.c.0.s8 %v2927
        %v2929 = vlaneseq
        %v2930 = vshrl.u32 %v2929, 7
        %v2931 = vsub.s32 %v2928, %v2930
        %v2932 = vrot.slane %v2924, %v2931
        %v2934 = vunpack.c.l.s4 1934713408
        %v2935 = vunpack.c.0.s8 %v2934
        %v2936 = vlaneseq
        %v2937 = vshrl.u32 %v2936, 7
        %v2938 = vsub.s32 %v2935, %v2937
        %v2939 = vrot.slane %v2925, %v2938
        %v2940 = vcombine.low %v2884, %v2916
        %v2941 = vcombine.high %v2884, %v2916
        %v2942 = vcombine.low %v2891, %v2923
        %v2943 = vcombine.high %v2891, %v2923
        %v2944 = vcombine.low %v2900, %v2932
        %v2945 = vcombine.high %v2900, %v2932
        %v2946 = vcombine.low %v2907, %v2939
        %v2947 = vcombine.high %v2907, %v2939
        %v2948 = vcombine.low %v675, %v739
        %v2949 = vcombine.high %v675, %v739
        %v2951 = vunpack.c.l.s4 1983009808
        %v2952 = vunpack.c.0.s8 %v2951
        %v2953 = vlaneseq
        %v2954 = vshrl.u32 %v2953, 7
        %v2955 = vsub.s32 %v2952, %v2954
        %v2956 = vrot.slane %v2948, %v2955
        %v2958 = vunpack.c.l.s4 1983009808
        %v2959 = vunpack.c.0.s8 %v2958
        %v2960 = vlaneseq
        %v2961 = vshrl.u32 %v2960, 7
        %v2962 = vsub.s32 %v2959, %v2961
        %v2963 = vrot.slane %v2949, %v2962
        %v2964 = vcombine.low %v707, %v771
        %v2965 = vcombine.high %v707, %v771
        %v2967 = vunpack.c.l.s4 1983009808
        %v2968 = vunpack.c.0.s8 %v2967
        %v2969 = vlaneseq
        %v2970 = vshrl.u32 %v2969, 7
        %v2971 = vsub.s32 %v2968, %v2970
        %v2972 = vrot.slane %v2964, %v2971
        %v2974 = vunpack.c.l.s4 1983009808
        %v2975 = vunpack.c.0.s8 %v2974
        %v2976 = vlaneseq
        %v2977 = vshrl.u32 %v2976, 7
        %v2978 = vsub.s32 %v2975, %v2977
        %v2979 = vrot.slane %v2965, %v2978
        %v2980 = vcombine.low %v803, %v867
        %v2981 = vcombine.high %v803, %v867
        %v2983 = vunpack.c.l.s4 1983009808
        %v2984 = vunpack.c.0.s8 %v2983
        %v2985 = vlaneseq
        %v2986 = vshrl.u32 %v2985, 7
        %v2987 = vsub.s32 %v2984, %v2986
        %v2988 = vrot.slane %v2980, %v2987
        %v2990 = vunpack.c.l.s4 1983009808
        %v2991 = vunpack.c.0.s8 %v2990
        %v2992 = vlaneseq
        %v2993 = vshrl.u32 %v2992, 7
        %v2994 = vsub.s32 %v2991, %v2993
        %v2995 = vrot.slane %v2981, %v2994
        %v2996 = vcombine.low %v835, %v899
        %v2997 = vcombine.high %v835, %v899
        %v2999 = vunpack.c.l.s4 1983009808
        %v3000 = vunpack.c.0.s8 %v2999
        %v3001 = vlaneseq
        %v3002 = vshrl.u32 %v3001, 7
        %v3003 = vsub.s32 %v3000, %v3002
        %v3004 = vrot.slane %v2996, %v3003
        %v3006 = vunpack.c.l.s4 1983009808
        %v3007 = vunpack.c.0.s8 %v3006
        %v3008 = vlaneseq
        %v3009 = vshrl.u32 %v3008, 7
        %v3010 = vsub.s32 %v3007, %v3009
        %v3011 = vrot.slane %v2997, %v3010
        %v3012 = vcombine.low %v2956, %v2972
        %v3013 = vcombine.high %v2956, %v2972
        %v3015 = vunpack.c.l.s4 1934713408
        %v3016 = vunpack.c.0.s8 %v3015
        %v3017 = vlaneseq
        %v3018 = vshrl.u32 %v3017, 7
        %v3019 = vsub.s32 %v3016, %v3018
        %v3020 = vrot.slane %v3012, %v3019
        %v3022 = vunpack.c.l.s4 1934713408
        %v3023 = vunpack.c.0.s8 %v3022
        %v3024 = vlaneseq
        %v3025 = vshrl.u32 %v3024, 7
        %v3026 = vsub.s32 %v3023, %v3025
        %v3027 = vrot.slane %v3013, %v3026
        %v3028 = vcombine.low %v2963, %v2979
        %v3029 = vcombine.high %v2963, %v2979
        %v3031 = vunpack.c.l.s4 1934713408
        %v3032 = vunpack.c.0.s8 %v3031
        %v3033 = vlaneseq
        %v3034 = vshrl.u32 %v3033, 7
        %v3035 = vsub.s32 %v3032, %v3034
        %v3036 = vrot.slane %v3028, %v3035
        %v3038 = vunpack.c.l.s4 1934713408
        %v3039 = vunpack.c.0.s8 %v3038
        %v3040 = vlaneseq
        %v3041 = vshrl.u32 %v3040, 7
        %v3042 = vsub.s32 %v3039, %v3041
        %v3043 = vrot.slane %v3029, %v3042
        %v3044 = vcombine.low %v2988, %v3004
        %v3045 = vcombine.high %v2988, %v3004
        %v3047 = vunpack.c.l.s4 1934713408
        %v3048 = vunpack.c.0.s8 %v3047
        %v3049 = vlaneseq
        %v3050 = vshrl.u32 %v3049, 7
        %v3051 = vsub.s32 %v3048, %v3050
        %v3052 = vrot.slane %v3044, %v3051
        %v3054 = vunpack.c.l.s4 1934713408
        %v3055 = vunpack.c.0.s8 %v3054
        %v3056 = vlaneseq
        %v3057 = vshrl.u32 %v3056, 7
        %v3058 = vsub.s32 %v3055, %v3057
        %v3059 = vrot.slane %v3045, %v3058
        %v3060 = vcombine.low %v2995, %v3011
        %v3061 = vcombine.high %v2995, %v3011
        %v3063 = vunpack.c.l.s4 1934713408
        %v3064 = vunpack.c.0.s8 %v3063
        %v3065 = vlaneseq
        %v3066 = vshrl.u32 %v3065, 7
        %v3067 = vsub.s32 %v3064, %v3066
        %v3068 = vrot.slane %v3060, %v3067
        %v3070 = vunpack.c.l.s4 1934713408
        %v3071 = vunpack.c.0.s8 %v3070
        %v3072 = vlaneseq
        %v3073 = vshrl.u32 %v3072, 7
        %v3074 = vsub.s32 %v3071, %v3073
        %v3075 = vrot.slane %v3061, %v3074
        %v3076 = vcombine.low %v3020, %v3052
        %v3077 = vcombine.high %v3020, %v3052
        %v3078 = vcombine.low %v3027, %v3059
        %v3079 = vcombine.high %v3027, %v3059
        %v3080 = vcombine.low %v3036, %v3068
        %v3081 = vcombine.high %v3036, %v3068
        %v3082 = vcombine.low %v3043, %v3075
        %v3083 = vcombine.high %v3043, %v3075
        %v3084 = vcombine.low %v420, %v484
        %v3085 = vcombine.high %v420, %v484
        %v3087 = vunpack.c.l.s4 1983009808
        %v3088 = vunpack.c.0.s8 %v3087
        %v3089 = vlaneseq
        %v3090 = vshrl.u32 %v3089, 7
        %v3091 = vsub.s32 %v3088, %v3090
        %v3092 = vrot.slane %v3084, %v3091
        %v3094 = vunpack.c.l.s4 1983009808
        %v3095 = vunpack.c.0.s8 %v3094
        %v3096 = vlaneseq
        %v3097 = vshrl.u32 %v3096, 7
        %v3098 = vsub.s32 %v3095, %v3097
        %v3099 = vrot.slane %v3085, %v3098
        %v3100 = vcombine.low %v452, %v516
        %v3101 = vcombine.high %v452, %v516
        %v3103 = vunpack.c.l.s4 1983009808
        %v3104 = vunpack.c.0.s8 %v3103
        %v3105 = vlaneseq
        %v3106 = vshrl.u32 %v3105, 7
        %v3107 = vsub.s32 %v3104, %v3106
        %v3108 = vrot.slane %v3100, %v3107
        %v3110 = vunpack.c.l.s4 1983009808
        %v3111 = vunpack.c.0.s8 %v3110
        %v3112 = vlaneseq
        %v3113 = vshrl.u32 %v3112, 7
        %v3114 = vsub.s32 %v3111, %v3113
        %v3115 = vrot.slane %v3101, %v3114
        %v3116 = vcombine.low %v548, %v612
        %v3117 = vcombine.high %v548, %v612
        %v3119 = vunpack.c.l.s4 1983009808
        %v3120 = vunpack.c.0.s8 %v3119
        %v3121 = vlaneseq
        %v3122 = vshrl.u32 %v3121, 7
        %v3123 = vsub.s32 %v3120, %v3122
        %v3124 = vrot.slane %v3116, %v3123
        %v3126 = vunpack.c.l.s4 1983009808
        %v3127 = vunpack.c.0.s8 %v3126
        %v3128 = vlaneseq
        %v3129 = vshrl.u32 %v3128, 7
        %v3130 = vsub.s32 %v3127, %v3129
        %v3131 = vrot.slane %v3117, %v3130
        %v3132 = vcombine.low %v580, %v644
        %v3133 = vcombine.high %v580, %v644
        %v3135 = vunpack.c.l.s4 1983009808
        %v3136 = vunpack.c.0.s8 %v3135
        %v3137 = vlaneseq
        %v3138 = vshrl.u32 %v3137, 7
        %v3139 = vsub.s32 %v3136, %v3138
        %v3140 = vrot.slane %v3132, %v3139
        %v3142 = vunpack.c.l.s4 1983009808
        %v3143 = vunpack.c.0.s8 %v3142
        %v3144 = vlaneseq
        %v3145 = vshrl.u32 %v3144, 7
        %v3146 = vsub.s32 %v3143, %v3145
        %v3147 = vrot.slane %v3133, %v3146
        %v3148 = vcombine.low %v3092, %v3108
        %v3149 = vcombine.high %v3092, %v3108
        %v3151 = vunpack.c.l.s4 1934713408
        %v3152 = vunpack.c.0.s8 %v3151
        %v3153 = vlaneseq
        %v3154 = vshrl.u32 %v3153, 7
        %v3155 = vsub.s32 %v3152, %v3154
        %v3156 = vrot.slane %v3148, %v3155
        %v3158 = vunpack.c.l.s4 1934713408
        %v3159 = vunpack.c.0.s8 %v3158
        %v3160 = vlaneseq
        %v3161 = vshrl.u32 %v3160, 7
        %v3162 = vsub.s32 %v3159, %v3161
        %v3163 = vrot.slane %v3149, %v3162
        %v3164 = vcombine.low %v3099, %v3115
        %v3165 = vcombine.high %v3099, %v3115
        %v3167 = vunpack.c.l.s4 1934713408
        %v3168 = vunpack.c.0.s8 %v3167
        %v3169 = vlaneseq
        %v3170 = vshrl.u32 %v3169, 7
        %v3171 = vsub.s32 %v3168, %v3170
        %v3172 = vrot.slane %v3164, %v3171
        %v3174 = vunpack.c.l.s4 1934713408
        %v3175 = vunpack.c.0.s8 %v3174
        %v3176 = vlaneseq
        %v3177 = vshrl.u32 %v3176, 7
        %v3178 = vsub.s32 %v3175, %v3177
        %v3179 = vrot.slane %v3165, %v3178
        %v3180 = vcombine.low %v3124, %v3140
        %v3181 = vcombine.high %v3124, %v3140
        %v3183 = vunpack.c.l.s4 1934713408
        %v3184 = vunpack.c.0.s8 %v3183
        %v3185 = vlaneseq
        %v3186 = vshrl.u32 %v3185, 7
        %v3187 = vsub.s32 %v3184, %v3186
        %v3188 = vrot.slane %v3180, %v3187
        %v3190 = vunpack.c.l.s4 1934713408
        %v3191 = vunpack.c.0.s8 %v3190
        %v3192 = vlaneseq
        %v3193 = vshrl.u32 %v3192, 7
        %v3194 = vsub.s32 %v3191, %v3193
        %v3195 = vrot.slane %v3181, %v3194
        %v3196 = vcombine.low %v3131, %v3147
        %v3197 = vcombine.high %v3131, %v3147
        %v3199 = vunpack.c.l.s4 1934713408
        %v3200 = vunpack.c.0.s8 %v3199
        %v3201 = vlaneseq
        %v3202 = vshrl.u32 %v3201, 7
        %v3203 = vsub.s32 %v3200, %v3202
        %v3204 = vrot.slane %v3196, %v3203
        %v3206 = vunpack.c.l.s4 1934713408
        %v3207 = vunpack.c.0.s8 %v3206
        %v3208 = vlaneseq
        %v3209 = vshrl.u32 %v3208, 7
        %v3210 = vsub.s32 %v3207, %v3209
        %v3211 = vrot.slane %v3197, %v3210
        %v3212 = vcombine.low %v3156, %v3188
        %v3213 = vcombine.high %v3156, %v3188
        %v3214 = vcombine.low %v3163, %v3195
        %v3215 = vcombine.high %v3163, %v3195
        %v3216 = vcombine.low %v3172, %v3204
        %v3217 = vcombine.high %v3172, %v3204
        %v3218 = vcombine.low %v3179, %v3211
        %v3219 = vcombine.high %v3179, %v3211
        %v3220 = vcombine.low %v676, %v740
        %v3221 = vcombine.high %v676, %v740
        %v3223 = vunpack.c.l.s4 1983009808
        %v3224 = vunpack.c.0.s8 %v3223
        %v3225 = vlaneseq
        %v3226 = vshrl.u32 %v3225, 7
        %v3227 = vsub.s32 %v3224, %v3226
        %v3228 = vrot.slane %v3220, %v3227
        %v3230 = vunpack.c.l.s4 1983009808
        %v3231 = vunpack.c.0.s8 %v3230
        %v3232 = vlaneseq
        %v3233 = vshrl.u32 %v3232, 7
        %v3234 = vsub.s32 %v3231, %v3233
        %v3235 = vrot.slane %v3221, %v3234
        %v3236 = vcombine.low %v708, %v772
        %v3237 = vcombine.high %v708, %v772
        %v3239 = vunpack.c.l.s4 1983009808
        %v3240 = vunpack.c.0.s8 %v3239
        %v3241 = vlaneseq
        %v3242 = vshrl.u32 %v3241, 7
        %v3243 = vsub.s32 %v3240, %v3242
        %v3244 = vrot.slane %v3236, %v3243
        %v3246 = vunpack.c.l.s4 1983009808
        %v3247 = vunpack.c.0.s8 %v3246
        %v3248 = vlaneseq
        %v3249 = vshrl.u32 %v3248, 7
        %v3250 = vsub.s32 %v3247, %v3249
        %v3251 = vrot.slane %v3237, %v3250
        %v3252 = vcombine.low %v804, %v868
        %v3253 = vcombine.high %v804, %v868
        %v3255 = vunpack.c.l.s4 1983009808
        %v3256 = vunpack.c.0.s8 %v3255
        %v3257 = vlaneseq
        %v3258 = vshrl.u32 %v3257, 7
        %v3259 = vsub.s32 %v3256, %v3258
        %v3260 = vrot.slane %v3252, %v3259
        %v3262 = vunpack.c.l.s4 1983009808
        %v3263 = vunpack.c.0.s8 %v3262
        %v3264 = vlaneseq
        %v3265 = vshrl.u32 %v3264, 7
        %v3266 = vsub.s32 %v3263, %v3265
        %v3267 = vrot.slane %v3253, %v3266
        %v3268 = vcombine.low %v836, %v900
        %v3269 = vcombine.high %v836, %v900
        %v3271 = vunpack.c.l.s4 1983009808
        %v3272 = vunpack.c.0.s8 %v3271
        %v3273 = vlaneseq
        %v3274 = vshrl.u32 %v3273, 7
        %v3275 = vsub.s32 %v3272, %v3274
        %v3276 = vrot.slane %v3268, %v3275
        %v3278 = vunpack.c.l.s4 1983009808
        %v3279 = vunpack.c.0.s8 %v3278
        %v3280 = vlaneseq
        %v3281 = vshrl.u32 %v3280, 7
        %v3282 = vsub.s32 %v3279, %v3281
        %v3283 = vrot.slane %v3269, %v3282
        %v3284 = vcombine.low %v3228, %v3244
        %v3285 = vcombine.high %v3228, %v3244
        %v3287 = vunpack.c.l.s4 1934713408
        %v3288 = vunpack.c.0.s8 %v3287
        %v3289 = vlaneseq
        %v3290 = vshrl.u32 %v3289, 7
        %v3291 = vsub.s32 %v3288, %v3290
        %v3292 = vrot.slane %v3284, %v3291
        %v3294 = vunpack.c.l.s4 1934713408
        %v3295 = vunpack.c.0.s8 %v3294
        %v3296 = vlaneseq
        %v3297 = vshrl.u32 %v3296, 7
        %v3298 = vsub.s32 %v3295, %v3297
        %v3299 = vrot.slane %v3285, %v3298
        %v3300 = vcombine.low %v3235, %v3251
        %v3301 = vcombine.high %v3235, %v3251
        %v3303 = vunpack.c.l.s4 1934713408
        %v3304 = vunpack.c.0.s8 %v3303
        %v3305 = vlaneseq
        %v3306 = vshrl.u32 %v3305, 7
        %v3307 = vsub.s32 %v3304, %v3306
        %v3308 = vrot.slane %v3300, %v3307
        %v3310 = vunpack.c.l.s4 1934713408
        %v3311 = vunpack.c.0.s8 %v3310
        %v3312 = vlaneseq
        %v3313 = vshrl.u32 %v3312, 7
        %v3314 = vsub.s32 %v3311, %v3313
        %v3315 = vrot.slane %v3301, %v3314
        %v3316 = vcombine.low %v3260, %v3276
        %v3317 = vcombine.high %v3260, %v3276
        %v3319 = vunpack.c.l.s4 1934713408
        %v3320 = vunpack.c.0.s8 %v3319
        %v3321 = vlaneseq
        %v3322 = vshrl.u32 %v3321, 7
        %v3323 = vsub.s32 %v3320, %v3322
        %v3324 = vrot.slane %v3316, %v3323
        %v3326 = vunpack.c.l.s4 1934713408
        %v3327 = vunpack.c.0.s8 %v3326
        %v3328 = vlaneseq
        %v3329 = vshrl.u32 %v3328, 7
        %v3330 = vsub.s32 %v3327, %v3329
        %v3331 = vrot.slane %v3317, %v3330
        %v3332 = vcombine.low %v3267, %v3283
        %v3333 = vcombine.high %v3267, %v3283
        %v3335 = vunpack.c.l.s4 1934713408
        %v3336 = vunpack.c.0.s8 %v3335
        %v3337 = vlaneseq
        %v3338 = vshrl.u32 %v3337, 7
        %v3339 = vsub.s32 %v3336, %v3338
        %v3340 = vrot.slane %v3332, %v3339
        %v3342 = vunpack.c.l.s4 1934713408
        %v3343 = vunpack.c.0.s8 %v3342
        %v3344 = vlaneseq
        %v3345 = vshrl.u32 %v3344, 7
        %v3346 = vsub.s32 %v3343, %v3345
        %v3347 = vrot.slane %v3333, %v3346
        %v3348 = vcombine.low %v3292, %v3324
        %v3349 = vcombine.high %v3292, %v3324
        %v3350 = vcombine.low %v3299, %v3331
        %v3351 = vcombine.high %v3299, %v3331
        %v3352 = vcombine.low %v3308, %v3340
        %v3353 = vcombine.high %v3308, %v3340
        %v3354 = vcombine.low %v3315, %v3347
        %v3355 = vcombine.high %v3315, %v3347
        %v3356 = vcombine.low %v421, %v485
        %v3357 = vcombine.high %v421, %v485
        %v3359 = vunpack.c.l.s4 1983009808
        %v3360 = vunpack.c.0.s8 %v3359
        %v3361 = vlaneseq
        %v3362 = vshrl.u32 %v3361, 7
        %v3363 = vsub.s32 %v3360, %v3362
        %v3364 = vrot.slane %v3356, %v3363
        %v3366 = vunpack.c.l.s4 1983009808
        %v3367 = vunpack.c.0.s8 %v3366
        %v3368 = vlaneseq
        %v3369 = vshrl.u32 %v3368, 7
        %v3370 = vsub.s32 %v3367, %v3369
        %v3371 = vrot.slane %v3357, %v3370
        %v3372 = vcombine.low %v453, %v517
        %v3373 = vcombine.high %v453, %v517
        %v3375 = vunpack.c.l.s4 1983009808
        %v3376 = vunpack.c.0.s8 %v3375
        %v3377 = vlaneseq
        %v3378 = vshrl.u32 %v3377, 7
        %v3379 = vsub.s32 %v3376, %v3378
        %v3380 = vrot.slane %v3372, %v3379
        %v3382 = vunpack.c.l.s4 1983009808
        %v3383 = vunpack.c.0.s8 %v3382
        %v3384 = vlaneseq
        %v3385 = vshrl.u32 %v3384, 7
        %v3386 = vsub.s32 %v3383, %v3385
        %v3387 = vrot.slane %v3373, %v3386
        %v3388 = vcombine.low %v549, %v613
        %v3389 = vcombine.high %v549, %v613
        %v3391 = vunpack.c.l.s4 1983009808
        %v3392 = vunpack.c.0.s8 %v3391
        %v3393 = vlaneseq
        %v3394 = vshrl.u32 %v3393, 7
        %v3395 = vsub.s32 %v3392, %v3394
        %v3396 = vrot.slane %v3388, %v3395
        %v3398 = vunpack.c.l.s4 1983009808
        %v3399 = vunpack.c.0.s8 %v3398
        %v3400 = vlaneseq
        %v3401 = vshrl.u32 %v3400, 7
        %v3402 = vsub.s32 %v3399, %v3401
        %v3403 = vrot.slane %v3389, %v3402
        %v3404 = vcombine.low %v581, %v645
        %v3405 = vcombine.high %v581, %v645
        %v3407 = vunpack.c.l.s4 1983009808
        %v3408 = vunpack.c.0.s8 %v3407
        %v3409 = vlaneseq
        %v3410 = vshrl.u32 %v3409, 7
        %v3411 = vsub.s32 %v3408, %v3410
        %v3412 = vrot.slane %v3404, %v3411
        %v3414 = vunpack.c.l.s4 1983009808
        %v3415 = vunpack.c.0.s8 %v3414
        %v3416 = vlaneseq
        %v3417 = vshrl.u32 %v3416, 7
        %v3418 = vsub.s32 %v3415, %v3417
        %v3419 = vrot.slane %v3405, %v3418
        %v3420 = vcombine.low %v3364, %v3380
        %v3421 = vcombine.high %v3364, %v3380
        %v3423 = vunpack.c.l.s4 1934713408
        %v3424 = vunpack.c.0.s8 %v3423
        %v3425 = vlaneseq
        %v3426 = vshrl.u32 %v3425, 7
        %v3427 = vsub.s32 %v3424, %v3426
        %v3428 = vrot.slane %v3420, %v3427
        %v3430 = vunpack.c.l.s4 1934713408
        %v3431 = vunpack.c.0.s8 %v3430
        %v3432 = vlaneseq
        %v3433 = vshrl.u32 %v3432, 7
        %v3434 = vsub.s32 %v3431, %v3433
        %v3435 = vrot.slane %v3421, %v3434
        %v3436 = vcombine.low %v3371, %v3387
        %v3437 = vcombine.high %v3371, %v3387
        %v3439 = vunpack.c.l.s4 1934713408
        %v3440 = vunpack.c.0.s8 %v3439
        %v3441 = vlaneseq
        %v3442 = vshrl.u32 %v3441, 7
        %v3443 = vsub.s32 %v3440, %v3442
        %v3444 = vrot.slane %v3436, %v3443
        %v3446 = vunpack.c.l.s4 1934713408
        %v3447 = vunpack.c.0.s8 %v3446
        %v3448 = vlaneseq
        %v3449 = vshrl.u32 %v3448, 7
        %v3450 = vsub.s32 %v3447, %v3449
        %v3451 = vrot.slane %v3437, %v3450
        %v3452 = vcombine.low %v3396, %v3412
        %v3453 = vcombine.high %v3396, %v3412
        %v3455 = vunpack.c.l.s4 1934713408
        %v3456 = vunpack.c.0.s8 %v3455
        %v3457 = vlaneseq
        %v3458 = vshrl.u32 %v3457, 7
        %v3459 = vsub.s32 %v3456, %v3458
        %v3460 = vrot.slane %v3452, %v3459
        %v3462 = vunpack.c.l.s4 1934713408
        %v3463 = vunpack.c.0.s8 %v3462
        %v3464 = vlaneseq
        %v3465 = vshrl.u32 %v3464, 7
        %v3466 = vsub.s32 %v3463, %v3465
        %v3467 = vrot.slane %v3453, %v3466
        %v3468 = vcombine.low %v3403, %v3419
        %v3469 = vcombine.high %v3403, %v3419
        %v3471 = vunpack.c.l.s4 1934713408
        %v3472 = vunpack.c.0.s8 %v3471
        %v3473 = vlaneseq
        %v3474 = vshrl.u32 %v3473, 7
        %v3475 = vsub.s32 %v3472, %v3474
        %v3476 = vrot.slane %v3468, %v3475
        %v3478 = vunpack.c.l.s4 1934713408
        %v3479 = vunpack.c.0.s8 %v3478
        %v3480 = vlaneseq
        %v3481 = vshrl.u32 %v3480, 7
        %v3482 = vsub.s32 %v3479, %v3481
        %v3483 = vrot.slane %v3469, %v3482
        %v3484 = vcombine.low %v3428, %v3460
        %v3485 = vcombine.high %v3428, %v3460
        %v3486 = vcombine.low %v3435, %v3467
        %v3487 = vcombine.high %v3435, %v3467
        %v3488 = vcombine.low %v3444, %v3476
        %v3489 = vcombine.high %v3444, %v3476
        %v3490 = vcombine.low %v3451, %v3483
        %v3491 = vcombine.high %v3451, %v3483
        %v3492 = vcombine.low %v677, %v741
        %v3493 = vcombine.high %v677, %v741
        %v3495 = vunpack.c.l.s4 1983009808
        %v3496 = vunpack.c.0.s8 %v3495
        %v3497 = vlaneseq
        %v3498 = vshrl.u32 %v3497, 7
        %v3499 = vsub.s32 %v3496, %v3498
        %v3500 = vrot.slane %v3492, %v3499
        %v3502 = vunpack.c.l.s4 1983009808
        %v3503 = vunpack.c.0.s8 %v3502
        %v3504 = vlaneseq
        %v3505 = vshrl.u32 %v3504, 7
        %v3506 = vsub.s32 %v3503, %v3505
        %v3507 = vrot.slane %v3493, %v3506
        %v3508 = vcombine.low %v709, %v773
        %v3509 = vcombine.high %v709, %v773
        %v3511 = vunpack.c.l.s4 1983009808
        %v3512 = vunpack.c.0.s8 %v3511
        %v3513 = vlaneseq
        %v3514 = vshrl.u32 %v3513, 7
        %v3515 = vsub.s32 %v3512, %v3514
        %v3516 = vrot.slane %v3508, %v3515
        %v3518 = vunpack.c.l.s4 1983009808
        %v3519 = vunpack.c.0.s8 %v3518
        %v3520 = vlaneseq
        %v3521 = vshrl.u32 %v3520, 7
        %v3522 = vsub.s32 %v3519, %v3521
        %v3523 = vrot.slane %v3509, %v3522
        %v3524 = vcombine.low %v805, %v869
        %v3525 = vcombine.high %v805, %v869
        %v3527 = vunpack.c.l.s4 1983009808
        %v3528 = vunpack.c.0.s8 %v3527
        %v3529 = vlaneseq
        %v3530 = vshrl.u32 %v3529, 7
        %v3531 = vsub.s32 %v3528, %v3530
        %v3532 = vrot.slane %v3524, %v3531
        %v3534 = vunpack.c.l.s4 1983009808
        %v3535 = vunpack.c.0.s8 %v3534
        %v3536 = vlaneseq
        %v3537 = vshrl.u32 %v3536, 7
        %v3538 = vsub.s32 %v3535, %v3537
        %v3539 = vrot.slane %v3525, %v3538
        %v3540 = vcombine.low %v837, %v901
        %v3541 = vcombine.high %v837, %v901
        %v3543 = vunpack.c.l.s4 1983009808
        %v3544 = vunpack.c.0.s8 %v3543
        %v3545 = vlaneseq
        %v3546 = vshrl.u32 %v3545, 7
        %v3547 = vsub.s32 %v3544, %v3546
        %v3548 = vrot.slane %v3540, %v3547
        %v3550 = vunpack.c.l.s4 1983009808
        %v3551 = vunpack.c.0.s8 %v3550
        %v3552 = vlaneseq
        %v3553 = vshrl.u32 %v3552, 7
        %v3554 = vsub.s32 %v3551, %v3553
        %v3555 = vrot.slane %v3541, %v3554
        %v3556 = vcombine.low %v3500, %v3516
        %v3557 = vcombine.high %v3500, %v3516
        %v3559 = vunpack.c.l.s4 1934713408
        %v3560 = vunpack.c.0.s8 %v3559
        %v3561 = vlaneseq
        %v3562 = vshrl.u32 %v3561, 7
        %v3563 = vsub.s32 %v3560, %v3562
        %v3564 = vrot.slane %v3556, %v3563
        %v3566 = vunpack.c.l.s4 1934713408
        %v3567 = vunpack.c.0.s8 %v3566
        %v3568 = vlaneseq
        %v3569 = vshrl.u32 %v3568, 7
        %v3570 = vsub.s32 %v3567, %v3569
        %v3571 = vrot.slane %v3557, %v3570
        %v3572 = vcombine.low %v3507, %v3523
        %v3573 = vcombine.high %v3507, %v3523
        %v3575 = vunpack.c.l.s4 1934713408
        %v3576 = vunpack.c.0.s8 %v3575
        %v3577 = vlaneseq
        %v3578 = vshrl.u32 %v3577, 7
        %v3579 = vsub.s32 %v3576, %v3578
        %v3580 = vrot.slane %v3572, %v3579
        %v3582 = vunpack.c.l.s4 1934713408
        %v3583 = vunpack.c.0.s8 %v3582
        %v3584 = vlaneseq
        %v3585 = vshrl.u32 %v3584, 7
        %v3586 = vsub.s32 %v3583, %v3585
        %v3587 = vrot.slane %v3573, %v3586
        %v3588 = vcombine.low %v3532, %v3548
        %v3589 = vcombine.high %v3532, %v3548
        %v3591 = vunpack.c.l.s4 1934713408
        %v3592 = vunpack.c.0.s8 %v3591
        %v3593 = vlaneseq
        %v3594 = vshrl.u32 %v3593, 7
        %v3595 = vsub.s32 %v3592, %v3594
        %v3596 = vrot.slane %v3588, %v3595
        %v3598 = vunpack.c.l.s4 1934713408
        %v3599 = vunpack.c.0.s8 %v3598
        %v3600 = vlaneseq
        %v3601 = vshrl.u32 %v3600, 7
        %v3602 = vsub.s32 %v3599, %v3601
        %v3603 = vrot.slane %v3589, %v3602
        %v3604 = vcombine.low %v3539, %v3555
        %v3605 = vcombine.high %v3539, %v3555
        %v3607 = vunpack.c.l.s4 1934713408
        %v3608 = vunpack.c.0.s8 %v3607
        %v3609 = vlaneseq
        %v3610 = vshrl.u32 %v3609, 7
        %v3611 = vsub.s32 %v3608, %v3610
        %v3612 = vrot.slane %v3604, %v3611
        %v3614 = vunpack.c.l.s4 1934713408
        %v3615 = vunpack.c.0.s8 %v3614
        %v3616 = vlaneseq
        %v3617 = vshrl.u32 %v3616, 7
        %v3618 = vsub.s32 %v3615, %v3617
        %v3619 = vrot.slane %v3605, %v3618
        %v3620 = vcombine.low %v3564, %v3596
        %v3621 = vcombine.high %v3564, %v3596
        %v3622 = vcombine.low %v3571, %v3603
        %v3623 = vcombine.high %v3571, %v3603
        %v3624 = vcombine.low %v3580, %v3612
        %v3625 = vcombine.high %v3580, %v3612
        %v3626 = vcombine.low %v3587, %v3619
        %v3627 = vcombine.high %v3587, %v3619
        %v3628 = vcombine.low %v422, %v486
        %v3629 = vcombine.high %v422, %v486
        %v3631 = vunpack.c.l.s4 1983009808
        %v3632 = vunpack.c.0.s8 %v3631
        %v3633 = vlaneseq
        %v3634 = vshrl.u32 %v3633, 7
        %v3635 = vsub.s32 %v3632, %v3634
        %v3636 = vrot.slane %v3628, %v3635
        %v3638 = vunpack.c.l.s4 1983009808
        %v3639 = vunpack.c.0.s8 %v3638
        %v3640 = vlaneseq
        %v3641 = vshrl.u32 %v3640, 7
        %v3642 = vsub.s32 %v3639, %v3641
        %v3643 = vrot.slane %v3629, %v3642
        %v3644 = vcombine.low %v454, %v518
        %v3645 = vcombine.high %v454, %v518
        %v3647 = vunpack.c.l.s4 1983009808
        %v3648 = vunpack.c.0.s8 %v3647
        %v3649 = vlaneseq
        %v3650 = vshrl.u32 %v3649, 7
        %v3651 = vsub.s32 %v3648, %v3650
        %v3652 = vrot.slane %v3644, %v3651
        %v3654 = vunpack.c.l.s4 1983009808
        %v3655 = vunpack.c.0.s8 %v3654
        %v3656 = vlaneseq
        %v3657 = vshrl.u32 %v3656, 7
        %v3658 = vsub.s32 %v3655, %v3657
        %v3659 = vrot.slane %v3645, %v3658
        %v3660 = vcombine.low %v550, %v614
        %v3661 = vcombine.high %v550, %v614
        %v3663 = vunpack.c.l.s4 1983009808
        %v3664 = vunpack.c.0.s8 %v3663
        %v3665 = vlaneseq
        %v3666 = vshrl.u32 %v3665, 7
        %v3667 = vsub.s32 %v3664, %v3666
        %v3668 = vrot.slane %v3660, %v3667
        %v3670 = vunpack.c.l.s4 1983009808
        %v3671 = vunpack.c.0.s8 %v3670
        %v3672 = vlaneseq
        %v3673 = vshrl.u32 %v3672, 7
        %v3674 = vsub.s32 %v3671, %v3673
        %v3675 = vrot.slane %v3661, %v3674
        %v3676 = vcombine.low %v582, %v646
        %v3677 = vcombine.high %v582, %v646
        %v3679 = vunpack.c.l.s4 1983009808
        %v3680 = vunpack.c.0.s8 %v3679
        %v3681 = vlaneseq
        %v3682 = vshrl.u32 %v3681, 7
        %v3683 = vsub.s32 %v3680, %v3682
        %v3684 = vrot.slane %v3676, %v3683
        %v3686 = vunpack.c.l.s4 1983009808
        %v3687 = vunpack.c.0.s8 %v3686
        %v3688 = vlaneseq
        %v3689 = vshrl.u32 %v3688, 7
        %v3690 = vsub.s32 %v3687, %v3689
        %v3691 = vrot.slane %v3677, %v3690
        %v3692 = vcombine.low %v3636, %v3652
        %v3693 = vcombine.high %v3636, %v3652
        %v3695 = vunpack.c.l.s4 1934713408
        %v3696 = vunpack.c.0.s8 %v3695
        %v3697 = vlaneseq
        %v3698 = vshrl.u32 %v3697, 7
        %v3699 = vsub.s32 %v3696, %v3698
        %v3700 = vrot.slane %v3692, %v3699
        %v3702 = vunpack.c.l.s4 1934713408
        %v3703 = vunpack.c.0.s8 %v3702
        %v3704 = vlaneseq
        %v3705 = vshrl.u32 %v3704, 7
        %v3706 = vsub.s32 %v3703, %v3705
        %v3707 = vrot.slane %v3693, %v3706
        %v3708 = vcombine.low %v3643, %v3659
        %v3709 = vcombine.high %v3643, %v3659
        %v3711 = vunpack.c.l.s4 1934713408
        %v3712 = vunpack.c.0.s8 %v3711
        %v3713 = vlaneseq
        %v3714 = vshrl.u32 %v3713, 7
        %v3715 = vsub.s32 %v3712, %v3714
        %v3716 = vrot.slane %v3708, %v3715
        %v3718 = vunpack.c.l.s4 1934713408
        %v3719 = vunpack.c.0.s8 %v3718
        %v3720 = vlaneseq
        %v3721 = vshrl.u32 %v3720, 7
        %v3722 = vsub.s32 %v3719, %v3721
        %v3723 = vrot.slane %v3709, %v3722
        %v3724 = vcombine.low %v3668, %v3684
        %v3725 = vcombine.high %v3668, %v3684
        %v3727 = vunpack.c.l.s4 1934713408
        %v3728 = vunpack.c.0.s8 %v3727
        %v3729 = vlaneseq
        %v3730 = vshrl.u32 %v3729, 7
        %v3731 = vsub.s32 %v3728, %v3730
        %v3732 = vrot.slane %v3724, %v3731
        %v3734 = vunpack.c.l.s4 1934713408
        %v3735 = vunpack.c.0.s8 %v3734
        %v3736 = vlaneseq
        %v3737 = vshrl.u32 %v3736, 7
        %v3738 = vsub.s32 %v3735, %v3737
        %v3739 = vrot.slane %v3725, %v3738
        %v3740 = vcombine.low %v3675, %v3691
        %v3741 = vcombine.high %v3675, %v3691
        %v3743 = vunpack.c.l.s4 1934713408
        %v3744 = vunpack.c.0.s8 %v3743
        %v3745 = vlaneseq
        %v3746 = vshrl.u32 %v3745, 7
        %v3747 = vsub.s32 %v3744, %v3746
        %v3748 = vrot.slane %v3740, %v3747
        %v3750 = vunpack.c.l.s4 1934713408
        %v3751 = vunpack.c.0.s8 %v3750
        %v3752 = vlaneseq
        %v3753 = vshrl.u32 %v3752, 7
        %v3754 = vsub.s32 %v3751, %v3753
        %v3755 = vrot.slane %v3741, %v3754
        %v3756 = vcombine.low %v3700, %v3732
        %v3757 = vcombine.high %v3700, %v3732
        %v3758 = vcombine.low %v3707, %v3739
        %v3759 = vcombine.high %v3707, %v3739
        %v3760 = vcombine.low %v3716, %v3748
        %v3761 = vcombine.high %v3716, %v3748
        %v3762 = vcombine.low %v3723, %v3755
        %v3763 = vcombine.high %v3723, %v3755
        %v3764 = vcombine.low %v678, %v742
        %v3765 = vcombine.high %v678, %v742
        %v3767 = vunpack.c.l.s4 1983009808
        %v3768 = vunpack.c.0.s8 %v3767
        %v3769 = vlaneseq
        %v3770 = vshrl.u32 %v3769, 7
        %v3771 = vsub.s32 %v3768, %v3770
        %v3772 = vrot.slane %v3764, %v3771
        %v3774 = vunpack.c.l.s4 1983009808
        %v3775 = vunpack.c.0.s8 %v3774
        %v3776 = vlaneseq
        %v3777 = vshrl.u32 %v3776, 7
        %v3778 = vsub.s32 %v3775, %v3777
        %v3779 = vrot.slane %v3765, %v3778
        %v3780 = vcombine.low %v710, %v774
        %v3781 = vcombine.high %v710, %v774
        %v3783 = vunpack.c.l.s4 1983009808
        %v3784 = vunpack.c.0.s8 %v3783
        %v3785 = vlaneseq
        %v3786 = vshrl.u32 %v3785, 7
        %v3787 = vsub.s32 %v3784, %v3786
        %v3788 = vrot.slane %v3780, %v3787
        %v3790 = vunpack.c.l.s4 1983009808
        %v3791 = vunpack.c.0.s8 %v3790
        %v3792 = vlaneseq
        %v3793 = vshrl.u32 %v3792, 7
        %v3794 = vsub.s32 %v3791, %v3793
        %v3795 = vrot.slane %v3781, %v3794
        %v3796 = vcombine.low %v806, %v870
        %v3797 = vcombine.high %v806, %v870
        %v3799 = vunpack.c.l.s4 1983009808
        %v3800 = vunpack.c.0.s8 %v3799
        %v3801 = vlaneseq
        %v3802 = vshrl.u32 %v3801, 7
        %v3803 = vsub.s32 %v3800, %v3802
        %v3804 = vrot.slane %v3796, %v3803
        %v3806 = vunpack.c.l.s4 1983009808
        %v3807 = vunpack.c.0.s8 %v3806
        %v3808 = vlaneseq
        %v3809 = vshrl.u32 %v3808, 7
        %v3810 = vsub.s32 %v3807, %v3809
        %v3811 = vrot.slane %v3797, %v3810
        %v3812 = vcombine.low %v838, %v902
        %v3813 = vcombine.high %v838, %v902
        %v3815 = vunpack.c.l.s4 1983009808
        %v3816 = vunpack.c.0.s8 %v3815
        %v3817 = vlaneseq
        %v3818 = vshrl.u32 %v3817, 7
        %v3819 = vsub.s32 %v3816, %v3818
        %v3820 = vrot.slane %v3812, %v3819
        %v3822 = vunpack.c.l.s4 1983009808
        %v3823 = vunpack.c.0.s8 %v3822
        %v3824 = vlaneseq
        %v3825 = vshrl.u32 %v3824, 7
        %v3826 = vsub.s32 %v3823, %v3825
        %v3827 = vrot.slane %v3813, %v3826
        %v3828 = vcombine.low %v3772, %v3788
        %v3829 = vcombine.high %v3772, %v3788
        %v3831 = vunpack.c.l.s4 1934713408
        %v3832 = vunpack.c.0.s8 %v3831
        %v3833 = vlaneseq
        %v3834 = vshrl.u32 %v3833, 7
        %v3835 = vsub.s32 %v3832, %v3834
        %v3836 = vrot.slane %v3828, %v3835
        %v3838 = vunpack.c.l.s4 1934713408
        %v3839 = vunpack.c.0.s8 %v3838
        %v3840 = vlaneseq
        %v3841 = vshrl.u32 %v3840, 7
        %v3842 = vsub.s32 %v3839, %v3841
        %v3843 = vrot.slane %v3829, %v3842
        %v3844 = vcombine.low %v3779, %v3795
        %v3845 = vcombine.high %v3779, %v3795
        %v3847 = vunpack.c.l.s4 1934713408
        %v3848 = vunpack.c.0.s8 %v3847
        %v3849 = vlaneseq
        %v3850 = vshrl.u32 %v3849, 7
        %v3851 = vsub.s32 %v3848, %v3850
        %v3852 = vrot.slane %v3844, %v3851
        %v3854 = vunpack.c.l.s4 1934713408
        %v3855 = vunpack.c.0.s8 %v3854
        %v3856 = vlaneseq
        %v3857 = vshrl.u32 %v3856, 7
        %v3858 = vsub.s32 %v3855, %v3857
        %v3859 = vrot.slane %v3845, %v3858
        %v3860 = vcombine.low %v3804, %v3820
        %v3861 = vcombine.high %v3804, %v3820
        %v3863 = vunpack.c.l.s4 1934713408
        %v3864 = vunpack.c.0.s8 %v3863
        %v3865 = vlaneseq
        %v3866 = vshrl.u32 %v3865, 7
        %v3867 = vsub.s32 %v3864, %v3866
        %v3868 = vrot.slane %v3860, %v3867
        %v3870 = vunpack.c.l.s4 1934713408
        %v3871 = vunpack.c.0.s8 %v3870
        %v3872 = vlaneseq
        %v3873 = vshrl.u32 %v3872, 7
        %v3874 = vsub.s32 %v3871, %v3873
        %v3875 = vrot.slane %v3861, %v3874
        %v3876 = vcombine.low %v3811, %v3827
        %v3877 = vcombine.high %v3811, %v3827
        %v3879 = vunpack.c.l.s4 1934713408
        %v3880 = vunpack.c.0.s8 %v3879
        %v3881 = vlaneseq
        %v3882 = vshrl.u32 %v3881, 7
        %v3883 = vsub.s32 %v3880, %v3882
        %v3884 = vrot.slane %v3876, %v3883
        %v3886 = vunpack.c.l.s4 1934713408
        %v3887 = vunpack.c.0.s8 %v3886
        %v3888 = vlaneseq
        %v3889 = vshrl.u32 %v3888, 7
        %v3890 = vsub.s32 %v3887, %v3889
        %v3891 = vrot.slane %v3877, %v3890
        %v3892 = vcombine.low %v3836, %v3868
        %v3893 = vcombine.high %v3836, %v3868
        %v3894 = vcombine.low %v3843, %v3875
        %v3895 = vcombine.high %v3843, %v3875
        %v3896 = vcombine.low %v3852, %v3884
        %v3897 = vcombine.high %v3852, %v3884
        %v3898 = vcombine.low %v3859, %v3891
        %v3899 = vcombine.high %v3859, %v3891
        %v3900 = vcombine.low %v423, %v487
        %v3901 = vcombine.high %v423, %v487
        %v3903 = vunpack.c.l.s4 1983009808
        %v3904 = vunpack.c.0.s8 %v3903
        %v3905 = vlaneseq
        %v3906 = vshrl.u32 %v3905, 7
        %v3907 = vsub.s32 %v3904, %v3906
        %v3908 = vrot.slane %v3900, %v3907
        %v3910 = vunpack.c.l.s4 1983009808
        %v3911 = vunpack.c.0.s8 %v3910
        %v3912 = vlaneseq
        %v3913 = vshrl.u32 %v3912, 7
        %v3914 = vsub.s32 %v3911, %v3913
        %v3915 = vrot.slane %v3901, %v3914
        %v3916 = vcombine.low %v455, %v519
        %v3917 = vcombine.high %v455, %v519
        %v3919 = vunpack.c.l.s4 1983009808
        %v3920 = vunpack.c.0.s8 %v3919
        %v3921 = vlaneseq
        %v3922 = vshrl.u32 %v3921, 7
        %v3923 = vsub.s32 %v3920, %v3922
        %v3924 = vrot.slane %v3916, %v3923
        %v3926 = vunpack.c.l.s4 1983009808
        %v3927 = vunpack.c.0.s8 %v3926
        %v3928 = vlaneseq
        %v3929 = vshrl.u32 %v3928, 7
        %v3930 = vsub.s32 %v3927, %v3929
        %v3931 = vrot.slane %v3917, %v3930
        %v3932 = vcombine.low %v551, %v615
        %v3933 = vcombine.high %v551, %v615
        %v3935 = vunpack.c.l.s4 1983009808
        %v3936 = vunpack.c.0.s8 %v3935
        %v3937 = vlaneseq
        %v3938 = vshrl.u32 %v3937, 7
        %v3939 = vsub.s32 %v3936, %v3938
        %v3940 = vrot.slane %v3932, %v3939
        %v3942 = vunpack.c.l.s4 1983009808
        %v3943 = vunpack.c.0.s8 %v3942
        %v3944 = vlaneseq
        %v3945 = vshrl.u32 %v3944, 7
        %v3946 = vsub.s32 %v3943, %v3945
        %v3947 = vrot.slane %v3933, %v3946
        %v3948 = vcombine.low %v583, %v647
        %v3949 = vcombine.high %v583, %v647
        %v3951 = vunpack.c.l.s4 1983009808
        %v3952 = vunpack.c.0.s8 %v3951
        %v3953 = vlaneseq
        %v3954 = vshrl.u32 %v3953, 7
        %v3955 = vsub.s32 %v3952, %v3954
        %v3956 = vrot.slane %v3948, %v3955
        %v3958 = vunpack.c.l.s4 1983009808
        %v3959 = vunpack.c.0.s8 %v3958
        %v3960 = vlaneseq
        %v3961 = vshrl.u32 %v3960, 7
        %v3962 = vsub.s32 %v3959, %v3961
        %v3963 = vrot.slane %v3949, %v3962
        %v3964 = vcombine.low %v3908, %v3924
        %v3965 = vcombine.high %v3908, %v3924
        %v3967 = vunpack.c.l.s4 1934713408
        %v3968 = vunpack.c.0.s8 %v3967
        %v3969 = vlaneseq
        %v3970 = vshrl.u32 %v3969, 7
        %v3971 = vsub.s32 %v3968, %v3970
        %v3972 = vrot.slane %v3964, %v3971
        %v3974 = vunpack.c.l.s4 1934713408
        %v3975 = vunpack.c.0.s8 %v3974
        %v3976 = vlaneseq
        %v3977 = vshrl.u32 %v3976, 7
        %v3978 = vsub.s32 %v3975, %v3977
        %v3979 = vrot.slane %v3965, %v3978
        %v3980 = vcombine.low %v3915, %v3931
        %v3981 = vcombine.high %v3915, %v3931
        %v3983 = vunpack.c.l.s4 1934713408
        %v3984 = vunpack.c.0.s8 %v3983
        %v3985 = vlaneseq
        %v3986 = vshrl.u32 %v3985, 7
        %v3987 = vsub.s32 %v3984, %v3986
        %v3988 = vrot.slane %v3980, %v3987
        %v3990 = vunpack.c.l.s4 1934713408
        %v3991 = vunpack.c.0.s8 %v3990
        %v3992 = vlaneseq
        %v3993 = vshrl.u32 %v3992, 7
        %v3994 = vsub.s32 %v3991, %v3993
        %v3995 = vrot.slane %v3981, %v3994
        %v3996 = vcombine.low %v3940, %v3956
        %v3997 = vcombine.high %v3940, %v3956
        %v3999 = vunpack.c.l.s4 1934713408
        %v4000 = vunpack.c.0.s8 %v3999
        %v4001 = vlaneseq
        %v4002 = vshrl.u32 %v4001, 7
        %v4003 = vsub.s32 %v4000, %v4002
        %v4004 = vrot.slane %v3996, %v4003
        %v4006 = vunpack.c.l.s4 1934713408
        %v4007 = vunpack.c.0.s8 %v4006
        %v4008 = vlaneseq
        %v4009 = vshrl.u32 %v4008, 7
        %v4010 = vsub.s32 %v4007, %v4009
        %v4011 = vrot.slane %v3997, %v4010
        %v4012 = vcombine.low %v3947, %v3963
        %v4013 = vcombine.high %v3947, %v3963
        %v4015 = vunpack.c.l.s4 1934713408
        %v4016 = vunpack.c.0.s8 %v4015
        %v4017 = vlaneseq
        %v4018 = vshrl.u32 %v4017, 7
        %v4019 = vsub.s32 %v4016, %v4018
        %v4020 = vrot.slane %v4012, %v4019
        %v4022 = vunpack.c.l.s4 1934713408
        %v4023 = vunpack.c.0.s8 %v4022
        %v4024 = vlaneseq
        %v4025 = vshrl.u32 %v4024, 7
        %v4026 = vsub.s32 %v4023, %v4025
        %v4027 = vrot.slane %v4013, %v4026
        %v4028 = vcombine.low %v3972, %v4004
        %v4029 = vcombine.high %v3972, %v4004
        %v4030 = vcombine.low %v3979, %v4011
        %v4031 = vcombine.high %v3979, %v4011
        %v4032 = vcombine.low %v3988, %v4020
        %v4033 = vcombine.high %v3988, %v4020
        %v4034 = vcombine.low %v3995, %v4027
        %v4035 = vcombine.high %v3995, %v4027
        %v4036 = vcombine.low %v679, %v743
        %v4037 = vcombine.high %v679, %v743
        %v4039 = vunpack.c.l.s4 1983009808
        %v4040 = vunpack.c.0.s8 %v4039
        %v4041 = vlaneseq
        %v4042 = vshrl.u32 %v4041, 7
        %v4043 = vsub.s32 %v4040, %v4042
        %v4044 = vrot.slane %v4036, %v4043
        %v4046 = vunpack.c.l.s4 1983009808
        %v4047 = vunpack.c.0.s8 %v4046
        %v4048 = vlaneseq
        %v4049 = vshrl.u32 %v4048, 7
        %v4050 = vsub.s32 %v4047, %v4049
        %v4051 = vrot.slane %v4037, %v4050
        %v4052 = vcombine.low %v711, %v775
        %v4053 = vcombine.high %v711, %v775
        %v4055 = vunpack.c.l.s4 1983009808
        %v4056 = vunpack.c.0.s8 %v4055
        %v4057 = vlaneseq
        %v4058 = vshrl.u32 %v4057, 7
        %v4059 = vsub.s32 %v4056, %v4058
        %v4060 = vrot.slane %v4052, %v4059
        %v4062 = vunpack.c.l.s4 1983009808
        %v4063 = vunpack.c.0.s8 %v4062
        %v4064 = vlaneseq
        %v4065 = vshrl.u32 %v4064, 7
        %v4066 = vsub.s32 %v4063, %v4065
        %v4067 = vrot.slane %v4053, %v4066
        %v4068 = vcombine.low %v807, %v871
        %v4069 = vcombine.high %v807, %v871
        %v4071 = vunpack.c.l.s4 1983009808
        %v4072 = vunpack.c.0.s8 %v4071
        %v4073 = vlaneseq
        %v4074 = vshrl.u32 %v4073, 7
        %v4075 = vsub.s32 %v4072, %v4074
        %v4076 = vrot.slane %v4068, %v4075
        %v4078 = vunpack.c.l.s4 1983009808
        %v4079 = vunpack.c.0.s8 %v4078
        %v4080 = vlaneseq
        %v4081 = vshrl.u32 %v4080, 7
        %v4082 = vsub.s32 %v4079, %v4081
        %v4083 = vrot.slane %v4069, %v4082
        %v4084 = vcombine.low %v839, %v903
        %v4085 = vcombine.high %v839, %v903
        %v4087 = vunpack.c.l.s4 1983009808
        %v4088 = vunpack.c.0.s8 %v4087
        %v4089 = vlaneseq
        %v4090 = vshrl.u32 %v4089, 7
        %v4091 = vsub.s32 %v4088, %v4090
        %v4092 = vrot.slane %v4084, %v4091
        %v4094 = vunpack.c.l.s4 1983009808
        %v4095 = vunpack.c.0.s8 %v4094
        %v4096 = vlaneseq
        %v4097 = vshrl.u32 %v4096, 7
        %v4098 = vsub.s32 %v4095, %v4097
        %v4099 = vrot.slane %v4085, %v4098
        %v4100 = vcombine.low %v4044, %v4060
        %v4101 = vcombine.high %v4044, %v4060
        %v4103 = vunpack.c.l.s4 1934713408
        %v4104 = vunpack.c.0.s8 %v4103
        %v4105 = vlaneseq
        %v4106 = vshrl.u32 %v4105, 7
        %v4107 = vsub.s32 %v4104, %v4106
        %v4108 = vrot.slane %v4100, %v4107
        %v4110 = vunpack.c.l.s4 1934713408
        %v4111 = vunpack.c.0.s8 %v4110
        %v4112 = vlaneseq
        %v4113 = vshrl.u32 %v4112, 7
        %v4114 = vsub.s32 %v4111, %v4113
        %v4115 = vrot.slane %v4101, %v4114
        %v4116 = vcombine.low %v4051, %v4067
        %v4117 = vcombine.high %v4051, %v4067
        %v4119 = vunpack.c.l.s4 1934713408
        %v4120 = vunpack.c.0.s8 %v4119
        %v4121 = vlaneseq
        %v4122 = vshrl.u32 %v4121, 7
        %v4123 = vsub.s32 %v4120, %v4122
        %v4124 = vrot.slane %v4116, %v4123
        %v4126 = vunpack.c.l.s4 1934713408
        %v4127 = vunpack.c.0.s8 %v4126
        %v4128 = vlaneseq
        %v4129 = vshrl.u32 %v4128, 7
        %v4130 = vsub.s32 %v4127, %v4129
        %v4131 = vrot.slane %v4117, %v4130
        %v4132 = vcombine.low %v4076, %v4092
        %v4133 = vcombine.high %v4076, %v4092
        %v4135 = vunpack.c.l.s4 1934713408
        %v4136 = vunpack.c.0.s8 %v4135
        %v4137 = vlaneseq
        %v4138 = vshrl.u32 %v4137, 7
        %v4139 = vsub.s32 %v4136, %v4138
        %v4140 = vrot.slane %v4132, %v4139
        %v4142 = vunpack.c.l.s4 1934713408
        %v4143 = vunpack.c.0.s8 %v4142
        %v4144 = vlaneseq
        %v4145 = vshrl.u32 %v4144, 7
        %v4146 = vsub.s32 %v4143, %v4145
        %v4147 = vrot.slane %v4133, %v4146
        %v4148 = vcombine.low %v4083, %v4099
        %v4149 = vcombine.high %v4083, %v4099
        %v4151 = vunpack.c.l.s4 1934713408
        %v4152 = vunpack.c.0.s8 %v4151
        %v4153 = vlaneseq
        %v4154 = vshrl.u32 %v4153, 7
        %v4155 = vsub.s32 %v4152, %v4154
        %v4156 = vrot.slane %v4148, %v4155
        %v4158 = vunpack.c.l.s4 1934713408
        %v4159 = vunpack.c.0.s8 %v4158
        %v4160 = vlaneseq
        %v4161 = vshrl.u32 %v4160, 7
        %v4162 = vsub.s32 %v4159, %v4161
        %v4163 = vrot.slane %v4149, %v4162
        %v4164 = vcombine.low %v4108, %v4140
        %v4165 = vcombine.high %v4108, %v4140
        %v4166 = vcombine.low %v4115, %v4147
        %v4167 = vcombine.high %v4115, %v4147
        %v4168 = vcombine.low %v4124, %v4156
        %v4169 = vcombine.high %v4124, %v4156
        %v4170 = vcombine.low %v4131, %v4163
        %v4171 = vcombine.high %v4131, %v4163
        %v4172 = vcombine.low %v424, %v488
        %v4173 = vcombine.high %v424, %v488
        %v4175 = vunpack.c.l.s4 1983009808
        %v4176 = vunpack.c.0.s8 %v4175
        %v4177 = vlaneseq
        %v4178 = vshrl.u32 %v4177, 7
        %v4179 = vsub.s32 %v4176, %v4178
        %v4180 = vrot.slane %v4172, %v4179
        %v4182 = vunpack.c.l.s4 1983009808
        %v4183 = vunpack.c.0.s8 %v4182
        %v4184 = vlaneseq
        %v4185 = vshrl.u32 %v4184, 7
        %v4186 = vsub.s32 %v4183, %v4185
        %v4187 = vrot.slane %v4173, %v4186
        %v4188 = vcombine.low %v456, %v520
        %v4189 = vcombine.high %v456, %v520
        %v4191 = vunpack.c.l.s4 1983009808
        %v4192 = vunpack.c.0.s8 %v4191
        %v4193 = vlaneseq
        %v4194 = vshrl.u32 %v4193, 7
        %v4195 = vsub.s32 %v4192, %v4194
        %v4196 = vrot.slane %v4188, %v4195
        %v4198 = vunpack.c.l.s4 1983009808
        %v4199 = vunpack.c.0.s8 %v4198
        %v4200 = vlaneseq
        %v4201 = vshrl.u32 %v4200, 7
        %v4202 = vsub.s32 %v4199, %v4201
        %v4203 = vrot.slane %v4189, %v4202
        %v4204 = vcombine.low %v552, %v616
        %v4205 = vcombine.high %v552, %v616
        %v4207 = vunpack.c.l.s4 1983009808
        %v4208 = vunpack.c.0.s8 %v4207
        %v4209 = vlaneseq
        %v4210 = vshrl.u32 %v4209, 7
        %v4211 = vsub.s32 %v4208, %v4210
        %v4212 = vrot.slane %v4204, %v4211
        %v4214 = vunpack.c.l.s4 1983009808
        %v4215 = vunpack.c.0.s8 %v4214
        %v4216 = vlaneseq
        %v4217 = vshrl.u32 %v4216, 7
        %v4218 = vsub.s32 %v4215, %v4217
        %v4219 = vrot.slane %v4205, %v4218
        %v4220 = vcombine.low %v584, %v648
        %v4221 = vcombine.high %v584, %v648
        %v4223 = vunpack.c.l.s4 1983009808
        %v4224 = vunpack.c.0.s8 %v4223
        %v4225 = vlaneseq
        %v4226 = vshrl.u32 %v4225, 7
        %v4227 = vsub.s32 %v4224, %v4226
        %v4228 = vrot.slane %v4220, %v4227
        %v4230 = vunpack.c.l.s4 1983009808
        %v4231 = vunpack.c.0.s8 %v4230
        %v4232 = vlaneseq
        %v4233 = vshrl.u32 %v4232, 7
        %v4234 = vsub.s32 %v4231, %v4233
        %v4235 = vrot.slane %v4221, %v4234
        %v4236 = vcombine.low %v4180, %v4196
        %v4237 = vcombine.high %v4180, %v4196
        %v4239 = vunpack.c.l.s4 1934713408
        %v4240 = vunpack.c.0.s8 %v4239
        %v4241 = vlaneseq
        %v4242 = vshrl.u32 %v4241, 7
        %v4243 = vsub.s32 %v4240, %v4242
        %v4244 = vrot.slane %v4236, %v4243
        %v4246 = vunpack.c.l.s4 1934713408
        %v4247 = vunpack.c.0.s8 %v4246
        %v4248 = vlaneseq
        %v4249 = vshrl.u32 %v4248, 7
        %v4250 = vsub.s32 %v4247, %v4249
        %v4251 = vrot.slane %v4237, %v4250
        %v4252 = vcombine.low %v4187, %v4203
        %v4253 = vcombine.high %v4187, %v4203
        %v4255 = vunpack.c.l.s4 1934713408
        %v4256 = vunpack.c.0.s8 %v4255
        %v4257 = vlaneseq
        %v4258 = vshrl.u32 %v4257, 7
        %v4259 = vsub.s32 %v4256, %v4258
        %v4260 = vrot.slane %v4252, %v4259
        %v4262 = vunpack.c.l.s4 1934713408
        %v4263 = vunpack.c.0.s8 %v4262
        %v4264 = vlaneseq
        %v4265 = vshrl.u32 %v4264, 7
        %v4266 = vsub.s32 %v4263, %v4265
        %v4267 = vrot.slane %v4253, %v4266
        %v4268 = vcombine.low %v4212, %v4228
        %v4269 = vcombine.high %v4212, %v4228
        %v4271 = vunpack.c.l.s4 1934713408
        %v4272 = vunpack.c.0.s8 %v4271
        %v4273 = vlaneseq
        %v4274 = vshrl.u32 %v4273, 7
        %v4275 = vsub.s32 %v4272, %v4274
        %v4276 = vrot.slane %v4268, %v4275
        %v4278 = vunpack.c.l.s4 1934713408
        %v4279 = vunpack.c.0.s8 %v4278
        %v4280 = vlaneseq
        %v4281 = vshrl.u32 %v4280, 7
        %v4282 = vsub.s32 %v4279, %v4281
        %v4283 = vrot.slane %v4269, %v4282
        %v4284 = vcombine.low %v4219, %v4235
        %v4285 = vcombine.high %v4219, %v4235
        %v4287 = vunpack.c.l.s4 1934713408
        %v4288 = vunpack.c.0.s8 %v4287
        %v4289 = vlaneseq
        %v4290 = vshrl.u32 %v4289, 7
        %v4291 = vsub.s32 %v4288, %v4290
        %v4292 = vrot.slane %v4284, %v4291
        %v4294 = vunpack.c.l.s4 1934713408
        %v4295 = vunpack.c.0.s8 %v4294
        %v4296 = vlaneseq
        %v4297 = vshrl.u32 %v4296, 7
        %v4298 = vsub.s32 %v4295, %v4297
        %v4299 = vrot.slane %v4285, %v4298
        %v4300 = vcombine.low %v4244, %v4276
        %v4301 = vcombine.high %v4244, %v4276
        %v4302 = vcombine.low %v4251, %v4283
        %v4303 = vcombine.high %v4251, %v4283
        %v4304 = vcombine.low %v4260, %v4292
        %v4305 = vcombine.high %v4260, %v4292
        %v4306 = vcombine.low %v4267, %v4299
        %v4307 = vcombine.high %v4267, %v4299
        %v4308 = vcombine.low %v680, %v744
        %v4309 = vcombine.high %v680, %v744
        %v4311 = vunpack.c.l.s4 1983009808
        %v4312 = vunpack.c.0.s8 %v4311
        %v4313 = vlaneseq
        %v4314 = vshrl.u32 %v4313, 7
        %v4315 = vsub.s32 %v4312, %v4314
        %v4316 = vrot.slane %v4308, %v4315
        %v4318 = vunpack.c.l.s4 1983009808
        %v4319 = vunpack.c.0.s8 %v4318
        %v4320 = vlaneseq
        %v4321 = vshrl.u32 %v4320, 7
        %v4322 = vsub.s32 %v4319, %v4321
        %v4323 = vrot.slane %v4309, %v4322
        %v4324 = vcombine.low %v712, %v776
        %v4325 = vcombine.high %v712, %v776
        %v4327 = vunpack.c.l.s4 1983009808
        %v4328 = vunpack.c.0.s8 %v4327
        %v4329 = vlaneseq
        %v4330 = vshrl.u32 %v4329, 7
        %v4331 = vsub.s32 %v4328, %v4330
        %v4332 = vrot.slane %v4324, %v4331
        %v4334 = vunpack.c.l.s4 1983009808
        %v4335 = vunpack.c.0.s8 %v4334
        %v4336 = vlaneseq
        %v4337 = vshrl.u32 %v4336, 7
        %v4338 = vsub.s32 %v4335, %v4337
        %v4339 = vrot.slane %v4325, %v4338
        %v4340 = vcombine.low %v808, %v872
        %v4341 = vcombine.high %v808, %v872
        %v4343 = vunpack.c.l.s4 1983009808
        %v4344 = vunpack.c.0.s8 %v4343
        %v4345 = vlaneseq
        %v4346 = vshrl.u32 %v4345, 7
        %v4347 = vsub.s32 %v4344, %v4346
        %v4348 = vrot.slane %v4340, %v4347
        %v4350 = vunpack.c.l.s4 1983009808
        %v4351 = vunpack.c.0.s8 %v4350
        %v4352 = vlaneseq
        %v4353 = vshrl.u32 %v4352, 7
        %v4354 = vsub.s32 %v4351, %v4353
        %v4355 = vrot.slane %v4341, %v4354
        %v4356 = vcombine.low %v840, %v904
        %v4357 = vcombine.high %v840, %v904
        %v4359 = vunpack.c.l.s4 1983009808
        %v4360 = vunpack.c.0.s8 %v4359
        %v4361 = vlaneseq
        %v4362 = vshrl.u32 %v4361, 7
        %v4363 = vsub.s32 %v4360, %v4362
        %v4364 = vrot.slane %v4356, %v4363
        %v4366 = vunpack.c.l.s4 1983009808
        %v4367 = vunpack.c.0.s8 %v4366
        %v4368 = vlaneseq
        %v4369 = vshrl.u32 %v4368, 7
        %v4370 = vsub.s32 %v4367, %v4369
        %v4371 = vrot.slane %v4357, %v4370
        %v4372 = vcombine.low %v4316, %v4332
        %v4373 = vcombine.high %v4316, %v4332
        %v4375 = vunpack.c.l.s4 1934713408
        %v4376 = vunpack.c.0.s8 %v4375
        %v4377 = vlaneseq
        %v4378 = vshrl.u32 %v4377, 7
        %v4379 = vsub.s32 %v4376, %v4378
        %v4380 = vrot.slane %v4372, %v4379
        %v4382 = vunpack.c.l.s4 1934713408
        %v4383 = vunpack.c.0.s8 %v4382
        %v4384 = vlaneseq
        %v4385 = vshrl.u32 %v4384, 7
        %v4386 = vsub.s32 %v4383, %v4385
        %v4387 = vrot.slane %v4373, %v4386
        %v4388 = vcombine.low %v4323, %v4339
        %v4389 = vcombine.high %v4323, %v4339
        %v4391 = vunpack.c.l.s4 1934713408
        %v4392 = vunpack.c.0.s8 %v4391
        %v4393 = vlaneseq
        %v4394 = vshrl.u32 %v4393, 7
        %v4395 = vsub.s32 %v4392, %v4394
        %v4396 = vrot.slane %v4388, %v4395
        %v4398 = vunpack.c.l.s4 1934713408
        %v4399 = vunpack.c.0.s8 %v4398
        %v4400 = vlaneseq
        %v4401 = vshrl.u32 %v4400, 7
        %v4402 = vsub.s32 %v4399, %v4401
        %v4403 = vrot.slane %v4389, %v4402
        %v4404 = vcombine.low %v4348, %v4364
        %v4405 = vcombine.high %v4348, %v4364
        %v4407 = vunpack.c.l.s4 1934713408
        %v4408 = vunpack.c.0.s8 %v4407
        %v4409 = vlaneseq
        %v4410 = vshrl.u32 %v4409, 7
        %v4411 = vsub.s32 %v4408, %v4410
        %v4412 = vrot.slane %v4404, %v4411
        %v4414 = vunpack.c.l.s4 1934713408
        %v4415 = vunpack.c.0.s8 %v4414
        %v4416 = vlaneseq
        %v4417 = vshrl.u32 %v4416, 7
        %v4418 = vsub.s32 %v4415, %v4417
        %v4419 = vrot.slane %v4405, %v4418
        %v4420 = vcombine.low %v4355, %v4371
        %v4421 = vcombine.high %v4355, %v4371
        %v4423 = vunpack.c.l.s4 1934713408
        %v4424 = vunpack.c.0.s8 %v4423
        %v4425 = vlaneseq
        %v4426 = vshrl.u32 %v4425, 7
        %v4427 = vsub.s32 %v4424, %v4426
        %v4428 = vrot.slane %v4420, %v4427
        %v4430 = vunpack.c.l.s4 1934713408
        %v4431 = vunpack.c.0.s8 %v4430
        %v4432 = vlaneseq
        %v4433 = vshrl.u32 %v4432, 7
        %v4434 = vsub.s32 %v4431, %v4433
        %v4435 = vrot.slane %v4421, %v4434
        %v4436 = vcombine.low %v4380, %v4412
        %v4437 = vcombine.high %v4380, %v4412
        %v4438 = vcombine.low %v4387, %v4419
        %v4439 = vcombine.high %v4387, %v4419
        %v4440 = vcombine.low %v4396, %v4428
        %v4441 = vcombine.high %v4396, %v4428
        %v4442 = vcombine.low %v4403, %v4435
        %v4443 = vcombine.high %v4403, %v4435
        %v4444 = vcombine.low %v425, %v489
        %v4445 = vcombine.high %v425, %v489
        %v4447 = vunpack.c.l.s4 1983009808
        %v4448 = vunpack.c.0.s8 %v4447
        %v4449 = vlaneseq
        %v4450 = vshrl.u32 %v4449, 7
        %v4451 = vsub.s32 %v4448, %v4450
        %v4452 = vrot.slane %v4444, %v4451
        %v4454 = vunpack.c.l.s4 1983009808
        %v4455 = vunpack.c.0.s8 %v4454
        %v4456 = vlaneseq
        %v4457 = vshrl.u32 %v4456, 7
        %v4458 = vsub.s32 %v4455, %v4457
        %v4459 = vrot.slane %v4445, %v4458
        %v4460 = vcombine.low %v457, %v521
        %v4461 = vcombine.high %v457, %v521
        %v4463 = vunpack.c.l.s4 1983009808
        %v4464 = vunpack.c.0.s8 %v4463
        %v4465 = vlaneseq
        %v4466 = vshrl.u32 %v4465, 7
        %v4467 = vsub.s32 %v4464, %v4466
        %v4468 = vrot.slane %v4460, %v4467
        %v4470 = vunpack.c.l.s4 1983009808
        %v4471 = vunpack.c.0.s8 %v4470
        %v4472 = vlaneseq
        %v4473 = vshrl.u32 %v4472, 7
        %v4474 = vsub.s32 %v4471, %v4473
        %v4475 = vrot.slane %v4461, %v4474
        %v4476 = vcombine.low %v553, %v617
        %v4477 = vcombine.high %v553, %v617
        %v4479 = vunpack.c.l.s4 1983009808
        %v4480 = vunpack.c.0.s8 %v4479
        %v4481 = vlaneseq
        %v4482 = vshrl.u32 %v4481, 7
        %v4483 = vsub.s32 %v4480, %v4482
        %v4484 = vrot.slane %v4476, %v4483
        %v4486 = vunpack.c.l.s4 1983009808
        %v4487 = vunpack.c.0.s8 %v4486
        %v4488 = vlaneseq
        %v4489 = vshrl.u32 %v4488, 7
        %v4490 = vsub.s32 %v4487, %v4489
        %v4491 = vrot.slane %v4477, %v4490
        %v4492 = vcombine.low %v585, %v649
        %v4493 = vcombine.high %v585, %v649
        %v4495 = vunpack.c.l.s4 1983009808
        %v4496 = vunpack.c.0.s8 %v4495
        %v4497 = vlaneseq
        %v4498 = vshrl.u32 %v4497, 7
        %v4499 = vsub.s32 %v4496, %v4498
        %v4500 = vrot.slane %v4492, %v4499
        %v4502 = vunpack.c.l.s4 1983009808
        %v4503 = vunpack.c.0.s8 %v4502
        %v4504 = vlaneseq
        %v4505 = vshrl.u32 %v4504, 7
        %v4506 = vsub.s32 %v4503, %v4505
        %v4507 = vrot.slane %v4493, %v4506
        %v4508 = vcombine.low %v4452, %v4468
        %v4509 = vcombine.high %v4452, %v4468
        %v4511 = vunpack.c.l.s4 1934713408
        %v4512 = vunpack.c.0.s8 %v4511
        %v4513 = vlaneseq
        %v4514 = vshrl.u32 %v4513, 7
        %v4515 = vsub.s32 %v4512, %v4514
        %v4516 = vrot.slane %v4508, %v4515
        %v4518 = vunpack.c.l.s4 1934713408
        %v4519 = vunpack.c.0.s8 %v4518
        %v4520 = vlaneseq
        %v4521 = vshrl.u32 %v4520, 7
        %v4522 = vsub.s32 %v4519, %v4521
        %v4523 = vrot.slane %v4509, %v4522
        %v4524 = vcombine.low %v4459, %v4475
        %v4525 = vcombine.high %v4459, %v4475
        %v4527 = vunpack.c.l.s4 1934713408
        %v4528 = vunpack.c.0.s8 %v4527
        %v4529 = vlaneseq
        %v4530 = vshrl.u32 %v4529, 7
        %v4531 = vsub.s32 %v4528, %v4530
        %v4532 = vrot.slane %v4524, %v4531
        %v4534 = vunpack.c.l.s4 1934713408
        %v4535 = vunpack.c.0.s8 %v4534
        %v4536 = vlaneseq
        %v4537 = vshrl.u32 %v4536, 7
        %v4538 = vsub.s32 %v4535, %v4537
        %v4539 = vrot.slane %v4525, %v4538
        %v4540 = vcombine.low %v4484, %v4500
        %v4541 = vcombine.high %v4484, %v4500
        %v4543 = vunpack.c.l.s4 1934713408
        %v4544 = vunpack.c.0.s8 %v4543
        %v4545 = vlaneseq
        %v4546 = vshrl.u32 %v4545, 7
        %v4547 = vsub.s32 %v4544, %v4546
        %v4548 = vrot.slane %v4540, %v4547
        %v4550 = vunpack.c.l.s4 1934713408
        %v4551 = vunpack.c.0.s8 %v4550
        %v4552 = vlaneseq
        %v4553 = vshrl.u32 %v4552, 7
        %v4554 = vsub.s32 %v4551, %v4553
        %v4555 = vrot.slane %v4541, %v4554
        %v4556 = vcombine.low %v4491, %v4507
        %v4557 = vcombine.high %v4491, %v4507
        %v4559 = vunpack.c.l.s4 1934713408
        %v4560 = vunpack.c.0.s8 %v4559
        %v4561 = vlaneseq
        %v4562 = vshrl.u32 %v4561, 7
        %v4563 = vsub.s32 %v4560, %v4562
        %v4564 = vrot.slane %v4556, %v4563
        %v4566 = vunpack.c.l.s4 1934713408
        %v4567 = vunpack.c.0.s8 %v4566
        %v4568 = vlaneseq
        %v4569 = vshrl.u32 %v4568, 7
        %v4570 = vsub.s32 %v4567, %v4569
        %v4571 = vrot.slane %v4557, %v4570
        %v4572 = vcombine.low %v4516, %v4548
        %v4573 = vcombine.high %v4516, %v4548
        %v4574 = vcombine.low %v4523, %v4555
        %v4575 = vcombine.high %v4523, %v4555
        %v4576 = vcombine.low %v4532, %v4564
        %v4577 = vcombine.high %v4532, %v4564
        %v4578 = vcombine.low %v4539, %v4571
        %v4579 = vcombine.high %v4539, %v4571
        %v4580 = vcombine.low %v681, %v745
        %v4581 = vcombine.high %v681, %v745
        %v4583 = vunpack.c.l.s4 1983009808
        %v4584 = vunpack.c.0.s8 %v4583
        %v4585 = vlaneseq
        %v4586 = vshrl.u32 %v4585, 7
        %v4587 = vsub.s32 %v4584, %v4586
        %v4588 = vrot.slane %v4580, %v4587
        %v4590 = vunpack.c.l.s4 1983009808
        %v4591 = vunpack.c.0.s8 %v4590
        %v4592 = vlaneseq
        %v4593 = vshrl.u32 %v4592, 7
        %v4594 = vsub.s32 %v4591, %v4593
        %v4595 = vrot.slane %v4581, %v4594
        %v4596 = vcombine.low %v713, %v777
        %v4597 = vcombine.high %v713, %v777
        %v4599 = vunpack.c.l.s4 1983009808
        %v4600 = vunpack.c.0.s8 %v4599
        %v4601 = vlaneseq
        %v4602 = vshrl.u32 %v4601, 7
        %v4603 = vsub.s32 %v4600, %v4602
        %v4604 = vrot.slane %v4596, %v4603
        %v4606 = vunpack.c.l.s4 1983009808
        %v4607 = vunpack.c.0.s8 %v4606
        %v4608 = vlaneseq
        %v4609 = vshrl.u32 %v4608, 7
        %v4610 = vsub.s32 %v4607, %v4609
        %v4611 = vrot.slane %v4597, %v4610
        %v4612 = vcombine.low %v809, %v873
        %v4613 = vcombine.high %v809, %v873
        %v4615 = vunpack.c.l.s4 1983009808
        %v4616 = vunpack.c.0.s8 %v4615
        %v4617 = vlaneseq
        %v4618 = vshrl.u32 %v4617, 7
        %v4619 = vsub.s32 %v4616, %v4618
        %v4620 = vrot.slane %v4612, %v4619
        %v4622 = vunpack.c.l.s4 1983009808
        %v4623 = vunpack.c.0.s8 %v4622
        %v4624 = vlaneseq
        %v4625 = vshrl.u32 %v4624, 7
        %v4626 = vsub.s32 %v4623, %v4625
        %v4627 = vrot.slane %v4613, %v4626
        %v4628 = vcombine.low %v841, %v905
        %v4629 = vcombine.high %v841, %v905
        %v4631 = vunpack.c.l.s4 1983009808
        %v4632 = vunpack.c.0.s8 %v4631
        %v4633 = vlaneseq
        %v4634 = vshrl.u32 %v4633, 7
        %v4635 = vsub.s32 %v4632, %v4634
        %v4636 = vrot.slane %v4628, %v4635
        %v4638 = vunpack.c.l.s4 1983009808
        %v4639 = vunpack.c.0.s8 %v4638
        %v4640 = vlaneseq
        %v4641 = vshrl.u32 %v4640, 7
        %v4642 = vsub.s32 %v4639, %v4641
        %v4643 = vrot.slane %v4629, %v4642
        %v4644 = vcombine.low %v4588, %v4604
        %v4645 = vcombine.high %v4588, %v4604
        %v4647 = vunpack.c.l.s4 1934713408
        %v4648 = vunpack.c.0.s8 %v4647
        %v4649 = vlaneseq
        %v4650 = vshrl.u32 %v4649, 7
        %v4651 = vsub.s32 %v4648, %v4650
        %v4652 = vrot.slane %v4644, %v4651
        %v4654 = vunpack.c.l.s4 1934713408
        %v4655 = vunpack.c.0.s8 %v4654
        %v4656 = vlaneseq
        %v4657 = vshrl.u32 %v4656, 7
        %v4658 = vsub.s32 %v4655, %v4657
        %v4659 = vrot.slane %v4645, %v4658
        %v4660 = vcombine.low %v4595, %v4611
        %v4661 = vcombine.high %v4595, %v4611
        %v4663 = vunpack.c.l.s4 1934713408
        %v4664 = vunpack.c.0.s8 %v4663
        %v4665 = vlaneseq
        %v4666 = vshrl.u32 %v4665, 7
        %v4667 = vsub.s32 %v4664, %v4666
        %v4668 = vrot.slane %v4660, %v4667
        %v4670 = vunpack.c.l.s4 1934713408
        %v4671 = vunpack.c.0.s8 %v4670
        %v4672 = vlaneseq
        %v4673 = vshrl.u32 %v4672, 7
        %v4674 = vsub.s32 %v4671, %v4673
        %v4675 = vrot.slane %v4661, %v4674
        %v4676 = vcombine.low %v4620, %v4636
        %v4677 = vcombine.high %v4620, %v4636
        %v4679 = vunpack.c.l.s4 1934713408
        %v4680 = vunpack.c.0.s8 %v4679
        %v4681 = vlaneseq
        %v4682 = vshrl.u32 %v4681, 7
        %v4683 = vsub.s32 %v4680, %v4682
        %v4684 = vrot.slane %v4676, %v4683
        %v4686 = vunpack.c.l.s4 1934713408
        %v4687 = vunpack.c.0.s8 %v4686
        %v4688 = vlaneseq
        %v4689 = vshrl.u32 %v4688, 7
        %v4690 = vsub.s32 %v4687, %v4689
        %v4691 = vrot.slane %v4677, %v4690
        %v4692 = vcombine.low %v4627, %v4643
        %v4693 = vcombine.high %v4627, %v4643
        %v4695 = vunpack.c.l.s4 1934713408
        %v4696 = vunpack.c.0.s8 %v4695
        %v4697 = vlaneseq
        %v4698 = vshrl.u32 %v4697, 7
        %v4699 = vsub.s32 %v4696, %v4698
        %v4700 = vrot.slane %v4692, %v4699
        %v4702 = vunpack.c.l.s4 1934713408
        %v4703 = vunpack.c.0.s8 %v4702
        %v4704 = vlaneseq
        %v4705 = vshrl.u32 %v4704, 7
        %v4706 = vsub.s32 %v4703, %v4705
        %v4707 = vrot.slane %v4693, %v4706
        %v4708 = vcombine.low %v4652, %v4684
        %v4709 = vcombine.high %v4652, %v4684
        %v4710 = vcombine.low %v4659, %v4691
        %v4711 = vcombine.high %v4659, %v4691
        %v4712 = vcombine.low %v4668, %v4700
        %v4713 = vcombine.high %v4668, %v4700
        %v4714 = vcombine.low %v4675, %v4707
        %v4715 = vcombine.high %v4675, %v4707
        %v4716 = vcombine.low %v426, %v490
        %v4717 = vcombine.high %v426, %v490
        %v4719 = vunpack.c.l.s4 1983009808
        %v4720 = vunpack.c.0.s8 %v4719
        %v4721 = vlaneseq
        %v4722 = vshrl.u32 %v4721, 7
        %v4723 = vsub.s32 %v4720, %v4722
        %v4724 = vrot.slane %v4716, %v4723
        %v4726 = vunpack.c.l.s4 1983009808
        %v4727 = vunpack.c.0.s8 %v4726
        %v4728 = vlaneseq
        %v4729 = vshrl.u32 %v4728, 7
        %v4730 = vsub.s32 %v4727, %v4729
        %v4731 = vrot.slane %v4717, %v4730
        %v4732 = vcombine.low %v458, %v522
        %v4733 = vcombine.high %v458, %v522
        %v4735 = vunpack.c.l.s4 1983009808
        %v4736 = vunpack.c.0.s8 %v4735
        %v4737 = vlaneseq
        %v4738 = vshrl.u32 %v4737, 7
        %v4739 = vsub.s32 %v4736, %v4738
        %v4740 = vrot.slane %v4732, %v4739
        %v4742 = vunpack.c.l.s4 1983009808
        %v4743 = vunpack.c.0.s8 %v4742
        %v4744 = vlaneseq
        %v4745 = vshrl.u32 %v4744, 7
        %v4746 = vsub.s32 %v4743, %v4745
        %v4747 = vrot.slane %v4733, %v4746
        %v4748 = vcombine.low %v554, %v618
        %v4749 = vcombine.high %v554, %v618
        %v4751 = vunpack.c.l.s4 1983009808
        %v4752 = vunpack.c.0.s8 %v4751
        %v4753 = vlaneseq
        %v4754 = vshrl.u32 %v4753, 7
        %v4755 = vsub.s32 %v4752, %v4754
        %v4756 = vrot.slane %v4748, %v4755
        %v4758 = vunpack.c.l.s4 1983009808
        %v4759 = vunpack.c.0.s8 %v4758
        %v4760 = vlaneseq
        %v4761 = vshrl.u32 %v4760, 7
        %v4762 = vsub.s32 %v4759, %v4761
        %v4763 = vrot.slane %v4749, %v4762
        %v4764 = vcombine.low %v586, %v650
        %v4765 = vcombine.high %v586, %v650
        %v4767 = vunpack.c.l.s4 1983009808
        %v4768 = vunpack.c.0.s8 %v4767
        %v4769 = vlaneseq
        %v4770 = vshrl.u32 %v4769, 7
        %v4771 = vsub.s32 %v4768, %v4770
        %v4772 = vrot.slane %v4764, %v4771
        %v4774 = vunpack.c.l.s4 1983009808
        %v4775 = vunpack.c.0.s8 %v4774
        %v4776 = vlaneseq
        %v4777 = vshrl.u32 %v4776, 7
        %v4778 = vsub.s32 %v4775, %v4777
        %v4779 = vrot.slane %v4765, %v4778
        %v4780 = vcombine.low %v4724, %v4740
        %v4781 = vcombine.high %v4724, %v4740
        %v4783 = vunpack.c.l.s4 1934713408
        %v4784 = vunpack.c.0.s8 %v4783
        %v4785 = vlaneseq
        %v4786 = vshrl.u32 %v4785, 7
        %v4787 = vsub.s32 %v4784, %v4786
        %v4788 = vrot.slane %v4780, %v4787
        %v4790 = vunpack.c.l.s4 1934713408
        %v4791 = vunpack.c.0.s8 %v4790
        %v4792 = vlaneseq
        %v4793 = vshrl.u32 %v4792, 7
        %v4794 = vsub.s32 %v4791, %v4793
        %v4795 = vrot.slane %v4781, %v4794
        %v4796 = vcombine.low %v4731, %v4747
        %v4797 = vcombine.high %v4731, %v4747
        %v4799 = vunpack.c.l.s4 1934713408
        %v4800 = vunpack.c.0.s8 %v4799
        %v4801 = vlaneseq
        %v4802 = vshrl.u32 %v4801, 7
        %v4803 = vsub.s32 %v4800, %v4802
        %v4804 = vrot.slane %v4796, %v4803
        %v4806 = vunpack.c.l.s4 1934713408
        %v4807 = vunpack.c.0.s8 %v4806
        %v4808 = vlaneseq
        %v4809 = vshrl.u32 %v4808, 7
        %v4810 = vsub.s32 %v4807, %v4809
        %v4811 = vrot.slane %v4797, %v4810
        %v4812 = vcombine.low %v4756, %v4772
        %v4813 = vcombine.high %v4756, %v4772
        %v4815 = vunpack.c.l.s4 1934713408
        %v4816 = vunpack.c.0.s8 %v4815
        %v4817 = vlaneseq
        %v4818 = vshrl.u32 %v4817, 7
        %v4819 = vsub.s32 %v4816, %v4818
        %v4820 = vrot.slane %v4812, %v4819
        %v4822 = vunpack.c.l.s4 1934713408
        %v4823 = vunpack.c.0.s8 %v4822
        %v4824 = vlaneseq
        %v4825 = vshrl.u32 %v4824, 7
        %v4826 = vsub.s32 %v4823, %v4825
        %v4827 = vrot.slane %v4813, %v4826
        %v4828 = vcombine.low %v4763, %v4779
        %v4829 = vcombine.high %v4763, %v4779
        %v4831 = vunpack.c.l.s4 1934713408
        %v4832 = vunpack.c.0.s8 %v4831
        %v4833 = vlaneseq
        %v4834 = vshrl.u32 %v4833, 7
        %v4835 = vsub.s32 %v4832, %v4834
        %v4836 = vrot.slane %v4828, %v4835
        %v4838 = vunpack.c.l.s4 1934713408
        %v4839 = vunpack.c.0.s8 %v4838
        %v4840 = vlaneseq
        %v4841 = vshrl.u32 %v4840, 7
        %v4842 = vsub.s32 %v4839, %v4841
        %v4843 = vrot.slane %v4829, %v4842
        %v4844 = vcombine.low %v4788, %v4820
        %v4845 = vcombine.high %v4788, %v4820
        %v4846 = vcombine.low %v4795, %v4827
        %v4847 = vcombine.high %v4795, %v4827
        %v4848 = vcombine.low %v4804, %v4836
        %v4849 = vcombine.high %v4804, %v4836
        %v4850 = vcombine.low %v4811, %v4843
        %v4851 = vcombine.high %v4811, %v4843
        %v4852 = vcombine.low %v682, %v746
        %v4853 = vcombine.high %v682, %v746
        %v4855 = vunpack.c.l.s4 1983009808
        %v4856 = vunpack.c.0.s8 %v4855
        %v4857 = vlaneseq
        %v4858 = vshrl.u32 %v4857, 7
        %v4859 = vsub.s32 %v4856, %v4858
        %v4860 = vrot.slane %v4852, %v4859
        %v4862 = vunpack.c.l.s4 1983009808
        %v4863 = vunpack.c.0.s8 %v4862
        %v4864 = vlaneseq
        %v4865 = vshrl.u32 %v4864, 7
        %v4866 = vsub.s32 %v4863, %v4865
        %v4867 = vrot.slane %v4853, %v4866
        %v4868 = vcombine.low %v714, %v778
        %v4869 = vcombine.high %v714, %v778
        %v4871 = vunpack.c.l.s4 1983009808
        %v4872 = vunpack.c.0.s8 %v4871
        %v4873 = vlaneseq
        %v4874 = vshrl.u32 %v4873, 7
        %v4875 = vsub.s32 %v4872, %v4874
        %v4876 = vrot.slane %v4868, %v4875
        %v4878 = vunpack.c.l.s4 1983009808
        %v4879 = vunpack.c.0.s8 %v4878
        %v4880 = vlaneseq
        %v4881 = vshrl.u32 %v4880, 7
        %v4882 = vsub.s32 %v4879, %v4881
        %v4883 = vrot.slane %v4869, %v4882
        %v4884 = vcombine.low %v810, %v874
        %v4885 = vcombine.high %v810, %v874
        %v4887 = vunpack.c.l.s4 1983009808
        %v4888 = vunpack.c.0.s8 %v4887
        %v4889 = vlaneseq
        %v4890 = vshrl.u32 %v4889, 7
        %v4891 = vsub.s32 %v4888, %v4890
        %v4892 = vrot.slane %v4884, %v4891
        %v4894 = vunpack.c.l.s4 1983009808
        %v4895 = vunpack.c.0.s8 %v4894
        %v4896 = vlaneseq
        %v4897 = vshrl.u32 %v4896, 7
        %v4898 = vsub.s32 %v4895, %v4897
        %v4899 = vrot.slane %v4885, %v4898
        %v4900 = vcombine.low %v842, %v906
        %v4901 = vcombine.high %v842, %v906
        %v4903 = vunpack.c.l.s4 1983009808
        %v4904 = vunpack.c.0.s8 %v4903
        %v4905 = vlaneseq
        %v4906 = vshrl.u32 %v4905, 7
        %v4907 = vsub.s32 %v4904, %v4906
        %v4908 = vrot.slane %v4900, %v4907
        %v4910 = vunpack.c.l.s4 1983009808
        %v4911 = vunpack.c.0.s8 %v4910
        %v4912 = vlaneseq
        %v4913 = vshrl.u32 %v4912, 7
        %v4914 = vsub.s32 %v4911, %v4913
        %v4915 = vrot.slane %v4901, %v4914
        %v4916 = vcombine.low %v4860, %v4876
        %v4917 = vcombine.high %v4860, %v4876
        %v4919 = vunpack.c.l.s4 1934713408
        %v4920 = vunpack.c.0.s8 %v4919
        %v4921 = vlaneseq
        %v4922 = vshrl.u32 %v4921, 7
        %v4923 = vsub.s32 %v4920, %v4922
        %v4924 = vrot.slane %v4916, %v4923
        %v4926 = vunpack.c.l.s4 1934713408
        %v4927 = vunpack.c.0.s8 %v4926
        %v4928 = vlaneseq
        %v4929 = vshrl.u32 %v4928, 7
        %v4930 = vsub.s32 %v4927, %v4929
        %v4931 = vrot.slane %v4917, %v4930
        %v4932 = vcombine.low %v4867, %v4883
        %v4933 = vcombine.high %v4867, %v4883
        %v4935 = vunpack.c.l.s4 1934713408
        %v4936 = vunpack.c.0.s8 %v4935
        %v4937 = vlaneseq
        %v4938 = vshrl.u32 %v4937, 7
        %v4939 = vsub.s32 %v4936, %v4938
        %v4940 = vrot.slane %v4932, %v4939
        %v4942 = vunpack.c.l.s4 1934713408
        %v4943 = vunpack.c.0.s8 %v4942
        %v4944 = vlaneseq
        %v4945 = vshrl.u32 %v4944, 7
        %v4946 = vsub.s32 %v4943, %v4945
        %v4947 = vrot.slane %v4933, %v4946
        %v4948 = vcombine.low %v4892, %v4908
        %v4949 = vcombine.high %v4892, %v4908
        %v4951 = vunpack.c.l.s4 1934713408
        %v4952 = vunpack.c.0.s8 %v4951
        %v4953 = vlaneseq
        %v4954 = vshrl.u32 %v4953, 7
        %v4955 = vsub.s32 %v4952, %v4954
        %v4956 = vrot.slane %v4948, %v4955
        %v4958 = vunpack.c.l.s4 1934713408
        %v4959 = vunpack.c.0.s8 %v4958
        %v4960 = vlaneseq
        %v4961 = vshrl.u32 %v4960, 7
        %v4962 = vsub.s32 %v4959, %v4961
        %v4963 = vrot.slane %v4949, %v4962
        %v4964 = vcombine.low %v4899, %v4915
        %v4965 = vcombine.high %v4899, %v4915
        %v4967 = vunpack.c.l.s4 1934713408
        %v4968 = vunpack.c.0.s8 %v4967
        %v4969 = vlaneseq
        %v4970 = vshrl.u32 %v4969, 7
        %v4971 = vsub.s32 %v4968, %v4970
        %v4972 = vrot.slane %v4964, %v4971
        %v4974 = vunpack.c.l.s4 1934713408
        %v4975 = vunpack.c.0.s8 %v4974
        %v4976 = vlaneseq
        %v4977 = vshrl.u32 %v4976, 7
        %v4978 = vsub.s32 %v4975, %v4977
        %v4979 = vrot.slane %v4965, %v4978
        %v4980 = vcombine.low %v4924, %v4956
        %v4981 = vcombine.high %v4924, %v4956
        %v4982 = vcombine.low %v4931, %v4963
        %v4983 = vcombine.high %v4931, %v4963
        %v4984 = vcombine.low %v4940, %v4972
        %v4985 = vcombine.high %v4940, %v4972
        %v4986 = vcombine.low %v4947, %v4979
        %v4987 = vcombine.high %v4947, %v4979
        %v4988 = vcombine.low %v427, %v491
        %v4989 = vcombine.high %v427, %v491
        %v4991 = vunpack.c.l.s4 1983009808
        %v4992 = vunpack.c.0.s8 %v4991
        %v4993 = vlaneseq
        %v4994 = vshrl.u32 %v4993, 7
        %v4995 = vsub.s32 %v4992, %v4994
        %v4996 = vrot.slane %v4988, %v4995
        %v4998 = vunpack.c.l.s4 1983009808
        %v4999 = vunpack.c.0.s8 %v4998
        %v5000 = vlaneseq
        %v5001 = vshrl.u32 %v5000, 7
        %v5002 = vsub.s32 %v4999, %v5001
        %v5003 = vrot.slane %v4989, %v5002
        %v5004 = vcombine.low %v459, %v523
        %v5005 = vcombine.high %v459, %v523
        %v5007 = vunpack.c.l.s4 1983009808
        %v5008 = vunpack.c.0.s8 %v5007
        %v5009 = vlaneseq
        %v5010 = vshrl.u32 %v5009, 7
        %v5011 = vsub.s32 %v5008, %v5010
        %v5012 = vrot.slane %v5004, %v5011
        %v5014 = vunpack.c.l.s4 1983009808
        %v5015 = vunpack.c.0.s8 %v5014
        %v5016 = vlaneseq
        %v5017 = vshrl.u32 %v5016, 7
        %v5018 = vsub.s32 %v5015, %v5017
        %v5019 = vrot.slane %v5005, %v5018
        %v5020 = vcombine.low %v555, %v619
        %v5021 = vcombine.high %v555, %v619
        %v5023 = vunpack.c.l.s4 1983009808
        %v5024 = vunpack.c.0.s8 %v5023
        %v5025 = vlaneseq
        %v5026 = vshrl.u32 %v5025, 7
        %v5027 = vsub.s32 %v5024, %v5026
        %v5028 = vrot.slane %v5020, %v5027
        %v5030 = vunpack.c.l.s4 1983009808
        %v5031 = vunpack.c.0.s8 %v5030
        %v5032 = vlaneseq
        %v5033 = vshrl.u32 %v5032, 7
        %v5034 = vsub.s32 %v5031, %v5033
        %v5035 = vrot.slane %v5021, %v5034
        %v5036 = vcombine.low %v587, %v651
        %v5037 = vcombine.high %v587, %v651
        %v5039 = vunpack.c.l.s4 1983009808
        %v5040 = vunpack.c.0.s8 %v5039
        %v5041 = vlaneseq
        %v5042 = vshrl.u32 %v5041, 7
        %v5043 = vsub.s32 %v5040, %v5042
        %v5044 = vrot.slane %v5036, %v5043
        %v5046 = vunpack.c.l.s4 1983009808
        %v5047 = vunpack.c.0.s8 %v5046
        %v5048 = vlaneseq
        %v5049 = vshrl.u32 %v5048, 7
        %v5050 = vsub.s32 %v5047, %v5049
        %v5051 = vrot.slane %v5037, %v5050
        %v5052 = vcombine.low %v4996, %v5012
        %v5053 = vcombine.high %v4996, %v5012
        %v5055 = vunpack.c.l.s4 1934713408
        %v5056 = vunpack.c.0.s8 %v5055
        %v5057 = vlaneseq
        %v5058 = vshrl.u32 %v5057, 7
        %v5059 = vsub.s32 %v5056, %v5058
        %v5060 = vrot.slane %v5052, %v5059
        %v5062 = vunpack.c.l.s4 1934713408
        %v5063 = vunpack.c.0.s8 %v5062
        %v5064 = vlaneseq
        %v5065 = vshrl.u32 %v5064, 7
        %v5066 = vsub.s32 %v5063, %v5065
        %v5067 = vrot.slane %v5053, %v5066
        %v5068 = vcombine.low %v5003, %v5019
        %v5069 = vcombine.high %v5003, %v5019
        %v5071 = vunpack.c.l.s4 1934713408
        %v5072 = vunpack.c.0.s8 %v5071
        %v5073 = vlaneseq
        %v5074 = vshrl.u32 %v5073, 7
        %v5075 = vsub.s32 %v5072, %v5074
        %v5076 = vrot.slane %v5068, %v5075
        %v5078 = vunpack.c.l.s4 1934713408
        %v5079 = vunpack.c.0.s8 %v5078
        %v5080 = vlaneseq
        %v5081 = vshrl.u32 %v5080, 7
        %v5082 = vsub.s32 %v5079, %v5081
        %v5083 = vrot.slane %v5069, %v5082
        %v5084 = vcombine.low %v5028, %v5044
        %v5085 = vcombine.high %v5028, %v5044
        %v5087 = vunpack.c.l.s4 1934713408
        %v5088 = vunpack.c.0.s8 %v5087
        %v5089 = vlaneseq
        %v5090 = vshrl.u32 %v5089, 7
        %v5091 = vsub.s32 %v5088, %v5090
        %v5092 = vrot.slane %v5084, %v5091
        %v5094 = vunpack.c.l.s4 1934713408
        %v5095 = vunpack.c.0.s8 %v5094
        %v5096 = vlaneseq
        %v5097 = vshrl.u32 %v5096, 7
        %v5098 = vsub.s32 %v5095, %v5097
        %v5099 = vrot.slane %v5085, %v5098
        %v5100 = vcombine.low %v5035, %v5051
        %v5101 = vcombine.high %v5035, %v5051
        %v5103 = vunpack.c.l.s4 1934713408
        %v5104 = vunpack.c.0.s8 %v5103
        %v5105 = vlaneseq
        %v5106 = vshrl.u32 %v5105, 7
        %v5107 = vsub.s32 %v5104, %v5106
        %v5108 = vrot.slane %v5100, %v5107
        %v5110 = vunpack.c.l.s4 1934713408
        %v5111 = vunpack.c.0.s8 %v5110
        %v5112 = vlaneseq
        %v5113 = vshrl.u32 %v5112, 7
        %v5114 = vsub.s32 %v5111, %v5113
        %v5115 = vrot.slane %v5101, %v5114
        %v5116 = vcombine.low %v5060, %v5092
        %v5117 = vcombine.high %v5060, %v5092
        %v5118 = vcombine.low %v5067, %v5099
        %v5119 = vcombine.high %v5067, %v5099
        %v5120 = vcombine.low %v5076, %v5108
        %v5121 = vcombine.high %v5076, %v5108
        %v5122 = vcombine.low %v5083, %v5115
        %v5123 = vcombine.high %v5083, %v5115
        %v5124 = vcombine.low %v683, %v747
        %v5125 = vcombine.high %v683, %v747
        %v5127 = vunpack.c.l.s4 1983009808
        %v5128 = vunpack.c.0.s8 %v5127
        %v5129 = vlaneseq
        %v5130 = vshrl.u32 %v5129, 7
        %v5131 = vsub.s32 %v5128, %v5130
        %v5132 = vrot.slane %v5124, %v5131
        %v5134 = vunpack.c.l.s4 1983009808
        %v5135 = vunpack.c.0.s8 %v5134
        %v5136 = vlaneseq
        %v5137 = vshrl.u32 %v5136, 7
        %v5138 = vsub.s32 %v5135, %v5137
        %v5139 = vrot.slane %v5125, %v5138
        %v5140 = vcombine.low %v715, %v779
        %v5141 = vcombine.high %v715, %v779
        %v5143 = vunpack.c.l.s4 1983009808
        %v5144 = vunpack.c.0.s8 %v5143
        %v5145 = vlaneseq
        %v5146 = vshrl.u32 %v5145, 7
        %v5147 = vsub.s32 %v5144, %v5146
        %v5148 = vrot.slane %v5140, %v5147
        %v5150 = vunpack.c.l.s4 1983009808
        %v5151 = vunpack.c.0.s8 %v5150
        %v5152 = vlaneseq
        %v5153 = vshrl.u32 %v5152, 7
        %v5154 = vsub.s32 %v5151, %v5153
        %v5155 = vrot.slane %v5141, %v5154
        %v5156 = vcombine.low %v811, %v875
        %v5157 = vcombine.high %v811, %v875
        %v5159 = vunpack.c.l.s4 1983009808
        %v5160 = vunpack.c.0.s8 %v5159
        %v5161 = vlaneseq
        %v5162 = vshrl.u32 %v5161, 7
        %v5163 = vsub.s32 %v5160, %v5162
        %v5164 = vrot.slane %v5156, %v5163
        %v5166 = vunpack.c.l.s4 1983009808
        %v5167 = vunpack.c.0.s8 %v5166
        %v5168 = vlaneseq
        %v5169 = vshrl.u32 %v5168, 7
        %v5170 = vsub.s32 %v5167, %v5169
        %v5171 = vrot.slane %v5157, %v5170
        %v5172 = vcombine.low %v843, %v907
        %v5173 = vcombine.high %v843, %v907
        %v5175 = vunpack.c.l.s4 1983009808
        %v5176 = vunpack.c.0.s8 %v5175
        %v5177 = vlaneseq
        %v5178 = vshrl.u32 %v5177, 7
        %v5179 = vsub.s32 %v5176, %v5178
        %v5180 = vrot.slane %v5172, %v5179
        %v5182 = vunpack.c.l.s4 1983009808
        %v5183 = vunpack.c.0.s8 %v5182
        %v5184 = vlaneseq
        %v5185 = vshrl.u32 %v5184, 7
        %v5186 = vsub.s32 %v5183, %v5185
        %v5187 = vrot.slane %v5173, %v5186
        %v5188 = vcombine.low %v5132, %v5148
        %v5189 = vcombine.high %v5132, %v5148
        %v5191 = vunpack.c.l.s4 1934713408
        %v5192 = vunpack.c.0.s8 %v5191
        %v5193 = vlaneseq
        %v5194 = vshrl.u32 %v5193, 7
        %v5195 = vsub.s32 %v5192, %v5194
        %v5196 = vrot.slane %v5188, %v5195
        %v5198 = vunpack.c.l.s4 1934713408
        %v5199 = vunpack.c.0.s8 %v5198
        %v5200 = vlaneseq
        %v5201 = vshrl.u32 %v5200, 7
        %v5202 = vsub.s32 %v5199, %v5201
        %v5203 = vrot.slane %v5189, %v5202
        %v5204 = vcombine.low %v5139, %v5155
        %v5205 = vcombine.high %v5139, %v5155
        %v5207 = vunpack.c.l.s4 1934713408
        %v5208 = vunpack.c.0.s8 %v5207
        %v5209 = vlaneseq
        %v5210 = vshrl.u32 %v5209, 7
        %v5211 = vsub.s32 %v5208, %v5210
        %v5212 = vrot.slane %v5204, %v5211
        %v5214 = vunpack.c.l.s4 1934713408
        %v5215 = vunpack.c.0.s8 %v5214
        %v5216 = vlaneseq
        %v5217 = vshrl.u32 %v5216, 7
        %v5218 = vsub.s32 %v5215, %v5217
        %v5219 = vrot.slane %v5205, %v5218
        %v5220 = vcombine.low %v5164, %v5180
        %v5221 = vcombine.high %v5164, %v5180
        %v5223 = vunpack.c.l.s4 1934713408
        %v5224 = vunpack.c.0.s8 %v5223
        %v5225 = vlaneseq
        %v5226 = vshrl.u32 %v5225, 7
        %v5227 = vsub.s32 %v5224, %v5226
        %v5228 = vrot.slane %v5220, %v5227
        %v5230 = vunpack.c.l.s4 1934713408
        %v5231 = vunpack.c.0.s8 %v5230
        %v5232 = vlaneseq
        %v5233 = vshrl.u32 %v5232, 7
        %v5234 = vsub.s32 %v5231, %v5233
        %v5235 = vrot.slane %v5221, %v5234
        %v5236 = vcombine.low %v5171, %v5187
        %v5237 = vcombine.high %v5171, %v5187
        %v5239 = vunpack.c.l.s4 1934713408
        %v5240 = vunpack.c.0.s8 %v5239
        %v5241 = vlaneseq
        %v5242 = vshrl.u32 %v5241, 7
        %v5243 = vsub.s32 %v5240, %v5242
        %v5244 = vrot.slane %v5236, %v5243
        %v5246 = vunpack.c.l.s4 1934713408
        %v5247 = vunpack.c.0.s8 %v5246
        %v5248 = vlaneseq
        %v5249 = vshrl.u32 %v5248, 7
        %v5250 = vsub.s32 %v5247, %v5249
        %v5251 = vrot.slane %v5237, %v5250
        %v5252 = vcombine.low %v5196, %v5228
        %v5253 = vcombine.high %v5196, %v5228
        %v5254 = vcombine.low %v5203, %v5235
        %v5255 = vcombine.high %v5203, %v5235
        %v5256 = vcombine.low %v5212, %v5244
        %v5257 = vcombine.high %v5212, %v5244
        %v5258 = vcombine.low %v5219, %v5251
        %v5259 = vcombine.high %v5219, %v5251
        %5262 = vrot.lane.b32.xlu0 %v1037, 2
        %v5263 = vpop.permute.xlu0 %5262
        %5264 = vrot.lane.b32.xlu0 %v1173, 2
        %v5265 = vpop.permute.xlu0 %5264
        %5270 = vrot.lane.b32.xlu0 %v1038, 4
        %v5271 = vpop.permute.xlu0 %5270
        %5272 = vrot.lane.b32.xlu0 %v1174, 4
        %v5273 = vpop.permute.xlu0 %5272
        %5278 = vrot.lane.b32.xlu0 %v1039, 6
        %v5279 = vpop.permute.xlu0 %5278
        %5280 = vrot.lane.b32.xlu0 %v1175, 6
        %v5281 = vpop.permute.xlu0 %5280
        %5286 = vrot.lane.b32.xlu0 %v1040, 8
        %v5287 = vpop.permute.xlu0 %5286
        %5288 = vrot.lane.b32.xlu0 %v1176, 8
        %v5289 = vpop.permute.xlu0 %5288
        %5294 = vrot.lane.b32.xlu0 %v1041, 10
        %v5295 = vpop.permute.xlu0 %5294
        %5296 = vrot.lane.b32.xlu0 %v1177, 10
        %v5297 = vpop.permute.xlu0 %5296
        %5302 = vrot.lane.b32.xlu0 %v1042, 12
        %v5303 = vpop.permute.xlu0 %5302
        %5304 = vrot.lane.b32.xlu0 %v1178, 12
        %v5305 = vpop.permute.xlu0 %5304
        %5310 = vrot.lane.b32.xlu0 %v1043, 14
        %v5311 = vpop.permute.xlu0 %5310
        %5312 = vrot.lane.b32.xlu0 %v1179, 14
        %v5313 = vpop.permute.xlu0 %5312
        %5318 = vrot.lane.b32.xlu0 %v1308, 16
        %v5319 = vpop.permute.xlu0 %5318
        %5320 = vrot.lane.b32.xlu0 %v1444, 16
        %v5321 = vpop.permute.xlu0 %5320
        %5326 = vrot.lane.b32.xlu0 %v1309, 18
        %v5327 = vpop.permute.xlu0 %5326
        %5328 = vrot.lane.b32.xlu0 %v1445, 18
        %v5329 = vpop.permute.xlu0 %5328
        %5334 = vrot.lane.b32.xlu0 %v1310, 20
        %v5335 = vpop.permute.xlu0 %5334
        %5336 = vrot.lane.b32.xlu0 %v1446, 20
        %v5337 = vpop.permute.xlu0 %5336
        %5342 = vrot.lane.b32.xlu0 %v1311, 22
        %v5343 = vpop.permute.xlu0 %5342
        %5344 = vrot.lane.b32.xlu0 %v1447, 22
        %v5345 = vpop.permute.xlu0 %5344
        %5350 = vrot.lane.b32.xlu0 %v1312, 24
        %v5351 = vpop.permute.xlu0 %5350
        %5352 = vrot.lane.b32.xlu0 %v1448, 24
        %v5353 = vpop.permute.xlu0 %5352
        %5358 = vrot.lane.b32.xlu0 %v1313, 26
        %v5359 = vpop.permute.xlu0 %5358
        %5360 = vrot.lane.b32.xlu0 %v1449, 26
        %v5361 = vpop.permute.xlu0 %5360
        %5366 = vrot.lane.b32.xlu0 %v1314, 28
        %v5367 = vpop.permute.xlu0 %5366
        %5368 = vrot.lane.b32.xlu0 %v1450, 28
        %v5369 = vpop.permute.xlu0 %5368
        %5374 = vrot.lane.b32.xlu0 %v1315, 30
        %v5375 = vpop.permute.xlu0 %5374
        %5376 = vrot.lane.b32.xlu0 %v1451, 30
        %v5377 = vpop.permute.xlu0 %5376
        %5382 = vrot.lane.b32.xlu0 %v1580, 32
        %v5383 = vpop.permute.xlu0 %5382
        %5384 = vrot.lane.b32.xlu0 %v1716, 32
        %v5385 = vpop.permute.xlu0 %5384
        %5390 = vrot.lane.b32.xlu0 %v1581, 34
        %v5391 = vpop.permute.xlu0 %5390
        %5392 = vrot.lane.b32.xlu0 %v1717, 34
        %v5393 = vpop.permute.xlu0 %5392
        %5398 = vrot.lane.b32.xlu0 %v1582, 36
        %v5399 = vpop.permute.xlu0 %5398
        %5400 = vrot.lane.b32.xlu0 %v1718, 36
        %v5401 = vpop.permute.xlu0 %5400
        %5406 = vrot.lane.b32.xlu0 %v1583, 38
        %v5407 = vpop.permute.xlu0 %5406
        %5408 = vrot.lane.b32.xlu0 %v1719, 38
        %v5409 = vpop.permute.xlu0 %5408
        %5414 = vrot.lane.b32.xlu0 %v1584, 40
        %v5415 = vpop.permute.xlu0 %5414
        %5416 = vrot.lane.b32.xlu0 %v1720, 40
        %v5417 = vpop.permute.xlu0 %5416
        %5422 = vrot.lane.b32.xlu0 %v1585, 42
        %v5423 = vpop.permute.xlu0 %5422
        %5424 = vrot.lane.b32.xlu0 %v1721, 42
        %v5425 = vpop.permute.xlu0 %5424
        %5430 = vrot.lane.b32.xlu0 %v1586, 44
        %v5431 = vpop.permute.xlu0 %5430
        %5432 = vrot.lane.b32.xlu0 %v1722, 44
        %v5433 = vpop.permute.xlu0 %5432
        %5438 = vrot.lane.b32.xlu0 %v1587, 46
        %v5439 = vpop.permute.xlu0 %5438
        %5440 = vrot.lane.b32.xlu0 %v1723, 46
        %v5441 = vpop.permute.xlu0 %5440
        %5446 = vrot.lane.b32.xlu0 %v1852, 48
        %v5447 = vpop.permute.xlu0 %5446
        %5448 = vrot.lane.b32.xlu0 %v1988, 48
        %v5449 = vpop.permute.xlu0 %5448
        %5454 = vrot.lane.b32.xlu0 %v1853, 50
        %v5455 = vpop.permute.xlu0 %5454
        %5456 = vrot.lane.b32.xlu0 %v1989, 50
        %v5457 = vpop.permute.xlu0 %5456
        %5462 = vrot.lane.b32.xlu0 %v1854, 52
        %v5463 = vpop.permute.xlu0 %5462
        %5464 = vrot.lane.b32.xlu0 %v1990, 52
        %v5465 = vpop.permute.xlu0 %5464
        %5470 = vrot.lane.b32.xlu0 %v1855, 54
        %v5471 = vpop.permute.xlu0 %5470
        %5472 = vrot.lane.b32.xlu0 %v1991, 54
        %v5473 = vpop.permute.xlu0 %5472
        %5478 = vrot.lane.b32.xlu0 %v1856, 56
        %v5479 = vpop.permute.xlu0 %5478
        %5480 = vrot.lane.b32.xlu0 %v1992, 56
        %v5481 = vpop.permute.xlu0 %5480
        %5486 = vrot.lane.b32.xlu0 %v1857, 58
        %v5487 = vpop.permute.xlu0 %5486
        %5488 = vrot.lane.b32.xlu0 %v1993, 58
        %v5489 = vpop.permute.xlu0 %5488
        %5494 = vrot.lane.b32.xlu0 %v1858, 60
        %v5495 = vpop.permute.xlu0 %5494
        %5496 = vrot.lane.b32.xlu0 %v1994, 60
        %v5497 = vpop.permute.xlu0 %5496
        %5502 = vrot.lane.b32.xlu0 %v1859, 62
        %v5503 = vpop.permute.xlu0 %5502
        %5504 = vrot.lane.b32.xlu0 %v1995, 62
        %v5505 = vpop.permute.xlu0 %5504
        %5510 = vrot.lane.b32.xlu0 %v2124, 64
        %v5511 = vpop.permute.xlu0 %5510
        %5512 = vrot.lane.b32.xlu0 %v2260, 64
        %v5513 = vpop.permute.xlu0 %5512
        %5518 = vrot.lane.b32.xlu0 %v2125, 66
        %v5519 = vpop.permute.xlu0 %5518
        %5520 = vrot.lane.b32.xlu0 %v2261, 66
        %v5521 = vpop.permute.xlu0 %5520
        %5526 = vrot.lane.b32.xlu0 %v2126, 68
        %v5527 = vpop.permute.xlu0 %5526
        %5528 = vrot.lane.b32.xlu0 %v2262, 68
        %v5529 = vpop.permute.xlu0 %5528
        %5534 = vrot.lane.b32.xlu0 %v2127, 70
        %v5535 = vpop.permute.xlu0 %5534
        %5536 = vrot.lane.b32.xlu0 %v2263, 70
        %v5537 = vpop.permute.xlu0 %5536
        %5542 = vrot.lane.b32.xlu0 %v2128, 72
        %v5543 = vpop.permute.xlu0 %5542
        %5544 = vrot.lane.b32.xlu0 %v2264, 72
        %v5545 = vpop.permute.xlu0 %5544
        %5550 = vrot.lane.b32.xlu0 %v2129, 74
        %v5551 = vpop.permute.xlu0 %5550
        %5552 = vrot.lane.b32.xlu0 %v2265, 74
        %v5553 = vpop.permute.xlu0 %5552
        %5558 = vrot.lane.b32.xlu0 %v2130, 76
        %v5559 = vpop.permute.xlu0 %5558
        %5560 = vrot.lane.b32.xlu0 %v2266, 76
        %v5561 = vpop.permute.xlu0 %5560
        %5566 = vrot.lane.b32.xlu0 %v2131, 78
        %v5567 = vpop.permute.xlu0 %5566
        %5568 = vrot.lane.b32.xlu0 %v2267, 78
        %v5569 = vpop.permute.xlu0 %5568
        %5574 = vrot.lane.b32.xlu0 %v2396, 80
        %v5575 = vpop.permute.xlu0 %5574
        %5576 = vrot.lane.b32.xlu0 %v2532, 80
        %v5577 = vpop.permute.xlu0 %5576
        %5582 = vrot.lane.b32.xlu0 %v2397, 82
        %v5583 = vpop.permute.xlu0 %5582
        %5584 = vrot.lane.b32.xlu0 %v2533, 82
        %v5585 = vpop.permute.xlu0 %5584
        %5590 = vrot.lane.b32.xlu0 %v2398, 84
        %v5591 = vpop.permute.xlu0 %5590
        %5592 = vrot.lane.b32.xlu0 %v2534, 84
        %v5593 = vpop.permute.xlu0 %5592
        %5598 = vrot.lane.b32.xlu0 %v2399, 86
        %v5599 = vpop.permute.xlu0 %5598
        %5600 = vrot.lane.b32.xlu0 %v2535, 86
        %v5601 = vpop.permute.xlu0 %5600
        %5606 = vrot.lane.b32.xlu0 %v2400, 88
        %v5607 = vpop.permute.xlu0 %5606
        %5608 = vrot.lane.b32.xlu0 %v2536, 88
        %v5609 = vpop.permute.xlu0 %5608
        %5614 = vrot.lane.b32.xlu0 %v2401, 90
        %v5615 = vpop.permute.xlu0 %5614
        %5616 = vrot.lane.b32.xlu0 %v2537, 90
        %v5617 = vpop.permute.xlu0 %5616
        %5622 = vrot.lane.b32.xlu0 %v2402, 92
        %v5623 = vpop.permute.xlu0 %5622
        %5624 = vrot.lane.b32.xlu0 %v2538, 92
        %v5625 = vpop.permute.xlu0 %5624
        %5630 = vrot.lane.b32.xlu0 %v2403, 94
        %v5631 = vpop.permute.xlu0 %5630
        %5632 = vrot.lane.b32.xlu0 %v2539, 94
        %v5633 = vpop.permute.xlu0 %5632
        %5638 = vrot.lane.b32.xlu0 %v2668, 96
        %v5639 = vpop.permute.xlu0 %5638
        %5640 = vrot.lane.b32.xlu0 %v2804, 96
        %v5641 = vpop.permute.xlu0 %5640
        %5646 = vrot.lane.b32.xlu0 %v2669, 98
        %v5647 = vpop.permute.xlu0 %5646
        %5648 = vrot.lane.b32.xlu0 %v2805, 98
        %v5649 = vpop.permute.xlu0 %5648
        %5654 = vrot.lane.b32.xlu0 %v2670, 100
        %v5655 = vpop.permute.xlu0 %5654
        %5656 = vrot.lane.b32.xlu0 %v2806, 100
        %v5657 = vpop.permute.xlu0 %5656
        %5662 = vrot.lane.b32.xlu0 %v2671, 102
        %v5663 = vpop.permute.xlu0 %5662
        %5664 = vrot.lane.b32.xlu0 %v2807, 102
        %v5665 = vpop.permute.xlu0 %5664
        %5670 = vrot.lane.b32.xlu0 %v2672, 104
        %v5671 = vpop.permute.xlu0 %5670
        %5672 = vrot.lane.b32.xlu0 %v2808, 104
        %v5673 = vpop.permute.xlu0 %5672
        %5678 = vrot.lane.b32.xlu0 %v2673, 106
        %v5679 = vpop.permute.xlu0 %5678
        %5680 = vrot.lane.b32.xlu0 %v2809, 106
        %v5681 = vpop.permute.xlu0 %5680
        %5686 = vrot.lane.b32.xlu0 %v2674, 108
        %v5687 = vpop.permute.xlu0 %5686
        %5688 = vrot.lane.b32.xlu0 %v2810, 108
        %v5689 = vpop.permute.xlu0 %5688
        %5694 = vrot.lane.b32.xlu0 %v2675, 110
        %v5695 = vpop.permute.xlu0 %5694
        %5696 = vrot.lane.b32.xlu0 %v2811, 110
        %v5697 = vpop.permute.xlu0 %5696
        %5702 = vrot.lane.b32.xlu0 %v2940, 112
        %v5703 = vpop.permute.xlu0 %5702
        %5704 = vrot.lane.b32.xlu0 %v3076, 112
        %v5705 = vpop.permute.xlu0 %5704
        %5710 = vrot.lane.b32.xlu0 %v2941, 114
        %v5711 = vpop.permute.xlu0 %5710
        %5712 = vrot.lane.b32.xlu0 %v3077, 114
        %v5713 = vpop.permute.xlu0 %5712
        %5718 = vrot.lane.b32.xlu0 %v2942, 116
        %v5719 = vpop.permute.xlu0 %5718
        %5720 = vrot.lane.b32.xlu0 %v3078, 116
        %v5721 = vpop.permute.xlu0 %5720
        %5726 = vrot.lane.b32.xlu0 %v2943, 118
        %v5727 = vpop.permute.xlu0 %5726
        %5728 = vrot.lane.b32.xlu0 %v3079, 118
        %v5729 = vpop.permute.xlu0 %5728
        %5734 = vrot.lane.b32.xlu0 %v2944, 120
        %v5735 = vpop.permute.xlu0 %5734
        %5736 = vrot.lane.b32.xlu0 %v3080, 120
        %v5737 = vpop.permute.xlu0 %5736
        %5742 = vrot.lane.b32.xlu0 %v2945, 122
        %v5743 = vpop.permute.xlu0 %5742
        %5744 = vrot.lane.b32.xlu0 %v3081, 122
        %v5745 = vpop.permute.xlu0 %5744
        %5750 = vrot.lane.b32.xlu0 %v2946, 124
        %v5751 = vpop.permute.xlu0 %5750
        %5752 = vrot.lane.b32.xlu0 %v3082, 124
        %v5753 = vpop.permute.xlu0 %5752
        %5758 = vrot.lane.b32.xlu0 %v2947, 126
        %v5759 = vpop.permute.xlu0 %5758
        %5760 = vrot.lane.b32.xlu0 %v3083, 126
        %v5761 = vpop.permute.xlu0 %5760
        %5766 = vrot.lane.b32.xlu0 %v3213, 2
        %v5767 = vpop.permute.xlu0 %5766
        %5768 = vrot.lane.b32.xlu0 %v3349, 2
        %v5769 = vpop.permute.xlu0 %5768
        %5774 = vrot.lane.b32.xlu0 %v3214, 4
        %v5775 = vpop.permute.xlu0 %5774
        %5776 = vrot.lane.b32.xlu0 %v3350, 4
        %v5777 = vpop.permute.xlu0 %5776
        %5782 = vrot.lane.b32.xlu0 %v3215, 6
        %v5783 = vpop.permute.xlu0 %5782
        %5784 = vrot.lane.b32.xlu0 %v3351, 6
        %v5785 = vpop.permute.xlu0 %5784
        %5790 = vrot.lane.b32.xlu0 %v3216, 8
        %v5791 = vpop.permute.xlu0 %5790
        %5792 = vrot.lane.b32.xlu0 %v3352, 8
        %v5793 = vpop.permute.xlu0 %5792
        %5798 = vrot.lane.b32.xlu0 %v3217, 10
        %v5799 = vpop.permute.xlu0 %5798
        %5800 = vrot.lane.b32.xlu0 %v3353, 10
        %v5801 = vpop.permute.xlu0 %5800
        %5806 = vrot.lane.b32.xlu0 %v3218, 12
        %v5807 = vpop.permute.xlu0 %5806
        %5808 = vrot.lane.b32.xlu0 %v3354, 12
        %v5809 = vpop.permute.xlu0 %5808
        %5814 = vrot.lane.b32.xlu0 %v3219, 14
        %v5815 = vpop.permute.xlu0 %5814
        %5816 = vrot.lane.b32.xlu0 %v3355, 14
        %v5817 = vpop.permute.xlu0 %5816
        %5822 = vrot.lane.b32.xlu0 %v3484, 16
        %v5823 = vpop.permute.xlu0 %5822
        %5824 = vrot.lane.b32.xlu0 %v3620, 16
        %v5825 = vpop.permute.xlu0 %5824
        %5830 = vrot.lane.b32.xlu0 %v3485, 18
        %v5831 = vpop.permute.xlu0 %5830
        %5832 = vrot.lane.b32.xlu0 %v3621, 18
        %v5833 = vpop.permute.xlu0 %5832
        %5838 = vrot.lane.b32.xlu0 %v3486, 20
        %v5839 = vpop.permute.xlu0 %5838
        %5840 = vrot.lane.b32.xlu0 %v3622, 20
        %v5841 = vpop.permute.xlu0 %5840
        %5846 = vrot.lane.b32.xlu0 %v3487, 22
        %v5847 = vpop.permute.xlu0 %5846
        %5848 = vrot.lane.b32.xlu0 %v3623, 22
        %v5849 = vpop.permute.xlu0 %5848
        %5854 = vrot.lane.b32.xlu0 %v3488, 24
        %v5855 = vpop.permute.xlu0 %5854
        %5856 = vrot.lane.b32.xlu0 %v3624, 24
        %v5857 = vpop.permute.xlu0 %5856
        %5862 = vrot.lane.b32.xlu0 %v3489, 26
        %v5863 = vpop.permute.xlu0 %5862
        %5864 = vrot.lane.b32.xlu0 %v3625, 26
        %v5865 = vpop.permute.xlu0 %5864
        %5870 = vrot.lane.b32.xlu0 %v3490, 28
        %v5871 = vpop.permute.xlu0 %5870
        %5872 = vrot.lane.b32.xlu0 %v3626, 28
        %v5873 = vpop.permute.xlu0 %5872
        %5878 = vrot.lane.b32.xlu0 %v3491, 30
        %v5879 = vpop.permute.xlu0 %5878
        %5880 = vrot.lane.b32.xlu0 %v3627, 30
        %v5881 = vpop.permute.xlu0 %5880
        %5886 = vrot.lane.b32.xlu0 %v3756, 32
        %v5887 = vpop.permute.xlu0 %5886
        %5888 = vrot.lane.b32.xlu0 %v3892, 32
        %v5889 = vpop.permute.xlu0 %5888
        %5894 = vrot.lane.b32.xlu0 %v3757, 34
        %v5895 = vpop.permute.xlu0 %5894
        %5896 = vrot.lane.b32.xlu0 %v3893, 34
        %v5897 = vpop.permute.xlu0 %5896
        %5902 = vrot.lane.b32.xlu0 %v3758, 36
        %v5903 = vpop.permute.xlu0 %5902
        %5904 = vrot.lane.b32.xlu0 %v3894, 36
        %v5905 = vpop.permute.xlu0 %5904
        %5910 = vrot.lane.b32.xlu0 %v3759, 38
        %v5911 = vpop.permute.xlu0 %5910
        %5912 = vrot.lane.b32.xlu0 %v3895, 38
        %v5913 = vpop.permute.xlu0 %5912
        %5918 = vrot.lane.b32.xlu0 %v3760, 40
        %v5919 = vpop.permute.xlu0 %5918
        %5920 = vrot.lane.b32.xlu0 %v3896, 40
        %v5921 = vpop.permute.xlu0 %5920
        %5926 = vrot.lane.b32.xlu0 %v3761, 42
        %v5927 = vpop.permute.xlu0 %5926
        %5928 = vrot.lane.b32.xlu0 %v3897, 42
        %v5929 = vpop.permute.xlu0 %5928
        %5934 = vrot.lane.b32.xlu0 %v3762, 44
        %v5935 = vpop.permute.xlu0 %5934
        %5936 = vrot.lane.b32.xlu0 %v3898, 44
        %v5937 = vpop.permute.xlu0 %5936
        %5942 = vrot.lane.b32.xlu0 %v3763, 46
        %v5943 = vpop.permute.xlu0 %5942
        %5944 = vrot.lane.b32.xlu0 %v3899, 46
        %v5945 = vpop.permute.xlu0 %5944
        %5950 = vrot.lane.b32.xlu0 %v4028, 48
        %v5951 = vpop.permute.xlu0 %5950
        %5952 = vrot.lane.b32.xlu0 %v4164, 48
        %v5953 = vpop.permute.xlu0 %5952
        %5958 = vrot.lane.b32.xlu0 %v4029, 50
        %v5959 = vpop.permute.xlu0 %5958
        %5960 = vrot.lane.b32.xlu0 %v4165, 50
        %v5961 = vpop.permute.xlu0 %5960
        %5966 = vrot.lane.b32.xlu0 %v4030, 52
        %v5967 = vpop.permute.xlu0 %5966
        %5968 = vrot.lane.b32.xlu0 %v4166, 52
        %v5969 = vpop.permute.xlu0 %5968
        %5974 = vrot.lane.b32.xlu0 %v4031, 54
        %v5975 = vpop.permute.xlu0 %5974
        %5976 = vrot.lane.b32.xlu0 %v4167, 54
        %v5977 = vpop.permute.xlu0 %5976
        %5982 = vrot.lane.b32.xlu0 %v4032, 56
        %v5983 = vpop.permute.xlu0 %5982
        %5984 = vrot.lane.b32.xlu0 %v4168, 56
        %v5985 = vpop.permute.xlu0 %5984
        %5990 = vrot.lane.b32.xlu0 %v4033, 58
        %v5991 = vpop.permute.xlu0 %5990
        %5992 = vrot.lane.b32.xlu0 %v4169, 58
        %v5993 = vpop.permute.xlu0 %5992
        %5998 = vrot.lane.b32.xlu0 %v4034, 60
        %v5999 = vpop.permute.xlu0 %5998
        %6000 = vrot.lane.b32.xlu0 %v4170, 60
        %v6001 = vpop.permute.xlu0 %6000
        %6006 = vrot.lane.b32.xlu0 %v4035, 62
        %v6007 = vpop.permute.xlu0 %6006
        %6008 = vrot.lane.b32.xlu0 %v4171, 62
        %v6009 = vpop.permute.xlu0 %6008
        %6014 = vrot.lane.b32.xlu0 %v4300, 64
        %v6015 = vpop.permute.xlu0 %6014
        %6016 = vrot.lane.b32.xlu0 %v4436, 64
        %v6017 = vpop.permute.xlu0 %6016
        %6022 = vrot.lane.b32.xlu0 %v4301, 66
        %v6023 = vpop.permute.xlu0 %6022
        %6024 = vrot.lane.b32.xlu0 %v4437, 66
        %v6025 = vpop.permute.xlu0 %6024
        %6030 = vrot.lane.b32.xlu0 %v4302, 68
        %v6031 = vpop.permute.xlu0 %6030
        %6032 = vrot.lane.b32.xlu0 %v4438, 68
        %v6033 = vpop.permute.xlu0 %6032
        %6038 = vrot.lane.b32.xlu0 %v4303, 70
        %v6039 = vpop.permute.xlu0 %6038
        %6040 = vrot.lane.b32.xlu0 %v4439, 70
        %v6041 = vpop.permute.xlu0 %6040
        %6046 = vrot.lane.b32.xlu0 %v4304, 72
        %v6047 = vpop.permute.xlu0 %6046
        %6048 = vrot.lane.b32.xlu0 %v4440, 72
        %v6049 = vpop.permute.xlu0 %6048
        %6054 = vrot.lane.b32.xlu0 %v4305, 74
        %v6055 = vpop.permute.xlu0 %6054
        %6056 = vrot.lane.b32.xlu0 %v4441, 74
        %v6057 = vpop.permute.xlu0 %6056
        %6062 = vrot.lane.b32.xlu0 %v4306, 76
        %v6063 = vpop.permute.xlu0 %6062
        %6064 = vrot.lane.b32.xlu0 %v4442, 76
        %v6065 = vpop.permute.xlu0 %6064
        %6070 = vrot.lane.b32.xlu0 %v4307, 78
        %v6071 = vpop.permute.xlu0 %6070
        %6072 = vrot.lane.b32.xlu0 %v4443, 78
        %v6073 = vpop.permute.xlu0 %6072
        %6078 = vrot.lane.b32.xlu0 %v4572, 80
        %v6079 = vpop.permute.xlu0 %6078
        %6080 = vrot.lane.b32.xlu0 %v4708, 80
        %v6081 = vpop.permute.xlu0 %6080
        %6086 = vrot.lane.b32.xlu0 %v4573, 82
        %v6087 = vpop.permute.xlu0 %6086
        %6088 = vrot.lane.b32.xlu0 %v4709, 82
        %v6089 = vpop.permute.xlu0 %6088
        %6094 = vrot.lane.b32.xlu0 %v4574, 84
        %v6095 = vpop.permute.xlu0 %6094
        %6096 = vrot.lane.b32.xlu0 %v4710, 84
        %v6097 = vpop.permute.xlu0 %6096
        %6102 = vrot.lane.b32.xlu0 %v4575, 86
        %v6103 = vpop.permute.xlu0 %6102
        %6104 = vrot.lane.b32.xlu0 %v4711, 86
        %v6105 = vpop.permute.xlu0 %6104
        %6110 = vrot.lane.b32.xlu0 %v4576, 88
        %v6111 = vpop.permute.xlu0 %6110
        %6112 = vrot.lane.b32.xlu0 %v4712, 88
        %v6113 = vpop.permute.xlu0 %6112
        %6118 = vrot.lane.b32.xlu0 %v4577, 90
        %v6119 = vpop.permute.xlu0 %6118
        %6120 = vrot.lane.b32.xlu0 %v4713, 90
        %v6121 = vpop.permute.xlu0 %6120
        %6126 = vrot.lane.b32.xlu0 %v4578, 92
        %v6127 = vpop.permute.xlu0 %6126
        %6128 = vrot.lane.b32.xlu0 %v4714, 92
        %v6129 = vpop.permute.xlu0 %6128
        %6134 = vrot.lane.b32.xlu0 %v4579, 94
        %v6135 = vpop.permute.xlu0 %6134
        %6136 = vrot.lane.b32.xlu0 %v4715, 94
        %v6137 = vpop.permute.xlu0 %6136
        %6142 = vrot.lane.b32.xlu0 %v4844, 96
        %v6143 = vpop.permute.xlu0 %6142
        %6144 = vrot.lane.b32.xlu0 %v4980, 96
        %v6145 = vpop.permute.xlu0 %6144
        %6150 = vrot.lane.b32.xlu0 %v4845, 98
        %v6151 = vpop.permute.xlu0 %6150
        %6152 = vrot.lane.b32.xlu0 %v4981, 98
        %v6153 = vpop.permute.xlu0 %6152
        %6158 = vrot.lane.b32.xlu0 %v4846, 100
        %v6159 = vpop.permute.xlu0 %6158
        %6160 = vrot.lane.b32.xlu0 %v4982, 100
        %v6161 = vpop.permute.xlu0 %6160
        %6166 = vrot.lane.b32.xlu0 %v4847, 102
        %v6167 = vpop.permute.xlu0 %6166
        %6168 = vrot.lane.b32.xlu0 %v4983, 102
        %v6169 = vpop.permute.xlu0 %6168
        %6174 = vrot.lane.b32.xlu0 %v4848, 104
        %v6175 = vpop.permute.xlu0 %6174
        %6176 = vrot.lane.b32.xlu0 %v4984, 104
        %v6177 = vpop.permute.xlu0 %6176
        %6182 = vrot.lane.b32.xlu0 %v4849, 106
        %v6183 = vpop.permute.xlu0 %6182
        %6184 = vrot.lane.b32.xlu0 %v4985, 106
        %v6185 = vpop.permute.xlu0 %6184
        %6190 = vrot.lane.b32.xlu0 %v4850, 108
        %v6191 = vpop.permute.xlu0 %6190
        %6192 = vrot.lane.b32.xlu0 %v4986, 108
        %v6193 = vpop.permute.xlu0 %6192
        %6198 = vrot.lane.b32.xlu0 %v4851, 110
        %v6199 = vpop.permute.xlu0 %6198
        %6200 = vrot.lane.b32.xlu0 %v4987, 110
        %v6201 = vpop.permute.xlu0 %6200
        %6206 = vrot.lane.b32.xlu0 %v5116, 112
        %v6207 = vpop.permute.xlu0 %6206
        %6208 = vrot.lane.b32.xlu0 %v5252, 112
        %v6209 = vpop.permute.xlu0 %6208
        %6214 = vrot.lane.b32.xlu0 %v5117, 114
        %v6215 = vpop.permute.xlu0 %6214
        %6216 = vrot.lane.b32.xlu0 %v5253, 114
        %v6217 = vpop.permute.xlu0 %6216
        %6222 = vrot.lane.b32.xlu0 %v5118, 116
        %v6223 = vpop.permute.xlu0 %6222
        %6224 = vrot.lane.b32.xlu0 %v5254, 116
        %v6225 = vpop.permute.xlu0 %6224
        %6230 = vrot.lane.b32.xlu0 %v5119, 118
        %v6231 = vpop.permute.xlu0 %6230
        %6232 = vrot.lane.b32.xlu0 %v5255, 118
        %v6233 = vpop.permute.xlu0 %6232
        %6238 = vrot.lane.b32.xlu0 %v5120, 120
        %v6239 = vpop.permute.xlu0 %6238
        %6240 = vrot.lane.b32.xlu0 %v5256, 120
        %v6241 = vpop.permute.xlu0 %6240
        %6246 = vrot.lane.b32.xlu0 %v5121, 122
        %v6247 = vpop.permute.xlu0 %6246
        %6248 = vrot.lane.b32.xlu0 %v5257, 122
        %v6249 = vpop.permute.xlu0 %6248
        %6254 = vrot.lane.b32.xlu0 %v5122, 124
        %v6255 = vpop.permute.xlu0 %6254
        %6256 = vrot.lane.b32.xlu0 %v5258, 124
        %v6257 = vpop.permute.xlu0 %6256
        %6262 = vrot.lane.b32.xlu0 %v5123, 126
        %v6263 = vpop.permute.xlu0 %6262
        %6264 = vrot.lane.b32.xlu0 %v5259, 126
        %v6265 = vpop.permute.xlu0 %6264
        %vm6268 = vcmask 15360
        %v6269 = vsel %vm6268, %v1036, %v5263
        %v6270 = vsel %vm6268, %v1172, %v5265
        %vm6271 = vcmask 31744
        %v6272 = vsel %vm6271, %v6269, %v5271
        %v6273 = vsel %vm6271, %v6270, %v5273
        %vm6274 = vcmask 48128
        %v6275 = vsel %vm6274, %v6272, %v5279
        %v6276 = vsel %vm6274, %v6273, %v5281
        %vm6277 = vcmask 64512
        %v6278 = vsel %vm6277, %v6275, %v5287
        %v6279 = vsel %vm6277, %v6276, %v5289
        %vm6280 = vcmask 80896
        %v6281 = vsel %vm6280, %v6278, %v5295
        %v6282 = vsel %vm6280, %v6279, %v5297
        %vm6283 = vcmask 97280
        %v6284 = vsel %vm6283, %v6281, %v5303
        %v6285 = vsel %vm6283, %v6282, %v5305
        %vm6286 = vcmask 113664
        %v6287 = vsel %vm6286, %v6284, %v5311
        %v6288 = vsel %vm6286, %v6285, %v5313
        %vm6289 = vcmask 130048
        %v6290 = vsel %vm6289, %v6287, %v5319
        %v6291 = vsel %vm6289, %v6288, %v5321
        %vm6292 = vcmask 146432
        %v6293 = vsel %vm6292, %v6290, %v5327
        %v6294 = vsel %vm6292, %v6291, %v5329
        %vm6295 = vcmask 162816
        %v6296 = vsel %vm6295, %v6293, %v5335
        %v6297 = vsel %vm6295, %v6294, %v5337
        %vm6298 = vcmask 179200
        %v6299 = vsel %vm6298, %v6296, %v5343
        %v6300 = vsel %vm6298, %v6297, %v5345
        %vm6301 = vcmask 195584
        %v6302 = vsel %vm6301, %v6299, %v5351
        %v6303 = vsel %vm6301, %v6300, %v5353
        %vm6304 = vcmask 211968
        %v6305 = vsel %vm6304, %v6302, %v5359
        %v6306 = vsel %vm6304, %v6303, %v5361
        %vm6307 = vcmask 228352
        %v6308 = vsel %vm6307, %v6305, %v5367
        %v6309 = vsel %vm6307, %v6306, %v5369
        %vm6310 = vcmask 244736
        %v6311 = vsel %vm6310, %v6308, %v5375
        %v6312 = vsel %vm6310, %v6309, %v5377
        %vm6313 = vcmask 261120
        %v6314 = vsel %vm6313, %v6311, %v5383
        %v6315 = vsel %vm6313, %v6312, %v5385
        %vm6316 = vcmask 277504
        %v6317 = vsel %vm6316, %v6314, %v5391
        %v6318 = vsel %vm6316, %v6315, %v5393
        %vm6319 = vcmask 293888
        %v6320 = vsel %vm6319, %v6317, %v5399
        %v6321 = vsel %vm6319, %v6318, %v5401
        %vm6322 = vcmask 310272
        %v6323 = vsel %vm6322, %v6320, %v5407
        %v6324 = vsel %vm6322, %v6321, %v5409
        %vm6325 = vcmask 326656
        %v6326 = vsel %vm6325, %v6323, %v5415
        %v6327 = vsel %vm6325, %v6324, %v5417
        %vm6328 = vcmask 343040
        %v6329 = vsel %vm6328, %v6326, %v5423
        %v6330 = vsel %vm6328, %v6327, %v5425
        %vm6331 = vcmask 359424
        %v6332 = vsel %vm6331, %v6329, %v5431
        %v6333 = vsel %vm6331, %v6330, %v5433
        %vm6334 = vcmask 375808
        %v6335 = vsel %vm6334, %v6332, %v5439
        %v6336 = vsel %vm6334, %v6333, %v5441
        %vm6337 = vcmask 392192
        %v6338 = vsel %vm6337, %v6335, %v5447
        %v6339 = vsel %vm6337, %v6336, %v5449
        %vm6340 = vcmask 408576
        %v6341 = vsel %vm6340, %v6338, %v5455
        %v6342 = vsel %vm6340, %v6339, %v5457
        %vm6343 = vcmask 424960
        %v6344 = vsel %vm6343, %v6341, %v5463
        %v6345 = vsel %vm6343, %v6342, %v5465
        %vm6346 = vcmask 441344
        %v6347 = vsel %vm6346, %v6344, %v5471
        %v6348 = vsel %vm6346, %v6345, %v5473
        %vm6349 = vcmask 457728
        %v6350 = vsel %vm6349, %v6347, %v5479
        %v6351 = vsel %vm6349, %v6348, %v5481
        %vm6352 = vcmask 474112
        %v6353 = vsel %vm6352, %v6350, %v5487
        %v6354 = vsel %vm6352, %v6351, %v5489
        %vm6355 = vcmask 490496
        %v6356 = vsel %vm6355, %v6353, %v5495
        %v6357 = vsel %vm6355, %v6354, %v5497
        %vm6358 = vcmask 506880
        %v6359 = vsel %vm6358, %v6356, %v5503
        %v6360 = vsel %vm6358, %v6357, %v5505
        %vm6361 = vcmask 523264
        %v6362 = vsel %vm6361, %v6359, %v5511
        %v6363 = vsel %vm6361, %v6360, %v5513
        %vm6364 = vcmask 539648
        %v6365 = vsel %vm6364, %v6362, %v5519
        %v6366 = vsel %vm6364, %v6363, %v5521
        %vm6367 = vcmask 556032
        %v6368 = vsel %vm6367, %v6365, %v5527
        %v6369 = vsel %vm6367, %v6366, %v5529
        %vm6370 = vcmask 572416
        %v6371 = vsel %vm6370, %v6368, %v5535
        %v6372 = vsel %vm6370, %v6369, %v5537
        %vm6373 = vcmask 588800
        %v6374 = vsel %vm6373, %v6371, %v5543
        %v6375 = vsel %vm6373, %v6372, %v5545
        %vm6376 = vcmask 605184
        %v6377 = vsel %vm6376, %v6374, %v5551
        %v6378 = vsel %vm6376, %v6375, %v5553
        %vm6379 = vcmask 621568
        %v6380 = vsel %vm6379, %v6377, %v5559
        %v6381 = vsel %vm6379, %v6378, %v5561
        %vm6382 = vcmask 637952
        %v6383 = vsel %vm6382, %v6380, %v5567
        %v6384 = vsel %vm6382, %v6381, %v5569
        %vm6385 = vcmask 654336
        %v6386 = vsel %vm6385, %v6383, %v5575
        %v6387 = vsel %vm6385, %v6384, %v5577
        %vm6388 = vcmask 670720
        %v6389 = vsel %vm6388, %v6386, %v5583
        %v6390 = vsel %vm6388, %v6387, %v5585
        %vm6391 = vcmask 687104
        %v6392 = vsel %vm6391, %v6389, %v5591
        %v6393 = vsel %vm6391, %v6390, %v5593
        %vm6394 = vcmask 703488
        %v6395 = vsel %vm6394, %v6392, %v5599
        %v6396 = vsel %vm6394, %v6393, %v5601
        %vm6397 = vcmask 719872
        %v6398 = vsel %vm6397, %v6395, %v5607
        %v6399 = vsel %vm6397, %v6396, %v5609
        %vm6400 = vcmask 736256
        %v6401 = vsel %vm6400, %v6398, %v5615
        %v6402 = vsel %vm6400, %v6399, %v5617
        %vm6403 = vcmask 752640
        %v6404 = vsel %vm6403, %v6401, %v5623
        %v6405 = vsel %vm6403, %v6402, %v5625
        %vm6406 = vcmask 769024
        %v6407 = vsel %vm6406, %v6404, %v5631
        %v6408 = vsel %vm6406, %v6405, %v5633
        %vm6409 = vcmask 785408
        %v6410 = vsel %vm6409, %v6407, %v5639
        %v6411 = vsel %vm6409, %v6408, %v5641
        %vm6412 = vcmask 801792
        %v6413 = vsel %vm6412, %v6410, %v5647
        %v6414 = vsel %vm6412, %v6411, %v5649
        %vm6415 = vcmask 818176
        %v6416 = vsel %vm6415, %v6413, %v5655
        %v6417 = vsel %vm6415, %v6414, %v5657
        %vm6418 = vcmask 834560
        %v6419 = vsel %vm6418, %v6416, %v5663
        %v6420 = vsel %vm6418, %v6417, %v5665
        %vm6421 = vcmask 850944
        %v6422 = vsel %vm6421, %v6419, %v5671
        %v6423 = vsel %vm6421, %v6420, %v5673
        %vm6424 = vcmask 867328
        %v6425 = vsel %vm6424, %v6422, %v5679
        %v6426 = vsel %vm6424, %v6423, %v5681
        %vm6427 = vcmask 883712
        %v6428 = vsel %vm6427, %v6425, %v5687
        %v6429 = vsel %vm6427, %v6426, %v5689
        %vm6430 = vcmask 900096
        %v6431 = vsel %vm6430, %v6428, %v5695
        %v6432 = vsel %vm6430, %v6429, %v5697
        %vm6433 = vcmask 916480
        %v6434 = vsel %vm6433, %v6431, %v5703
        %v6435 = vsel %vm6433, %v6432, %v5705
        %vm6436 = vcmask 932864
        %v6437 = vsel %vm6436, %v6434, %v5711
        %v6438 = vsel %vm6436, %v6435, %v5713
        %vm6439 = vcmask 949248
        %v6440 = vsel %vm6439, %v6437, %v5719
        %v6441 = vsel %vm6439, %v6438, %v5721
        %vm6442 = vcmask 965632
        %v6443 = vsel %vm6442, %v6440, %v5727
        %v6444 = vsel %vm6442, %v6441, %v5729
        %vm6445 = vcmask 982016
        %v6446 = vsel %vm6445, %v6443, %v5735
        %v6447 = vsel %vm6445, %v6444, %v5737
        %vm6448 = vcmask 998400
        %v6449 = vsel %vm6448, %v6446, %v5743
        %v6450 = vsel %vm6448, %v6447, %v5745
        %vm6451 = vcmask 1014784
        %v6452 = vsel %vm6451, %v6449, %v5751
        %v6453 = vsel %vm6451, %v6450, %v5753
        %vm6454 = vcmask 1031168
        %v6455 = vsel %vm6454, %v6452, %v5759
        %v6456 = vsel %vm6454, %v6453, %v5761
        %v6457 = vsel %vm6268, %v3212, %v5767
        %v6458 = vsel %vm6268, %v3348, %v5769
        %v6459 = vsel %vm6271, %v6457, %v5775
        %v6460 = vsel %vm6271, %v6458, %v5777
        %v6461 = vsel %vm6274, %v6459, %v5783
        %v6462 = vsel %vm6274, %v6460, %v5785
        %v6463 = vsel %vm6277, %v6461, %v5791
        %v6464 = vsel %vm6277, %v6462, %v5793
        %v6465 = vsel %vm6280, %v6463, %v5799
        %v6466 = vsel %vm6280, %v6464, %v5801
        %v6467 = vsel %vm6283, %v6465, %v5807
        %v6468 = vsel %vm6283, %v6466, %v5809
        %v6469 = vsel %vm6286, %v6467, %v5815
        %v6470 = vsel %vm6286, %v6468, %v5817
        %v6471 = vsel %vm6289, %v6469, %v5823
        %v6472 = vsel %vm6289, %v6470, %v5825
        %v6473 = vsel %vm6292, %v6471, %v5831
        %v6474 = vsel %vm6292, %v6472, %v5833
        %v6475 = vsel %vm6295, %v6473, %v5839
        %v6476 = vsel %vm6295, %v6474, %v5841
        %v6477 = vsel %vm6298, %v6475, %v5847
        %v6478 = vsel %vm6298, %v6476, %v5849
        %v6479 = vsel %vm6301, %v6477, %v5855
        %v6480 = vsel %vm6301, %v6478, %v5857
        %v6481 = vsel %vm6304, %v6479, %v5863
        %v6482 = vsel %vm6304, %v6480, %v5865
        %v6483 = vsel %vm6307, %v6481, %v5871
        %v6484 = vsel %vm6307, %v6482, %v5873
        %v6485 = vsel %vm6310, %v6483, %v5879
        %v6486 = vsel %vm6310, %v6484, %v5881
        %v6487 = vsel %vm6313, %v6485, %v5887
        %v6488 = vsel %vm6313, %v6486, %v5889
        %v6489 = vsel %vm6316, %v6487, %v5895
        %v6490 = vsel %vm6316, %v6488, %v5897
        %v6491 = vsel %vm6319, %v6489, %v5903
        %v6492 = vsel %vm6319, %v6490, %v5905
        %v6493 = vsel %vm6322, %v6491, %v5911
        %v6494 = vsel %vm6322, %v6492, %v5913
        %v6495 = vsel %vm6325, %v6493, %v5919
        %v6496 = vsel %vm6325, %v6494, %v5921
        %v6497 = vsel %vm6328, %v6495, %v5927
        %v6498 = vsel %vm6328, %v6496, %v5929
        %v6499 = vsel %vm6331, %v6497, %v5935
        %v6500 = vsel %vm6331, %v6498, %v5937
        %v6501 = vsel %vm6334, %v6499, %v5943
        %v6502 = vsel %vm6334, %v6500, %v5945
        %v6503 = vsel %vm6337, %v6501, %v5951
        %v6504 = vsel %vm6337, %v6502, %v5953
        %v6505 = vsel %vm6340, %v6503, %v5959
        %v6506 = vsel %vm6340, %v6504, %v5961
        %v6507 = vsel %vm6343, %v6505, %v5967
        %v6508 = vsel %vm6343, %v6506, %v5969
        %v6509 = vsel %vm6346, %v6507, %v5975
        %v6510 = vsel %vm6346, %v6508, %v5977
        %v6511 = vsel %vm6349, %v6509, %v5983
        %v6512 = vsel %vm6349, %v6510, %v5985
        %v6513 = vsel %vm6352, %v6511, %v5991
        %v6514 = vsel %vm6352, %v6512, %v5993
        %v6515 = vsel %vm6355, %v6513, %v5999
        %v6516 = vsel %vm6355, %v6514, %v6001
        %v6517 = vsel %vm6358, %v6515, %v6007
        %v6518 = vsel %vm6358, %v6516, %v6009
        %v6519 = vsel %vm6361, %v6517, %v6015
        %v6520 = vsel %vm6361, %v6518, %v6017
        %v6521 = vsel %vm6364, %v6519, %v6023
        %v6522 = vsel %vm6364, %v6520, %v6025
        %v6523 = vsel %vm6367, %v6521, %v6031
        %v6524 = vsel %vm6367, %v6522, %v6033
        %v6525 = vsel %vm6370, %v6523, %v6039
        %v6526 = vsel %vm6370, %v6524, %v6041
        %v6527 = vsel %vm6373, %v6525, %v6047
        %v6528 = vsel %vm6373, %v6526, %v6049
        %v6529 = vsel %vm6376, %v6527, %v6055
        %v6530 = vsel %vm6376, %v6528, %v6057
        %v6531 = vsel %vm6379, %v6529, %v6063
        %v6532 = vsel %vm6379, %v6530, %v6065
        %v6533 = vsel %vm6382, %v6531, %v6071
        %v6534 = vsel %vm6382, %v6532, %v6073
        %v6535 = vsel %vm6385, %v6533, %v6079
        %v6536 = vsel %vm6385, %v6534, %v6081
        %v6537 = vsel %vm6388, %v6535, %v6087
        %v6538 = vsel %vm6388, %v6536, %v6089
        %v6539 = vsel %vm6391, %v6537, %v6095
        %v6540 = vsel %vm6391, %v6538, %v6097
        %v6541 = vsel %vm6394, %v6539, %v6103
        %v6542 = vsel %vm6394, %v6540, %v6105
        %v6543 = vsel %vm6397, %v6541, %v6111
        %v6544 = vsel %vm6397, %v6542, %v6113
        %v6545 = vsel %vm6400, %v6543, %v6119
        %v6546 = vsel %vm6400, %v6544, %v6121
        %v6547 = vsel %vm6403, %v6545, %v6127
        %v6548 = vsel %vm6403, %v6546, %v6129
        %v6549 = vsel %vm6406, %v6547, %v6135
        %v6550 = vsel %vm6406, %v6548, %v6137
        %v6551 = vsel %vm6409, %v6549, %v6143
        %v6552 = vsel %vm6409, %v6550, %v6145
        %v6553 = vsel %vm6412, %v6551, %v6151
        %v6554 = vsel %vm6412, %v6552, %v6153
        %v6555 = vsel %vm6415, %v6553, %v6159
        %v6556 = vsel %vm6415, %v6554, %v6161
        %v6557 = vsel %vm6418, %v6555, %v6167
        %v6558 = vsel %vm6418, %v6556, %v6169
        %v6559 = vsel %vm6421, %v6557, %v6175
        %v6560 = vsel %vm6421, %v6558, %v6177
        %v6561 = vsel %vm6424, %v6559, %v6183
        %v6562 = vsel %vm6424, %v6560, %v6185
        %v6563 = vsel %vm6427, %v6561, %v6191
        %v6564 = vsel %vm6427, %v6562, %v6193
        %v6565 = vsel %vm6430, %v6563, %v6199
        %v6566 = vsel %vm6430, %v6564, %v6201
        %v6567 = vsel %vm6433, %v6565, %v6207
        %v6568 = vsel %vm6433, %v6566, %v6209
        %v6569 = vsel %vm6436, %v6567, %v6215
        %v6570 = vsel %vm6436, %v6568, %v6217
        %v6571 = vsel %vm6439, %v6569, %v6223
        %v6572 = vsel %vm6439, %v6570, %v6225
        %v6573 = vsel %vm6442, %v6571, %v6231
        %v6574 = vsel %vm6442, %v6572, %v6233
        %v6575 = vsel %vm6445, %v6573, %v6239
        %v6576 = vsel %vm6445, %v6574, %v6241
        %v6577 = vsel %vm6448, %v6575, %v6247
        %v6578 = vsel %vm6448, %v6576, %v6249
        %v6579 = vsel %vm6451, %v6577, %v6255
        %v6580 = vsel %vm6451, %v6578, %v6257
        %v6581 = vsel %vm6454, %v6579, %v6263
        %v6582 = vsel %vm6454, %v6580, %v6265
        %v6583 = vadd.f32 %v6455, %v6581
        %6584 = vadd.xlane.f32.xlu0 %v6583
        %v6585 = vpop.xlane.xlu0 %6584
        %v6586 = vadd.f32 %v6456, %v6582
        %6587 = vadd.xlane.f32.xlu0 %v6586
        %v6588 = vpop.xlane.xlu0 %6587
        %v6589 = vrcp.pop 256.0
        %v6590 = vmul.f32 %v6585, %v6589
        %v6591 = vmul.f32 %v6588, %v6589
        %v6592 = vsub.f32 %v6455, %v6590
        %v6593 = vsub.f32 %v6581, %v6590
        %v6594 = vsub.f32 %v6456, %v6591
        %v6595 = vsub.f32 %v6582, %v6591
        %v6596 = vmul.f32 %v6592, %v6592
        %v6597 = vmul.f32 %v6593, %v6593
        %v6598 = vmul.f32 %v6594, %v6594
        %v6599 = vmul.f32 %v6595, %v6595
        %v6600 = vadd.f32 %v6596, %v6597
        %6601 = vadd.xlane.f32.xlu0 %v6600
        %v6602 = vpop.xlane.xlu0 %6601
        %v6603 = vadd.f32 %v6598, %v6599
        %6604 = vadd.xlane.f32.xlu0 %v6603
        %v6605 = vpop.xlane.xlu0 %6604
        %v6606 = vmul.f32 %v6602, 0.003921569
        %v6607 = vmul.f32 %v6605, 0.003921569
        %v6608 = vrsqrt.pop %v6606
        %v6609 = vmul.f32 %v6606, %v6608
        %vm6610 = vcmp.eq.f32.partialorder %v6606, inf
        %v6611 = vsel %vm6610, %v6606, %v6609
        %vm6612 = vcmp.eq.f32.partialorder %v6606, 0.0
        %v6613 = vand.u32 %v6606, 2147483648
        %v6614 = vsel %vm6612, %v6613, %v6611
        %v6615 = vrsqrt.pop %v6607
        %v6616 = vmul.f32 %v6607, %v6615
        %vm6617 = vcmp.eq.f32.partialorder %v6607, inf
        %v6618 = vsel %vm6617, %v6607, %v6616
        %vm6619 = vcmp.eq.f32.partialorder %v6607, 0.0
        %v6620 = vand.u32 %v6607, 2147483648
        %v6621 = vsel %vm6619, %v6620, %v6618
        %v6622 = vadd.f32 %v6614, 1e-10
        %v6623 = vadd.f32 %v6621, 1e-10
        %v6624 = vrcp.pop %v6622
        %v6625 = vmul.f32 1.0, %v6624
        %v6626 = vrcp.pop %v6623
        %v6627 = vmul.f32 1.0, %v6626
        %v6628 = vmul.f32 %v6592, %v6625
        %v6629 = vmul.f32 %v6593, %v6625
        %v6630 = vmul.f32 %v6594, %v6627
        %v6631 = vmul.f32 %v6595, %v6627
        %v6632 = vld [vmem:[#allocation5] sm:$0xff]
        %v6633 = vld [vmem:[#allocation5 + $0x8] sm:$0xff]
        %v6634 = vld [vmem:[#allocation5 + $0x10] sm:$0xff]
        %v6635 = vld [vmem:[#allocation5 + $0x18] sm:$0xff]
        %v6636 = vmul.f32 %v6628, %v6632
        %v6637 = vmul.f32 %v6629, %v6633
        %v6638 = vmul.f32 %v6630, %v6634
        %v6639 = vmul.f32 %v6631, %v6635
        %v6640 = vld [vmem:[#allocation7] sm:$0xff]
        %v6641 = vld [vmem:[#allocation7 + $0x8] sm:$0xff]
        %v6642 = vld [vmem:[#allocation7 + $0x10] sm:$0xff]
        %v6643 = vld [vmem:[#allocation7 + $0x18] sm:$0xff]
        %v6644 = vadd.f32 %v6636, %v6640
        %v6645 = vadd.f32 %v6637, %v6641
        %v6646 = vadd.f32 %v6638, %v6642
        %v6647 = vadd.f32 %v6639, %v6643
        %v6648 = vld [vmem:[#allocation8] sm:$0xff]
        %v6649 = vld [vmem:[#allocation8 + $0x8] sm:$0xff]
        %v6650 = vld [vmem:[#allocation8 + $0x10] sm:$0xff]
        %v6651 = vld [vmem:[#allocation8 + $0x18] sm:$0xff]
        %v6652 = vmul.f32 %v6644, %v6648
        %v6653 = vmul.f32 %v6645, %v6649
        %v6654 = vmul.f32 %v6646, %v6650
        %v6655 = vmul.f32 %v6647, %v6651
        %vm6656 = vcmp.ge.f32.partialorder %v6652, 0.0
        %vm6657 = vcmp.ge.f32.partialorder %v6653, 0.0
        %vm6658 = vcmp.ge.f32.partialorder %v6654, 0.0
        %vm6659 = vcmp.ge.f32.partialorder %v6655, 0.0
        %v6660 = vsel %vm6656, %v6644, 0.0
        %v6661 = vsel %vm6657, %v6645, 0.0
        %v6662 = vsel %vm6658, %v6646, 0.0
        %v6663 = vsel %vm6659, %v6647, 0.0
        %v6664 = vsub.f32 %v6644, %v6660
        %v6665 = vsub.f32 %v6645, %v6661
        %v6666 = vsub.f32 %v6646, %v6662
        %v6667 = vsub.f32 %v6647, %v6663
        %v6668 = vadd.f32 %v6660, %v6666
        %v6669 = vadd.f32 %v6661, %v6667
        %6670 = vst [vmem:[%s259] sm:$0xff] %v6668
        %6671 = vst [vmem:[%s259 + $0x8] sm:$0xff] %v6669
        %v6672 = vadd.f32 %v6662, %v6664
        %v6673 = vadd.f32 %v6663, %v6665
        %6674 = vst [vmem:[%s259 + $0x10] sm:$0xff] %v6672
        %6675 = vst [vmem:[%s259 + $0x18] sm:$0xff] %v6673
        %s6676 = sand.u32 %s120, 1
        %s6677 = scalar_lea.sflag [#allocation4], %s6676
        %s6678 = sand.u32 %s120, 1
        %s6679 = smul.addr %s6678, 32
        %s6680 = scalar_lea.vmem [#allocation10], %s6679
        // Predicated region
        $region53: #{tpu_custom_call.1} parent=35 // pred_check
          %p6681 = pneg %p130
        $region54: #{tpu_custom_call.1} parent=35 // pred_check_branch
          %6683 = sbr.rel (%p6681) target = $region56
        $region55: #{tpu_custom_call.1} parent=35 // pred_region
          %s6685 = ssub.s32 512, 512
          %6686 = vsyncadd %s6677, %s6685
          %s6687 = smul.addr %s23, 4
          %s6688 = smul.addr %s6687, 128
          %s6689 = scalar_lea.hbm %s4, %s6688
          %s6690 = sshll.u32 %s6680, 4
          %s6691 = int_to_ptr.vmem [resolvable:$true] %s6690
          %6696 = dma.vmem_to_hbm [thread:$0]  %s6691, 512, %s6689, %s6677, 256, 256, 16
        $region56: #{tpu_custom_call.1} parent=35 // pred_fallthru
          _
      $region36: #{tpu_custom_call.1} parent=5 // pred_fallthru
        _
      %p6697 = scmp.le.s32.totalorder 2, %s18
      // Predicated region
      $region57: #{tpu_custom_call.1} parent=5 // pred_check
        %p6698 = pneg %p6697
      $region58: #{tpu_custom_call.1} parent=5 // pred_check_branch
        %6700 = sbr.rel (%p6698) target = $region60
      $region59: #{tpu_custom_call.1} parent=5 // pred_region
        %s6701 = ssub.s32 %s18, 2
        // Predicated region
        $region61: #{tpu_custom_call.1} parent=59 // pred_check
          %p6702 = pneg %p136
        $region62: #{tpu_custom_call.1} parent=59 // pred_check_branch
          %6704 = sbr.rel (%p6702) target = $region64
        $region63: #{tpu_custom_call.1} parent=59 // pred_region
          %s6705 = sand.u32 %s121, 1
          %s6706 = scalar_lea.sflag [#allocation4], %s6705
          %s6707 = sand.u32 %s121, 1
          %s6708 = smul.addr %s6707, 32
          %s6709 = scalar_lea.vmem [#allocation10], %s6708
          %6710 = dma.done %s6706, 512
        $region64: #{tpu_custom_call.1} parent=59 // pred_fallthru
          _
      $region60: #{tpu_custom_call.1} parent=5 // pred_fallthru
        _
    $region6: #{tpu_custom_call.1} parent=1 // loop_footer
      %s22 = sadd.s32 1, %s18
    $region7: #{tpu_custom_call.1} parent=1 // loop_footer_branch
      %17 = sbr.rel target = $region3
    $region8: #{tpu_custom_call.1} parent=1 // loop_exit
      _
    %6711 = vsyncpa [#allocation3], 1
    %s6712 = scalar_lea.sflag [#allocation3], 1
    %6713 = vsyncpa %s6712, 1
    %6714 = vsyncpa [#allocation6], 1
    %6715 = vsyncpa [#allocation9], 1
    %6716 = vsyncpa [#allocation4], 1
    %s6717 = scalar_lea.sflag [#allocation4], 1
    %6718 = vsyncpa %s6717, 1

</llo_original>
